<compile_context>
chip_gen: v7x
topology: tpu7x:2x2x1
jax: 0.10.0
libtpu: 0.0.40
codegen_flags: <defaults>
</compile_context>

<pallas_src>
import functools

import jax
import jax.numpy as jnp
from jax.experimental import pallas as pl
from jax.experimental.pallas import tpu as pltpu

NEG_SLOPE = 0.01      # F.leaky_relu default
GN_EPS = 1e-5         # PyG GraphNorm default eps


def _leaky_relu(x):
    return jnp.where(x > 0, x, NEG_SLOPE * x)


def _elu(x):
    # alpha = 1.0; clamp the exp argument so the unused branch never overflows
    return jnp.where(x > 0, x, jnp.exp(jnp.minimum(x, 0.0)) - 1.0)


def body_gnn_kernel(x_ref, w1_ref, b1_ref, w2_ref, b2_ref, abc_ref,
                    wg_ref, bg_ref, wl_ref, bl_ref,
                    gnw_ref, gnb_ref, gnm_ref,
                    pool_ref):
    K = w1_ref.shape[0]
    BN = w1_ref.shape[1]              # B * N fused rows per graph-batch
    N = abc_ref.shape[0]              # nodes per graph
    B = BN // N
    R = x_ref.shape[1]                # fused rows per grid step = Gblk * B * N
    Lp = x_ref.shape[2]               # lane-padded signal length (mult. of 128)
    Gblk = R // BN
    C = wg_ref.shape[1]

    x = x_ref[0]                      # (R, Lp) f32

    # ---- grouped Conv1d #1 (1->16 per node) + leaky_relu,
    #      grouped Conv1d #2 (16->1 per node) + leaky_relu.
    # Taps use XLU lane rotations; lanes >= L-2K+2 hold wrap garbage that the
    # zero-padded matmul weight rows ignore.  Per-BN-row block to bound the
    # live (BN, 16, Lp) intermediate.
    out2_parts = []
    for gi in range(Gblk):
        xb = x[gi * BN:(gi + 1) * BN]                       # (BN, Lp)
        acc1 = w1_ref[0] * xb[:, None, :]                   # (BN, 16, Lp)
        for k in range(1, K):
            xs = pltpu.roll(xb, shift=Lp - k, axis=1)       # xs[:, t] = xb[:, t+k]
            acc1 = acc1 + w1_ref[k] * xs[:, None, :]
        out1 = _leaky_relu(acc1 + b1_ref[...])              # (BN, 16, Lp)

        acc2 = jnp.sum(w2_ref[0] * out1, axis=1)            # (BN, Lp)
        for k in range(1, K):
            o1s = pltpu.roll(out1, shift=Lp - k, axis=2)
            acc2 = acc2 + jnp.sum(w2_ref[k] * o1s, axis=1)
        out2_parts.append(_leaky_relu(acc2 + b2_ref[...]))  # (BN, Lp)
    out2 = out2_parts[0] if Gblk == 1 else jnp.concatenate(out2_parts, axis=0)

    # ---- the only two MXU matmuls: GCN feature transform and lin1 residual,
    #      both on the fused (R, Lp) rows, bf16 operands / f32 accumulation.
    hw_g = jnp.dot(out2.astype(jnp.bfloat16), wg_ref[...],
                   preferred_element_type=jnp.float32)      # (R, C)
    hw_l = jnp.dot(x.astype(jnp.bfloat16), wl_ref[...],
                   preferred_element_type=jnp.float32)      # (R, C)

    # ---- per-graph tail on tiny (Gblk, B, N, C) tensors (VPU only).
    hwg4 = hw_g.reshape(Gblk, B, N, C)
    hwl4 = hw_l.reshape(Gblk, B, N, C)

    # GCN 4x4 aggregation: t0[g,b,m,c] = sum_n A[m,n] * hwg4[g,b,n,c]
    t0 = abc_ref[0] * hwg4[:, :, 0:1, :]
    for n in range(1, N):
        t0 = t0 + abc_ref[n] * hwg4[:, :, n:n + 1, :]
    t0 = t0 + bg_ref[...]                                   # (Gblk, B, N, C)

    # GraphNorm: PyG with batch=None on a (B, N, C) tensor reduces over dim 0
    # (the graph-batch dim B) only -> per-(n, c) statistics, per graph-batch g.
    mean = jnp.mean(t0, axis=1, keepdims=True)
    d = t0 - mean * gnm_ref[...]
    var = jnp.mean(d * d, axis=1, keepdims=True)
    tn = gnw_ref[...] * d * jax.lax.rsqrt(var + GN_EPS) + gnb_ref[...]

    # residual lin1(X) + ELU, then global mean pool over nodes
    t = _elu(tn + hwl4 + bl_ref[...])                       # (Gblk, B, N, C)
    pool_ref[0] = jnp.mean(t, axis=2).reshape(Gblk * B, C)  # (Gblk*B, C)


def body_gnn_forward(x, params, a_norm, *, graphs_per_step=2):
    """x: (G, B, N, L) -- G independent Body_GNN forwards, each on a (B, N, L)
    Conv1d-style input.  Returns (pooled (G, B, C), class_out (G, B, 16))."""
    G, B, N, L = x.shape
    K = params["w1"].shape[0]
    C = params["wg"].shape[1]
    L2 = L - 2 * K + 2
    Lp = ((L + 127) // 128) * 128

    gblk = max(1, min(graphs_per_step, G))
    while G % gblk:
        gblk -= 1
    gsteps = G // gblk
    BN = B * N
    R = gblk * BN
    GB = gblk * B

    # Fused row layout (rows = (g_local, b, n)); lanes zero-padded to Lp.
    xr = jnp.pad(x, ((0, 0), (0, 0), (0, 0), (0, Lp - L))).reshape(gsteps, R, Lp)

    # Conv weights tiled to the fused rows, trailing singleton lane so the
    # kernel broadcasts along lanes without any in-kernel relayout.
    w1t = jnp.tile(params["w1"], (1, B, 1))[..., None]      # (K, BN, 16, 1)
    b1t = jnp.tile(params["b1"], (B, 1))[..., None]         # (BN, 16, 1)
    w2t = jnp.tile(params["w2"], (1, B, 1))[..., None]      # (K, BN, 16, 1)
    b2t = jnp.tile(params["b2"], (B, 1))                    # (BN, 1)

    # GCN adjacency as lane-broadcastable columns: abc[n, m, 0] = A_norm[m, n].
    abc = jnp.transpose(a_norm)[:, :, None]                 # (N, N, 1)

    # MXU weights: zero-pad the contraction dim to Lp, cast to bf16.
    wg_pad = jnp.zeros((Lp, C), jnp.float32).at[:L2].set(params["wg"])
    wl_pad = jnp.zeros((Lp, C), jnp.float32).at[:L].set(params["wl"])
    wg_pad = wg_pad.astype(jnp.bfloat16)
    wl_pad = wl_pad.astype(jnp.bfloat16)

    const_args = (w1t, b1t, w2t, b2t, abc, wg_pad, params["bg"], wl_pad,
                  params["bl"], params["gn_w"], params["gn_b"], params["gn_ms"])

    def _const_spec(a):
        nd = a.ndim
        return pl.BlockSpec(a.shape, lambda g, _nd=nd: (0,) * _nd)

    pooled = pl.pallas_call(
        body_gnn_kernel,
        grid=(gsteps,),
        in_specs=([pl.BlockSpec((1, R, Lp), lambda g: (g, 0, 0))]
                  + [_const_spec(a) for a in const_args]),
        out_specs=pl.BlockSpec((1, GB, C), lambda g: (g, 0, 0)),
        out_shape=jax.ShapeDtypeStruct((gsteps, GB, C), jnp.float32),
        compiler_params=pltpu.CompilerParams(dimension_semantics=("parallel",)),
    )(xr, *const_args)

    pooled = pooled.reshape(G, B, C)
    # 16-wide class head as a plain XLA matmul on the pooled output: keeps the
    # kernel's stores lane-dense and avoids an extra MXU weight swap per step.
    class_out = (jnp.dot(pooled.reshape(G * B, C), params["wo"],
                         preferred_element_type=jnp.float32)
                 + params["bo"]).reshape(G, B, -1)
    return pooled, class_out


# ---------------------------------------------------------------------------
# Pure-JAX reference (matmul operands bf16-matched to the kernel's MXU path)
# ---------------------------------------------------------------------------
def body_gnn_reference(x, params, a_norm):
    G, B, N, L = x.shape
    K = params["w1"].shape[0]
    L1 = L - K + 1
    L2 = L - 2 * K + 2
    w1, b1, w2, b2 = params["w1"], params["b1"], params["w2"], params["b2"]

    out1 = jnp.zeros((G, B, N, w1.shape[2], L1), jnp.float32)
    for k in range(K):
        out1 = out1 + w1[k][None, None, :, :, None] * x[:, :, :, None, k:k + L1]
    out1 = _leaky_relu(out1 + b1[None, None, :, :, None])

    out2 = jnp.zeros((G, B, N, L2), jnp.float32)
    for k in range(K):
        out2 = out2 + jnp.sum(w2[k][None, None, :, :, None] * out1[..., k:k + L2], axis=3)
    out2 = _leaky_relu(out2 + b2[None, None])

    hw = jnp.einsum('gbnl,lc->gbnc', out2.astype(jnp.bfloat16),
                    params["wg"].astype(jnp.bfloat16),
                    preferred_element_type=jnp.float32)
    t0 = jnp.einsum('mn,gbnc->gbmc', a_norm, hw) + params["bg"][None, None]

    mean = jnp.mean(t0, axis=1, keepdims=True)
    d = t0 - mean * params["gn_ms"][None, None]
    var = jnp.mean(d * d, axis=1, keepdims=True)
    tn = params["gn_w"][None, None] * d * jax.lax.rsqrt(var + GN_EPS) + params["gn_b"][None, None]

    xl = jnp.einsum('gbnl,lc->gbnc', x.astype(jnp.bfloat16),
                    params["wl"].astype(jnp.bfloat16),
                    preferred_element_type=jnp.float32) + params["bl"][None, None]
    t = _elu(tn + xl)
    pooled = jnp.mean(t, axis=2)
    class_out = (pooled.reshape(G * B, -1) @ params["wo"]
                 + params["bo"]).reshape(G, B, -1)
    return pooled, class_out


# ---------------------------------------------------------------------------
# Glue: deterministic parameter init, spectral normalization, GCN adjacency
# ---------------------------------------------------------------------------
def spectral_normalize(w, n_iter=30):
    """Mimic torch spectral_norm: divide by top singular value of w.reshape(out,-1)."""
    wm = w.reshape(w.shape[0], -1)
    u = jnp.ones((wm.shape[0],), jnp.float32) / jnp.sqrt(wm.shape[0])
    for _ in range(n_iter):
        v = wm.T @ u
        v = v / (jnp.linalg.norm(v) + 1e-12)
        u = wm @ v
        u = u / (jnp.linalg.norm(u) + 1e-12)
    sigma = u @ (wm @ v)
    return w / sigma


def build_gcn_adj(edge_index, num_nodes, edge_weight=None, add_self_loops=True):
    """Dense D^-1/2 (A + I) D^-1/2 as in PyG gcn_norm (aggregation at target)."""
    if edge_weight is None:
        edge_weight = jnp.ones((edge_index.shape[1],), jnp.float32)
    a = jnp.zeros((num_nodes, num_nodes), jnp.float32)
    a = a.at[edge_index[1], edge_index[0]].add(edge_weight)
    if add_self_loops:
        a = a + jnp.eye(num_nodes, dtype=jnp.float32)
    deg = jnp.sum(a, axis=1)
    dinv = jnp.where(deg > 0, 1.0 / jnp.sqrt(deg), 0.0)
    return dinv[:, None] * a * dinv[None, :]


def init_params(key, N, L, K, C, c1=16, n_cls=16):
    L2 = L - 2 * K + 2
    ks = jax.random.split(key, 10)

    def rnd(k, shape, scale=0.1):
        return scale * jax.random.normal(k, shape, jnp.float32)

    # PyTorch-shaped grouped-conv weights, spectral-normalized, then re-laid-out.
    w1_t = spectral_normalize(rnd(ks[0], (c1 * N, 1, K)))     # (16N, 1, K)
    w2_t = spectral_normalize(rnd(ks[1], (N, c1, K)))         # (N, 16, K)

    return dict(
        w1=jnp.transpose(w1_t.reshape(N, c1, K), (2, 0, 1)),  # (K, N, 16)
        b1=rnd(ks[2], (N, c1)),
        w2=jnp.transpose(w2_t, (2, 0, 1)),                    # (K, N, 16)
        b2=rnd(ks[3], (N, 1)),
        wg=rnd(ks[4], (C, L2)).T,                             # (L2, C)
        bg=rnd(ks[5], (1, C)),
        wl=rnd(ks[6], (C, L)).T,                              # (L, C)
        bl=rnd(ks[7], (1, C)),
        wo=rnd(ks[8], (n_cls, C)).T,                          # (C, 16)
        bo=rnd(ks[9], (1, n_cls)),
        gn_w=jnp.ones((1, C), jnp.float32),    # GraphNorm weight
        gn_b=jnp.zeros((1, C), jnp.float32),   # GraphNorm bias
        gn_ms=jnp.ones((1, C), jnp.float32),   # GraphNorm mean_scale
    )


# TODO(synk): drop_edge / dropout_edge (stochastic edge dropout) is not
# implemented; the module's forward default is drop_edge=False.

if __name__ == "__main__":
    # Module defaults: num_nodes=4, input_length=240, out_channels=256, kernel=3.
    # G = 4 independent graph-batches, processed 2 per grid step (2 "parallel"
    # steps so both v7x TensorCores get work).
    G, B, N, L, K, C = 4, 2, 4, 240, 3, 256

    key = jax.random.PRNGKey(0)
    kx, kp = jax.random.split(key)
    x = jax.random.normal(kx, (G, B, N, L), jnp.float32)

    # Deterministic bidirectional ring graph over N nodes.
    src = jnp.arange(N, dtype=jnp.int32)
    dst = (src + 1) % N
    edge_index = jnp.stack([jnp.concatenate([src, dst]),
                            jnp.concatenate([dst, src])], axis=0)   # (2, 2N)

    a_norm = build_gcn_adj(edge_index, N, add_self_loops=True)
    params = init_params(kp, N, L, K, C)

    fwd = jax.jit(functools.partial(body_gnn_forward, graphs_per_step=2))
    pooled, class_out = fwd(x, params, a_norm)
    jax.block_until_ready((pooled, class_out))

    assert pooled.shape == (G, B, C) and class_out.shape == (G, B, 16)

    # Lightweight correctness check against the pure-JAX reference (mean abs
    # diff; robust to the few sign-sensitive GraphNorm(B=2) elements).
    pooled_ref, class_ref = body_gnn_reference(x, params, a_norm)
    perr = float(jnp.mean(jnp.abs(pooled - pooled_ref)))
    cerr = float(jnp.mean(jnp.abs(class_out - class_ref)))
    assert perr < 5e-2 and cerr < 5e-2, (perr, cerr)

    print("KERNEL_OK")
</pallas_src>

<mosaic_0001>
module attributes {stable_mosaic.version = 11 : i64} {
  func.func @body_gnn_kernel(%arg0: i32, %arg1: memref<1x16x256xf32, #tpu.memory_space<vmem>>, %arg2: memref<3x8x16x1xf32, #tpu.memory_space<vmem>>, %arg3: memref<8x16x1xf32, #tpu.memory_space<vmem>>, %arg4: memref<3x8x16x1xf32, #tpu.memory_space<vmem>>, %arg5: memref<8x1xf32, #tpu.memory_space<vmem>>, %arg6: memref<4x4x1xf32, #tpu.memory_space<vmem>>, %arg7: memref<256x256xbf16, #tpu.memory_space<vmem>>, %arg8: memref<1x256xf32, #tpu.memory_space<vmem>>, %arg9: memref<256x256xbf16, #tpu.memory_space<vmem>>, %arg10: memref<1x256xf32, #tpu.memory_space<vmem>>, %arg11: memref<1x256xf32, #tpu.memory_space<vmem>>, %arg12: memref<1x256xf32, #tpu.memory_space<vmem>>, %arg13: memref<1x256xf32, #tpu.memory_space<vmem>>, %arg14: memref<1x4x256xf32, #tpu.memory_space<vmem>>) attributes {dimension_semantics = [#tpu.dimension_semantics<parallel>], iteration_bounds = array<i64: 2>, scalar_prefetch = 0 : i64, scratch_operands = 0 : i64, tpu.core_type = #tpu.core_type<tc>, window_params = [{transform_indices = @transform_0, window_bounds = array<i64: 1, 16, 256>}, {pipeline_mode = #tpu.pipeline_mode<synchronous>, transform_indices = @transform_1, window_bounds = array<i64: 3, 8, 16, 1>}, {pipeline_mode = #tpu.pipeline_mode<synchronous>, transform_indices = @transform_2, window_bounds = array<i64: 8, 16, 1>}, {pipeline_mode = #tpu.pipeline_mode<synchronous>, transform_indices = @transform_3, window_bounds = array<i64: 3, 8, 16, 1>}, {pipeline_mode = #tpu.pipeline_mode<synchronous>, transform_indices = @transform_4, window_bounds = array<i64: 8, 1>}, {pipeline_mode = #tpu.pipeline_mode<synchronous>, transform_indices = @transform_5, window_bounds = array<i64: 4, 4, 1>}, {pipeline_mode = #tpu.pipeline_mode<synchronous>, transform_indices = @transform_6, window_bounds = array<i64: 256, 256>}, {pipeline_mode = #tpu.pipeline_mode<synchronous>, transform_indices = @transform_7, window_bounds = array<i64: 1, 256>}, {pipeline_mode = #tpu.pipeline_mode<synchronous>, transform_indices = @transform_8, window_bounds = array<i64: 256, 256>}, {pipeline_mode = #tpu.pipeline_mode<synchronous>, transform_indices = @transform_9, window_bounds = array<i64: 1, 256>}, {pipeline_mode = #tpu.pipeline_mode<synchronous>, transform_indices = @transform_10, window_bounds = array<i64: 1, 256>}, {pipeline_mode = #tpu.pipeline_mode<synchronous>, transform_indices = @transform_11, window_bounds = array<i64: 1, 256>}, {pipeline_mode = #tpu.pipeline_mode<synchronous>, transform_indices = @transform_12, window_bounds = array<i64: 1, 256>}, {transform_indices = @transform_13, window_bounds = array<i64: 1, 4, 256>}]} {
    %c0 = arith.constant 0 : index
    %c0_0 = arith.constant 0 : index
    %c0_1 = arith.constant 0 : index
    %0 = vector.load %arg1[%c0, %c0_0, %c0_1] : memref<1x16x256xf32, #tpu.memory_space<vmem>>, vector<1x16x256xf32>
    %1 = vector.shape_cast %0 : vector<1x16x256xf32> to vector<16x256xf32>
    %2 = vector.extract_strided_slice %1 {offsets = [0, 0], sizes = [8, 256], strides = [1, 1]} : vector<16x256xf32> to vector<8x256xf32>
    %c0_2 = arith.constant 0 : index
    %c0_3 = arith.constant 0 : index
    %c0_4 = arith.constant 0 : index
    %c0_5 = arith.constant 0 : index
    %3 = vector.load %arg2[%c0_2, %c0_3, %c0_4, %c0_5] : memref<3x8x16x1xf32, #tpu.memory_space<vmem>>, vector<1x8x16x1xf32>
    %4 = vector.shape_cast %3 : vector<1x8x16x1xf32> to vector<8x16x1xf32>
    %5 = vector.shape_cast %2 : vector<8x256xf32> to vector<8x1x256xf32>
    %6 = vector.broadcast %4 : vector<8x16x1xf32> to vector<8x16x256xf32>
    %7 = vector.broadcast %5 : vector<8x1x256xf32> to vector<8x16x256xf32>
    %8 = arith.mulf %6, %7 : vector<8x16x256xf32>
    %c255_i32 = arith.constant 255 : i32
    %9 = tpu.dynamic_rotate %2 by %c255_i32 dim 1 : vector<8x256xf32>, i32 -> vector<8x256xf32>
    %c1 = arith.constant 1 : index
    %c0_6 = arith.constant 0 : index
    %c0_7 = arith.constant 0 : index
    %c0_8 = arith.constant 0 : index
    %10 = vector.load %arg2[%c1, %c0_6, %c0_7, %c0_8] : memref<3x8x16x1xf32, #tpu.memory_space<vmem>>, vector<1x8x16x1xf32>
    %11 = vector.shape_cast %10 : vector<1x8x16x1xf32> to vector<8x16x1xf32>
    %12 = vector.shape_cast %9 : vector<8x256xf32> to vector<8x1x256xf32>
    %13 = vector.broadcast %11 : vector<8x16x1xf32> to vector<8x16x256xf32>
    %14 = vector.broadcast %12 : vector<8x1x256xf32> to vector<8x16x256xf32>
    %15 = arith.mulf %13, %14 : vector<8x16x256xf32>
    %16 = arith.addf %8, %15 : vector<8x16x256xf32>
    %c254_i32 = arith.constant 254 : i32
    %17 = tpu.dynamic_rotate %2 by %c254_i32 dim 1 : vector<8x256xf32>, i32 -> vector<8x256xf32>
    %c2 = arith.constant 2 : index
    %c0_9 = arith.constant 0 : index
    %c0_10 = arith.constant 0 : index
    %c0_11 = arith.constant 0 : index
    %18 = vector.load %arg2[%c2, %c0_9, %c0_10, %c0_11] : memref<3x8x16x1xf32, #tpu.memory_space<vmem>>, vector<1x8x16x1xf32>
    %19 = vector.shape_cast %18 : vector<1x8x16x1xf32> to vector<8x16x1xf32>
    %20 = vector.shape_cast %17 : vector<8x256xf32> to vector<8x1x256xf32>
    %21 = vector.broadcast %19 : vector<8x16x1xf32> to vector<8x16x256xf32>
    %22 = vector.broadcast %20 : vector<8x1x256xf32> to vector<8x16x256xf32>
    %23 = arith.mulf %21, %22 : vector<8x16x256xf32>
    %24 = arith.addf %16, %23 : vector<8x16x256xf32>
    %c0_12 = arith.constant 0 : index
    %c0_13 = arith.constant 0 : index
    %c0_14 = arith.constant 0 : index
    %25 = vector.load %arg3[%c0_12, %c0_13, %c0_14] : memref<8x16x1xf32, #tpu.memory_space<vmem>>, vector<8x16x1xf32>
    %26 = vector.broadcast %25 : vector<8x16x1xf32> to vector<8x16x256xf32>
    %27 = arith.addf %24, %26 : vector<8x16x256xf32>
    %cst = arith.constant 0.000000e+00 : f32
    %28 = vector.broadcast %cst : f32 to vector<8x16x256xf32>
    %29 = arith.cmpf ogt, %27, %28 : vector<8x16x256xf32>
    %cst_15 = arith.constant 0.00999999977 : f32
    %30 = vector.broadcast %cst_15 : f32 to vector<8x16x256xf32>
    %31 = arith.mulf %30, %27 : vector<8x16x256xf32>
    %32 = arith.select %29, %27, %31 : vector<8x16x256xi1>, vector<8x16x256xf32>
    %c0_16 = arith.constant 0 : index
    %c0_17 = arith.constant 0 : index
    %c0_18 = arith.constant 0 : index
    %c0_19 = arith.constant 0 : index
    %33 = vector.load %arg4[%c0_16, %c0_17, %c0_18, %c0_19] : memref<3x8x16x1xf32, #tpu.memory_space<vmem>>, vector<1x8x16x1xf32>
    %34 = vector.shape_cast %33 : vector<1x8x16x1xf32> to vector<8x16x1xf32>
    %35 = vector.broadcast %34 : vector<8x16x1xf32> to vector<8x16x256xf32>
    %36 = arith.mulf %35, %32 : vector<8x16x256xf32>
    %cst_20 = arith.constant dense<0.000000e+00> : vector<8x256xf32>
    %37 = vector.multi_reduction <add>, %36, %cst_20 [1] : vector<8x16x256xf32> to vector<8x256xf32>
    %c255_i32_21 = arith.constant 255 : i32
    %38 = tpu.dynamic_rotate %32 by %c255_i32_21 dim 2 : vector<8x16x256xf32>, i32 -> vector<8x16x256xf32>
    %c1_22 = arith.constant 1 : index
    %c0_23 = arith.constant 0 : index
    %c0_24 = arith.constant 0 : index
    %c0_25 = arith.constant 0 : index
    %39 = vector.load %arg4[%c1_22, %c0_23, %c0_24, %c0_25] : memref<3x8x16x1xf32, #tpu.memory_space<vmem>>, vector<1x8x16x1xf32>
    %40 = vector.shape_cast %39 : vector<1x8x16x1xf32> to vector<8x16x1xf32>
    %41 = vector.broadcast %40 : vector<8x16x1xf32> to vector<8x16x256xf32>
    %42 = arith.mulf %41, %38 : vector<8x16x256xf32>
    %cst_26 = arith.constant dense<0.000000e+00> : vector<8x256xf32>
    %43 = vector.multi_reduction <add>, %42, %cst_26 [1] : vector<8x16x256xf32> to vector<8x256xf32>
    %44 = arith.addf %37, %43 : vector<8x256xf32>
    %c254_i32_27 = arith.constant 254 : i32
    %45 = tpu.dynamic_rotate %32 by %c254_i32_27 dim 2 : vector<8x16x256xf32>, i32 -> vector<8x16x256xf32>
    %c2_28 = arith.constant 2 : index
    %c0_29 = arith.constant 0 : index
    %c0_30 = arith.constant 0 : index
    %c0_31 = arith.constant 0 : index
    %46 = vector.load %arg4[%c2_28, %c0_29, %c0_30, %c0_31] : memref<3x8x16x1xf32, #tpu.memory_space<vmem>>, vector<1x8x16x1xf32>
    %47 = vector.shape_cast %46 : vector<1x8x16x1xf32> to vector<8x16x1xf32>
    %48 = vector.broadcast %47 : vector<8x16x1xf32> to vector<8x16x256xf32>
    %49 = arith.mulf %48, %45 : vector<8x16x256xf32>
    %cst_32 = arith.constant dense<0.000000e+00> : vector<8x256xf32>
    %50 = vector.multi_reduction <add>, %49, %cst_32 [1] : vector<8x16x256xf32> to vector<8x256xf32>
    %51 = arith.addf %44, %50 : vector<8x256xf32>
    %c0_33 = arith.constant 0 : index
    %c0_34 = arith.constant 0 : index
    %52 = vector.load %arg5[%c0_33, %c0_34] : memref<8x1xf32, #tpu.memory_space<vmem>>, vector<8x1xf32>
    %53 = vector.broadcast %52 : vector<8x1xf32> to vector<8x256xf32>
    %54 = arith.addf %51, %53 : vector<8x256xf32>
    %cst_35 = arith.constant 0.000000e+00 : f32
    %55 = vector.broadcast %cst_35 : f32 to vector<8x256xf32>
    %56 = arith.cmpf ogt, %54, %55 : vector<8x256xf32>
    %cst_36 = arith.constant 0.00999999977 : f32
    %57 = vector.broadcast %cst_36 : f32 to vector<8x256xf32>
    %58 = arith.mulf %57, %54 : vector<8x256xf32>
    %59 = arith.select %56, %54, %58 : vector<8x256xi1>, vector<8x256xf32>
    %60 = vector.extract_strided_slice %1 {offsets = [8, 0], sizes = [8, 256], strides = [1, 1]} : vector<16x256xf32> to vector<8x256xf32>
    %c0_37 = arith.constant 0 : index
    %c0_38 = arith.constant 0 : index
    %c0_39 = arith.constant 0 : index
    %c0_40 = arith.constant 0 : index
    %61 = vector.load %arg2[%c0_37, %c0_38, %c0_39, %c0_40] : memref<3x8x16x1xf32, #tpu.memory_space<vmem>>, vector<1x8x16x1xf32>
    %62 = vector.shape_cast %61 : vector<1x8x16x1xf32> to vector<8x16x1xf32>
    %63 = vector.shape_cast %60 : vector<8x256xf32> to vector<8x1x256xf32>
    %64 = vector.broadcast %62 : vector<8x16x1xf32> to vector<8x16x256xf32>
    %65 = vector.broadcast %63 : vector<8x1x256xf32> to vector<8x16x256xf32>
    %66 = arith.mulf %64, %65 : vector<8x16x256xf32>
    %c255_i32_41 = arith.constant 255 : i32
    %67 = tpu.dynamic_rotate %60 by %c255_i32_41 dim 1 : vector<8x256xf32>, i32 -> vector<8x256xf32>
    %c1_42 = arith.constant 1 : index
    %c0_43 = arith.constant 0 : index
    %c0_44 = arith.constant 0 : index
    %c0_45 = arith.constant 0 : index
    %68 = vector.load %arg2[%c1_42, %c0_43, %c0_44, %c0_45] : memref<3x8x16x1xf32, #tpu.memory_space<vmem>>, vector<1x8x16x1xf32>
    %69 = vector.shape_cast %68 : vector<1x8x16x1xf32> to vector<8x16x1xf32>
    %70 = vector.shape_cast %67 : vector<8x256xf32> to vector<8x1x256xf32>
    %71 = vector.broadcast %69 : vector<8x16x1xf32> to vector<8x16x256xf32>
    %72 = vector.broadcast %70 : vector<8x1x256xf32> to vector<8x16x256xf32>
    %73 = arith.mulf %71, %72 : vector<8x16x256xf32>
    %74 = arith.addf %66, %73 : vector<8x16x256xf32>
    %c254_i32_46 = arith.constant 254 : i32
    %75 = tpu.dynamic_rotate %60 by %c254_i32_46 dim 1 : vector<8x256xf32>, i32 -> vector<8x256xf32>
    %c2_47 = arith.constant 2 : index
    %c0_48 = arith.constant 0 : index
    %c0_49 = arith.constant 0 : index
    %c0_50 = arith.constant 0 : index
    %76 = vector.load %arg2[%c2_47, %c0_48, %c0_49, %c0_50] : memref<3x8x16x1xf32, #tpu.memory_space<vmem>>, vector<1x8x16x1xf32>
    %77 = vector.shape_cast %76 : vector<1x8x16x1xf32> to vector<8x16x1xf32>
    %78 = vector.shape_cast %75 : vector<8x256xf32> to vector<8x1x256xf32>
    %79 = vector.broadcast %77 : vector<8x16x1xf32> to vector<8x16x256xf32>
    %80 = vector.broadcast %78 : vector<8x1x256xf32> to vector<8x16x256xf32>
    %81 = arith.mulf %79, %80 : vector<8x16x256xf32>
    %82 = arith.addf %74, %81 : vector<8x16x256xf32>
    %c0_51 = arith.constant 0 : index
    %c0_52 = arith.constant 0 : index
    %c0_53 = arith.constant 0 : index
    %83 = vector.load %arg3[%c0_51, %c0_52, %c0_53] : memref<8x16x1xf32, #tpu.memory_space<vmem>>, vector<8x16x1xf32>
    %84 = vector.broadcast %83 : vector<8x16x1xf32> to vector<8x16x256xf32>
    %85 = arith.addf %82, %84 : vector<8x16x256xf32>
    %cst_54 = arith.constant 0.000000e+00 : f32
    %86 = vector.broadcast %cst_54 : f32 to vector<8x16x256xf32>
    %87 = arith.cmpf ogt, %85, %86 : vector<8x16x256xf32>
    %cst_55 = arith.constant 0.00999999977 : f32
    %88 = vector.broadcast %cst_55 : f32 to vector<8x16x256xf32>
    %89 = arith.mulf %88, %85 : vector<8x16x256xf32>
    %90 = arith.select %87, %85, %89 : vector<8x16x256xi1>, vector<8x16x256xf32>
    %c0_56 = arith.constant 0 : index
    %c0_57 = arith.constant 0 : index
    %c0_58 = arith.constant 0 : index
    %c0_59 = arith.constant 0 : index
    %91 = vector.load %arg4[%c0_56, %c0_57, %c0_58, %c0_59] : memref<3x8x16x1xf32, #tpu.memory_space<vmem>>, vector<1x8x16x1xf32>
    %92 = vector.shape_cast %91 : vector<1x8x16x1xf32> to vector<8x16x1xf32>
    %93 = vector.broadcast %92 : vector<8x16x1xf32> to vector<8x16x256xf32>
    %94 = arith.mulf %93, %90 : vector<8x16x256xf32>
    %cst_60 = arith.constant dense<0.000000e+00> : vector<8x256xf32>
    %95 = vector.multi_reduction <add>, %94, %cst_60 [1] : vector<8x16x256xf32> to vector<8x256xf32>
    %c255_i32_61 = arith.constant 255 : i32
    %96 = tpu.dynamic_rotate %90 by %c255_i32_61 dim 2 : vector<8x16x256xf32>, i32 -> vector<8x16x256xf32>
    %c1_62 = arith.constant 1 : index
    %c0_63 = arith.constant 0 : index
    %c0_64 = arith.constant 0 : index
    %c0_65 = arith.constant 0 : index
    %97 = vector.load %arg4[%c1_62, %c0_63, %c0_64, %c0_65] : memref<3x8x16x1xf32, #tpu.memory_space<vmem>>, vector<1x8x16x1xf32>
    %98 = vector.shape_cast %97 : vector<1x8x16x1xf32> to vector<8x16x1xf32>
    %99 = vector.broadcast %98 : vector<8x16x1xf32> to vector<8x16x256xf32>
    %100 = arith.mulf %99, %96 : vector<8x16x256xf32>
    %cst_66 = arith.constant dense<0.000000e+00> : vector<8x256xf32>
    %101 = vector.multi_reduction <add>, %100, %cst_66 [1] : vector<8x16x256xf32> to vector<8x256xf32>
    %102 = arith.addf %95, %101 : vector<8x256xf32>
    %c254_i32_67 = arith.constant 254 : i32
    %103 = tpu.dynamic_rotate %90 by %c254_i32_67 dim 2 : vector<8x16x256xf32>, i32 -> vector<8x16x256xf32>
    %c2_68 = arith.constant 2 : index
    %c0_69 = arith.constant 0 : index
    %c0_70 = arith.constant 0 : index
    %c0_71 = arith.constant 0 : index
    %104 = vector.load %arg4[%c2_68, %c0_69, %c0_70, %c0_71] : memref<3x8x16x1xf32, #tpu.memory_space<vmem>>, vector<1x8x16x1xf32>
    %105 = vector.shape_cast %104 : vector<1x8x16x1xf32> to vector<8x16x1xf32>
    %106 = vector.broadcast %105 : vector<8x16x1xf32> to vector<8x16x256xf32>
    %107 = arith.mulf %106, %103 : vector<8x16x256xf32>
    %cst_72 = arith.constant dense<0.000000e+00> : vector<8x256xf32>
    %108 = vector.multi_reduction <add>, %107, %cst_72 [1] : vector<8x16x256xf32> to vector<8x256xf32>
    %109 = arith.addf %102, %108 : vector<8x256xf32>
    %c0_73 = arith.constant 0 : index
    %c0_74 = arith.constant 0 : index
    %110 = vector.load %arg5[%c0_73, %c0_74] : memref<8x1xf32, #tpu.memory_space<vmem>>, vector<8x1xf32>
    %111 = vector.broadcast %110 : vector<8x1xf32> to vector<8x256xf32>
    %112 = arith.addf %109, %111 : vector<8x256xf32>
    %cst_75 = arith.constant 0.000000e+00 : f32
    %113 = vector.broadcast %cst_75 : f32 to vector<8x256xf32>
    %114 = arith.cmpf ogt, %112, %113 : vector<8x256xf32>
    %cst_76 = arith.constant 0.00999999977 : f32
    %115 = vector.broadcast %cst_76 : f32 to vector<8x256xf32>
    %116 = arith.mulf %115, %112 : vector<8x256xf32>
    %117 = arith.select %114, %112, %116 : vector<8x256xi1>, vector<8x256xf32>
    %118 = tpu.concatenate %59, %117 in 0 : vector<8x256xf32>, vector<8x256xf32> -> vector<16x256xf32>
    %119 = arith.truncf %118 : vector<16x256xf32> to vector<16x256xbf16>
    %c0_77 = arith.constant 0 : index
    %c0_78 = arith.constant 0 : index
    %120 = vector.load %arg7[%c0_77, %c0_78] : memref<256x256xbf16, #tpu.memory_space<vmem>>, vector<256x256xbf16>
    %cst_79 = arith.constant dense<0.000000e+00> : vector<16x256xf32>
    %121 = tpu.matmul %119, %120, %cst_79 {dimension_numbers = #tpu.dot_dimension_numbers<[1], [0], [0], [1], [0, 0, 1, 1], [], []>} : vector<16x256xbf16>, vector<256x256xbf16>, vector<16x256xf32> -> vector<16x256xf32>
    %122 = arith.truncf %1 : vector<16x256xf32> to vector<16x256xbf16>
    %c0_80 = arith.constant 0 : index
    %c0_81 = arith.constant 0 : index
    %123 = vector.load %arg9[%c0_80, %c0_81] : memref<256x256xbf16, #tpu.memory_space<vmem>>, vector<256x256xbf16>
    %cst_82 = arith.constant dense<0.000000e+00> : vector<16x256xf32>
    %124 = tpu.matmul %122, %123, %cst_82 {dimension_numbers = #tpu.dot_dimension_numbers<[1], [0], [0], [1], [0, 0, 1, 1], [], []>} : vector<16x256xbf16>, vector<256x256xbf16>, vector<16x256xf32> -> vector<16x256xf32>
    %125 = vector.shape_cast %121 : vector<16x256xf32> to vector<2x2x4x256xf32>
    %126 = vector.shape_cast %124 : vector<16x256xf32> to vector<2x2x4x256xf32>
    %c0_83 = arith.constant 0 : index
    %c0_84 = arith.constant 0 : index
    %c0_85 = arith.constant 0 : index
    %127 = vector.load %arg6[%c0_83, %c0_84, %c0_85] : memref<4x4x1xf32, #tpu.memory_space<vmem>>, vector<1x4x1xf32>
    %128 = vector.shape_cast %127 : vector<1x4x1xf32> to vector<4x1xf32>
    %129 = vector.extract_strided_slice %125 {offsets = [0, 0, 0, 0], sizes = [2, 2, 1, 256], strides = [1, 1, 1, 1]} : vector<2x2x4x256xf32> to vector<2x2x1x256xf32>
    %130 = vector.shape_cast %128 : vector<4x1xf32> to vector<1x1x4x1xf32>
    %131 = vector.broadcast %130 : vector<1x1x4x1xf32> to vector<2x2x4x256xf32>
    %132 = vector.broadcast %129 : vector<2x2x1x256xf32> to vector<2x2x4x256xf32>
    %133 = arith.mulf %131, %132 : vector<2x2x4x256xf32>
    %c1_86 = arith.constant 1 : index
    %c0_87 = arith.constant 0 : index
    %c0_88 = arith.constant 0 : index
    %134 = vector.load %arg6[%c1_86, %c0_87, %c0_88] : memref<4x4x1xf32, #tpu.memory_space<vmem>>, vector<1x4x1xf32>
    %135 = vector.shape_cast %134 : vector<1x4x1xf32> to vector<4x1xf32>
    %136 = vector.extract_strided_slice %125 {offsets = [0, 0, 1, 0], sizes = [2, 2, 1, 256], strides = [1, 1, 1, 1]} : vector<2x2x4x256xf32> to vector<2x2x1x256xf32>
    %137 = vector.shape_cast %135 : vector<4x1xf32> to vector<1x1x4x1xf32>
    %138 = vector.broadcast %137 : vector<1x1x4x1xf32> to vector<2x2x4x256xf32>
    %139 = vector.broadcast %136 : vector<2x2x1x256xf32> to vector<2x2x4x256xf32>
    %140 = arith.mulf %138, %139 : vector<2x2x4x256xf32>
    %141 = arith.addf %133, %140 : vector<2x2x4x256xf32>
    %c2_89 = arith.constant 2 : index
    %c0_90 = arith.constant 0 : index
    %c0_91 = arith.constant 0 : index
    %142 = vector.load %arg6[%c2_89, %c0_90, %c0_91] : memref<4x4x1xf32, #tpu.memory_space<vmem>>, vector<1x4x1xf32>
    %143 = vector.shape_cast %142 : vector<1x4x1xf32> to vector<4x1xf32>
    %144 = vector.extract_strided_slice %125 {offsets = [0, 0, 2, 0], sizes = [2, 2, 1, 256], strides = [1, 1, 1, 1]} : vector<2x2x4x256xf32> to vector<2x2x1x256xf32>
    %145 = vector.shape_cast %143 : vector<4x1xf32> to vector<1x1x4x1xf32>
    %146 = vector.broadcast %145 : vector<1x1x4x1xf32> to vector<2x2x4x256xf32>
    %147 = vector.broadcast %144 : vector<2x2x1x256xf32> to vector<2x2x4x256xf32>
    %148 = arith.mulf %146, %147 : vector<2x2x4x256xf32>
    %149 = arith.addf %141, %148 : vector<2x2x4x256xf32>
    %c3 = arith.constant 3 : index
    %c0_92 = arith.constant 0 : index
    %c0_93 = arith.constant 0 : index
    %150 = vector.load %arg6[%c3, %c0_92, %c0_93] : memref<4x4x1xf32, #tpu.memory_space<vmem>>, vector<1x4x1xf32>
    %151 = vector.shape_cast %150 : vector<1x4x1xf32> to vector<4x1xf32>
    %152 = vector.extract_strided_slice %125 {offsets = [0, 0, 3, 0], sizes = [2, 2, 1, 256], strides = [1, 1, 1, 1]} : vector<2x2x4x256xf32> to vector<2x2x1x256xf32>
    %153 = vector.shape_cast %151 : vector<4x1xf32> to vector<1x1x4x1xf32>
    %154 = vector.broadcast %153 : vector<1x1x4x1xf32> to vector<2x2x4x256xf32>
    %155 = vector.broadcast %152 : vector<2x2x1x256xf32> to vector<2x2x4x256xf32>
    %156 = arith.mulf %154, %155 : vector<2x2x4x256xf32>
    %157 = arith.addf %149, %156 : vector<2x2x4x256xf32>
    %c0_94 = arith.constant 0 : index
    %c0_95 = arith.constant 0 : index
    %158 = vector.load %arg8[%c0_94, %c0_95] : memref<1x256xf32, #tpu.memory_space<vmem>>, vector<1x256xf32>
    %159 = vector.shape_cast %158 : vector<1x256xf32> to vector<1x1x1x256xf32>
    %160 = vector.broadcast %159 : vector<1x1x1x256xf32> to vector<2x2x4x256xf32>
    %161 = arith.addf %157, %160 : vector<2x2x4x256xf32>
    %cst_96 = arith.constant dense<0.000000e+00> : vector<2x4x256xf32>
    %162 = vector.multi_reduction <add>, %161, %cst_96 [1] : vector<2x2x4x256xf32> to vector<2x4x256xf32>
    %163 = vector.shape_cast %162 : vector<2x4x256xf32> to vector<2x1x4x256xf32>
    %cst_97 = arith.constant 2.000000e+00 : f32
    %164 = vector.broadcast %cst_97 : f32 to vector<2x1x4x256xf32>
    %165 = arith.divf %163, %164 : vector<2x1x4x256xf32>
    %c0_98 = arith.constant 0 : index
    %c0_99 = arith.constant 0 : index
    %166 = vector.load %arg13[%c0_98, %c0_99] : memref<1x256xf32, #tpu.memory_space<vmem>>, vector<1x256xf32>
    %167 = vector.shape_cast %166 : vector<1x256xf32> to vector<1x1x1x256xf32>
    %168 = vector.broadcast %167 : vector<1x1x1x256xf32> to vector<2x1x4x256xf32>
    %169 = arith.mulf %165, %168 : vector<2x1x4x256xf32>
    %170 = vector.broadcast %169 : vector<2x1x4x256xf32> to vector<2x2x4x256xf32>
    %171 = arith.subf %161, %170 : vector<2x2x4x256xf32>
    %172 = arith.mulf %171, %171 : vector<2x2x4x256xf32>
    %cst_100 = arith.constant dense<0.000000e+00> : vector<2x4x256xf32>
    %173 = vector.multi_reduction <add>, %172, %cst_100 [1] : vector<2x2x4x256xf32> to vector<2x4x256xf32>
    %174 = vector.shape_cast %173 : vector<2x4x256xf32> to vector<2x1x4x256xf32>
    %cst_101 = arith.constant 2.000000e+00 : f32
    %175 = vector.broadcast %cst_101 : f32 to vector<2x1x4x256xf32>
    %176 = arith.divf %174, %175 : vector<2x1x4x256xf32>
    %c0_102 = arith.constant 0 : index
    %c0_103 = arith.constant 0 : index
    %177 = vector.load %arg11[%c0_102, %c0_103] : memref<1x256xf32, #tpu.memory_space<vmem>>, vector<1x256xf32>
    %178 = vector.shape_cast %177 : vector<1x256xf32> to vector<1x1x1x256xf32>
    %179 = vector.broadcast %178 : vector<1x1x1x256xf32> to vector<2x2x4x256xf32>
    %180 = arith.mulf %179, %171 : vector<2x2x4x256xf32>
    %cst_104 = arith.constant 9.99999974E-6 : f32
    %181 = vector.broadcast %cst_104 : f32 to vector<2x1x4x256xf32>
    %182 = arith.addf %176, %181 : vector<2x1x4x256xf32>
    %183 = math.rsqrt %182 : vector<2x1x4x256xf32>
    %184 = vector.broadcast %183 : vector<2x1x4x256xf32> to vector<2x2x4x256xf32>
    %185 = arith.mulf %180, %184 : vector<2x2x4x256xf32>
    %c0_105 = arith.constant 0 : index
    %c0_106 = arith.constant 0 : index
    %186 = vector.load %arg12[%c0_105, %c0_106] : memref<1x256xf32, #tpu.memory_space<vmem>>, vector<1x256xf32>
    %187 = vector.shape_cast %186 : vector<1x256xf32> to vector<1x1x1x256xf32>
    %188 = vector.broadcast %187 : vector<1x1x1x256xf32> to vector<2x2x4x256xf32>
    %189 = arith.addf %185, %188 : vector<2x2x4x256xf32>
    %190 = arith.addf %189, %126 : vector<2x2x4x256xf32>
    %c0_107 = arith.constant 0 : index
    %c0_108 = arith.constant 0 : index
    %191 = vector.load %arg10[%c0_107, %c0_108] : memref<1x256xf32, #tpu.memory_space<vmem>>, vector<1x256xf32>
    %192 = vector.shape_cast %191 : vector<1x256xf32> to vector<1x1x1x256xf32>
    %193 = vector.broadcast %192 : vector<1x1x1x256xf32> to vector<2x2x4x256xf32>
    %194 = arith.addf %190, %193 : vector<2x2x4x256xf32>
    %cst_109 = arith.constant 0.000000e+00 : f32
    %195 = vector.broadcast %cst_109 : f32 to vector<2x2x4x256xf32>
    %196 = arith.cmpf ogt, %194, %195 : vector<2x2x4x256xf32>
    %cst_110 = arith.constant 0.000000e+00 : f32
    %197 = vector.broadcast %cst_110 : f32 to vector<2x2x4x256xf32>
    %198 = arith.minimumf %194, %197 : vector<2x2x4x256xf32>
    %199 = math.exp %198 : vector<2x2x4x256xf32>
    %cst_111 = arith.constant 1.000000e+00 : f32
    %200 = vector.broadcast %cst_111 : f32 to vector<2x2x4x256xf32>
    %201 = arith.subf %199, %200 : vector<2x2x4x256xf32>
    %202 = arith.select %196, %194, %201 : vector<2x2x4x256xi1>, vector<2x2x4x256xf32>
    %cst_112 = arith.constant dense<0.000000e+00> : vector<2x2x256xf32>
    %203 = vector.multi_reduction <add>, %202, %cst_112 [2] : vector<2x2x4x256xf32> to vector<2x2x256xf32>
    %cst_113 = arith.constant 4.000000e+00 : f32
    %204 = vector.broadcast %cst_113 : f32 to vector<2x2x256xf32>
    %205 = arith.divf %203, %204 : vector<2x2x256xf32>
    %206 = vector.shape_cast %205 : vector<2x2x256xf32> to vector<4x256xf32>
    %c0_114 = arith.constant 0 : index
    %c0_115 = arith.constant 0 : index
    %c0_116 = arith.constant 0 : index
    %207 = vector.load %arg14[%c0_114, %c0_115, %c0_116] : memref<1x4x256xf32, #tpu.memory_space<vmem>>, vector<1x4x256xf32>
    %208 = vector.shape_cast %207 : vector<1x4x256xf32> to vector<4x256xf32>
    %209 = vector.shape_cast %206 : vector<4x256xf32> to vector<1x4x256xf32>
    tpu.vector_store %arg14[%c0_114, %c0_115, %c0_116], %209 {strides = array<i32>} : memref<1x4x256xf32, #tpu.memory_space<vmem>>, vector<1x4x256xf32>,
    return
  }
  func.func @transform_0(%arg0: i32) -> (i32, i32, i32) {
    %c0_i32 = arith.constant 0 : i32
    %c0_i32_0 = arith.constant 0 : i32
    %c0_i32_1 = arith.constant 0 : i32
    return %arg0, %c0_i32, %c0_i32_0 : i32, i32, i32
  }
  func.func @transform_1(%arg0: i32) -> (i32, i32, i32, i32) {
    %c0_i32 = arith.constant 0 : i32
    %c0_i32_0 = arith.constant 0 : i32
    %c0_i32_1 = arith.constant 0 : i32
    %c0_i32_2 = arith.constant 0 : i32
    %c0_i32_3 = arith.constant 0 : i32
    return %c0_i32, %c0_i32_0, %c0_i32_1, %c0_i32_2 : i32, i32, i32, i32
  }
  func.func @transform_2(%arg0: i32) -> (i32, i32, i32) {
    %c0_i32 = arith.constant 0 : i32
    %c0_i32_0 = arith.constant 0 : i32
    %c0_i32_1 = arith.constant 0 : i32
    %c0_i32_2 = arith.constant 0 : i32
    return %c0_i32, %c0_i32_0, %c0_i32_1 : i32, i32, i32
  }
  func.func @transform_3(%arg0: i32) -> (i32, i32, i32, i32) {
    %c0_i32 = arith.constant 0 : i32
    %c0_i32_0 = arith.constant 0 : i32
    %c0_i32_1 = arith.constant 0 : i32
    %c0_i32_2 = arith.constant 0 : i32
    %c0_i32_3 = arith.constant 0 : i32
    return %c0_i32, %c0_i32_0, %c0_i32_1, %c0_i32_2 : i32, i32, i32, i32
  }
  func.func @transform_4(%arg0: i32) -> (i32, i32) {
    %c0_i32 = arith.constant 0 : i32
    %c0_i32_0 = arith.constant 0 : i32
    %c0_i32_1 = arith.constant 0 : i32
    return %c0_i32, %c0_i32_0 : i32, i32
  }
  func.func @transform_5(%arg0: i32) -> (i32, i32, i32) {
    %c0_i32 = arith.constant 0 : i32
    %c0_i32_0 = arith.constant 0 : i32
    %c0_i32_1 = arith.constant 0 : i32
    %c0_i32_2 = arith.constant 0 : i32
    return %c0_i32, %c0_i32_0, %c0_i32_1 : i32, i32, i32
  }
  func.func @transform_6(%arg0: i32) -> (i32, i32) {
    %c0_i32 = arith.constant 0 : i32
    %c0_i32_0 = arith.constant 0 : i32
    %c0_i32_1 = arith.constant 0 : i32
    return %c0_i32, %c0_i32_0 : i32, i32
  }
  func.func @transform_7(%arg0: i32) -> (i32, i32) {
    %c0_i32 = arith.constant 0 : i32
    %c0_i32_0 = arith.constant 0 : i32
    %c0_i32_1 = arith.constant 0 : i32
    return %c0_i32, %c0_i32_0 : i32, i32
  }
  func.func @transform_8(%arg0: i32) -> (i32, i32) {
    %c0_i32 = arith.constant 0 : i32
    %c0_i32_0 = arith.constant 0 : i32
    %c0_i32_1 = arith.constant 0 : i32
    return %c0_i32, %c0_i32_0 : i32, i32
  }
  func.func @transform_9(%arg0: i32) -> (i32, i32) {
    %c0_i32 = arith.constant 0 : i32
    %c0_i32_0 = arith.constant 0 : i32
    %c0_i32_1 = arith.constant 0 : i32
    return %c0_i32, %c0_i32_0 : i32, i32
  }
  func.func @transform_10(%arg0: i32) -> (i32, i32) {
    %c0_i32 = arith.constant 0 : i32
    %c0_i32_0 = arith.constant 0 : i32
    %c0_i32_1 = arith.constant 0 : i32
    return %c0_i32, %c0_i32_0 : i32, i32
  }
  func.func @transform_11(%arg0: i32) -> (i32, i32) {
    %c0_i32 = arith.constant 0 : i32
    %c0_i32_0 = arith.constant 0 : i32
    %c0_i32_1 = arith.constant 0 : i32
    return %c0_i32, %c0_i32_0 : i32, i32
  }
  func.func @transform_12(%arg0: i32) -> (i32, i32) {
    %c0_i32 = arith.constant 0 : i32
    %c0_i32_0 = arith.constant 0 : i32
    %c0_i32_1 = arith.constant 0 : i32
    return %c0_i32, %c0_i32_0 : i32, i32
  }
  func.func @transform_13(%arg0: i32) -> (i32, i32, i32) {
    %c0_i32 = arith.constant 0 : i32
    %c0_i32_0 = arith.constant 0 : i32
    %c0_i32_1 = arith.constant 0 : i32
    return %arg0, %c0_i32, %c0_i32_0 : i32, i32, i32
  }
}

</mosaic_0001>

<llo_original>
// kernel: body_gnn_forward.1
$region0: #{body_gnn_forward.1}
  #allocation0 [shape = 'u32[]', space=smem, size = 0x4, offset = 0x4, fixed_abs, tag = 'smem constant byte address 0x4 - core index']
  #allocation1 [shape = 'u32[144,128]{1,0:T(1,128)}', space=vmem, size = 0x12000, scoped, tag = 'internal scratch']
  %s0 = inlined_call_operand.vmem [shape: f32[2,16,256], index: 0, kind: input, shape index: {}]
  %s1 = inlined_call_operand.vmem [shape: f32[3,8,16,1], index: 1, kind: input, shape index: {}]
  %s2 = inlined_call_operand.vmem [shape: f32[8,16,1], index: 2, kind: input, shape index: {}]
  %s3 = inlined_call_operand.vmem [shape: f32[3,8,16,1], index: 3, kind: input, shape index: {}]
  %s4 = inlined_call_operand.vmem [shape: f32[8,1], index: 4, kind: input, shape index: {}]
  %s5 = inlined_call_operand.vmem [shape: f32[4,4,1], index: 5, kind: input, shape index: {}]
  %s6 = inlined_call_operand.vmem [shape: bf16[256,256], index: 6, kind: input, shape index: {}]
  %s7 = inlined_call_operand.vmem [shape: f32[1,256], index: 7, kind: input, shape index: {}]
  %s8 = inlined_call_operand.vmem [shape: bf16[256,256], index: 8, kind: input, shape index: {}]
  %s9 = inlined_call_operand.vmem [shape: f32[1,256], index: 9, kind: input, shape index: {}]
  %s10 = inlined_call_operand.vmem [shape: f32[1,256], index: 10, kind: input, shape index: {}]
  %s11 = inlined_call_operand.vmem [shape: f32[1,256], index: 11, kind: input, shape index: {}]
  %s12 = inlined_call_operand.vmem [shape: f32[1,256], index: 12, kind: input, shape index: {}]
  %s13 = inlined_call_operand.vmem [shape: f32[2,4,256], index: 13, kind: output, shape index: {}]
  %s14 = sld [smem:[#allocation0]]
  $region85: #{body_gnn_forward.1} parent=0
    _
  %s16 = ssub.s32 1, %s14
  %s17 = scalar_select 0, %s16, %s14
  loop: start=0, step=1, limit=4
  $region2: #{body_gnn_forward.1} parent=0 // loop_pre_header
    _
  $region3: #{body_gnn_forward.1} parent=0 // loop_header
    %s19 = sphi 0, %s23
    %p20 = scmp.ge.s32.totalorder %s19, 4
    %s29 = sphi 0, %s31
    %s32 = sphi 0, %s29
    %s33 = sphi 0, %s32
    %s49 = sphi 0, %s33
    %s53 = sphi 0, %s53
    %s55 = sphi 0, %s53
    %s56 = sphi 0, %s55
    %s70 = sphi 0, %s56
    %s74 = sphi 0, %s74
    %s76 = sphi 0, %s74
    %s77 = sphi 0, %s76
    %s91 = sphi 0, %s77
    %s95 = sphi 0, %s95
    %s97 = sphi 0, %s95
    %s98 = sphi 0, %s97
    %s112 = sphi 0, %s98
    %s116 = sphi 0, %s116
    %s118 = sphi 0, %s116
    %s119 = sphi 0, %s118
    %s133 = sphi 0, %s119
    %s137 = sphi 0, %s137
    %s139 = sphi 0, %s137
    %s140 = sphi 0, %s139
    %s154 = sphi 0, %s140
    %s158 = sphi 0, %s158
    %s160 = sphi 0, %s158
    %s161 = sphi 0, %s160
    %s175 = sphi 0, %s161
    %s179 = sphi 0, %s179
    %s181 = sphi 0, %s179
    %s182 = sphi 0, %s181
    %s196 = sphi 0, %s182
    %s200 = sphi 0, %s200
    %s202 = sphi 0, %s200
    %s203 = sphi 0, %s202
    %s217 = sphi 0, %s203
    %s221 = sphi 0, %s221
    %s223 = sphi 0, %s221
    %s224 = sphi 0, %s223
    %s238 = sphi 0, %s224
    %s242 = sphi 0, %s242
    %s244 = sphi 0, %s242
    %s245 = sphi 0, %s244
    %s259 = sphi 0, %s245
    %s263 = sphi 0, %s263
    %s265 = sphi 0, %s263
    %s266 = sphi 0, %s265
    %s280 = sphi 0, %s266
    %s284 = sphi 0, %s284
    %s286 = sphi 0, %s284
    %s287 = sphi 0, %s286
    %s301 = sphi 0, %s287
    %s307 = sphi 0, %s309
    %s310 = sphi 0, %s307
    %s311 = sphi 0, %s310
    %s327 = sphi 0, %s311
  $region4: #{body_gnn_forward.1} parent=0 // loop_header_branch
    %22 = sbr.rel (%p20) target = $region8
  $region5: #{body_gnn_forward.1} parent=0 // loop_body
    %s24 = ssub.s32 %s19, 1
    %s25 = ssub.s32 %s19, 2
    %s26 = sadd.s32 %s19, 1
    %s27 = ssub.s32 %s19, %s26
    %p28 = scmp.eq.s32.totalorder %s27, 0
    %s30 = sadd.s32 %s29, 1
    %s31 = scalar_select %p28, %s29, %s30
    %p34 = pneg %p28
    %p35 = scmp.eq.s32.totalorder %s19, 1
    %p36 = por %p34, %p35
    %p37 = scmp.ne.s32.totalorder %s29, %s32
    %p38 = scmp.eq.s32.totalorder %s19, 0
    %p39 = por %p37, %p38
    %p40 = scmp.ne.s32.totalorder %s29, %s32
    %p41 = scmp.eq.s32.totalorder %s24, 1
    %p42 = por %p40, %p41
    %p43 = scmp.ne.s32.totalorder %s32, %s33
    %p44 = scmp.eq.s32.totalorder %s24, 0
    %p45 = por %p43, %p44
    %p46 = scmp.ne.s32.totalorder %s32, %s33
    %p47 = scmp.eq.s32.totalorder %s25, 1
    %p48 = por %p46, %p47
    %p50 = scmp.ne.s32.totalorder %s33, %s49
    %p51 = scmp.eq.s32.totalorder %s25, 0
    %p52 = por %p50, %p51
    %s54 = sadd.s32 %s53, 1
    %p57 = scmp.eq.s32.totalorder %s19, 1
    %p58 = scmp.ne.s32.totalorder %s53, %s55
    %p59 = scmp.eq.s32.totalorder %s19, 0
    %p60 = por %p58, %p59
    %p61 = scmp.ne.s32.totalorder %s53, %s55
    %p62 = scmp.eq.s32.totalorder %s24, 1
    %p63 = por %p61, %p62
    %p64 = scmp.ne.s32.totalorder %s55, %s56
    %p65 = scmp.eq.s32.totalorder %s24, 0
    %p66 = por %p64, %p65
    %p67 = scmp.ne.s32.totalorder %s55, %s56
    %p68 = scmp.eq.s32.totalorder %s25, 1
    %p69 = por %p67, %p68
    %p71 = scmp.ne.s32.totalorder %s56, %s70
    %p72 = scmp.eq.s32.totalorder %s25, 0
    %p73 = por %p71, %p72
    %s75 = sadd.s32 %s74, 1
    %p78 = scmp.eq.s32.totalorder %s19, 1
    %p79 = scmp.ne.s32.totalorder %s74, %s76
    %p80 = scmp.eq.s32.totalorder %s19, 0
    %p81 = por %p79, %p80
    %p82 = scmp.ne.s32.totalorder %s74, %s76
    %p83 = scmp.eq.s32.totalorder %s24, 1
    %p84 = por %p82, %p83
    %p85 = scmp.ne.s32.totalorder %s76, %s77
    %p86 = scmp.eq.s32.totalorder %s24, 0
    %p87 = por %p85, %p86
    %p88 = scmp.ne.s32.totalorder %s76, %s77
    %p89 = scmp.eq.s32.totalorder %s25, 1
    %p90 = por %p88, %p89
    %p92 = scmp.ne.s32.totalorder %s77, %s91
    %p93 = scmp.eq.s32.totalorder %s25, 0
    %p94 = por %p92, %p93
    %s96 = sadd.s32 %s95, 1
    %p99 = scmp.eq.s32.totalorder %s19, 1
    %p100 = scmp.ne.s32.totalorder %s95, %s97
    %p101 = scmp.eq.s32.totalorder %s19, 0
    %p102 = por %p100, %p101
    %p103 = scmp.ne.s32.totalorder %s95, %s97
    %p104 = scmp.eq.s32.totalorder %s24, 1
    %p105 = por %p103, %p104
    %p106 = scmp.ne.s32.totalorder %s97, %s98
    %p107 = scmp.eq.s32.totalorder %s24, 0
    %p108 = por %p106, %p107
    %p109 = scmp.ne.s32.totalorder %s97, %s98
    %p110 = scmp.eq.s32.totalorder %s25, 1
    %p111 = por %p109, %p110
    %p113 = scmp.ne.s32.totalorder %s98, %s112
    %p114 = scmp.eq.s32.totalorder %s25, 0
    %p115 = por %p113, %p114
    %s117 = sadd.s32 %s116, 1
    %p120 = scmp.eq.s32.totalorder %s19, 1
    %p121 = scmp.ne.s32.totalorder %s116, %s118
    %p122 = scmp.eq.s32.totalorder %s19, 0
    %p123 = por %p121, %p122
    %p124 = scmp.ne.s32.totalorder %s116, %s118
    %p125 = scmp.eq.s32.totalorder %s24, 1
    %p126 = por %p124, %p125
    %p127 = scmp.ne.s32.totalorder %s118, %s119
    %p128 = scmp.eq.s32.totalorder %s24, 0
    %p129 = por %p127, %p128
    %p130 = scmp.ne.s32.totalorder %s118, %s119
    %p131 = scmp.eq.s32.totalorder %s25, 1
    %p132 = por %p130, %p131
    %p134 = scmp.ne.s32.totalorder %s119, %s133
    %p135 = scmp.eq.s32.totalorder %s25, 0
    %p136 = por %p134, %p135
    %s138 = sadd.s32 %s137, 1
    %p141 = scmp.eq.s32.totalorder %s19, 1
    %p142 = scmp.ne.s32.totalorder %s137, %s139
    %p143 = scmp.eq.s32.totalorder %s19, 0
    %p144 = por %p142, %p143
    %p145 = scmp.ne.s32.totalorder %s137, %s139
    %p146 = scmp.eq.s32.totalorder %s24, 1
    %p147 = por %p145, %p146
    %p148 = scmp.ne.s32.totalorder %s139, %s140
    %p149 = scmp.eq.s32.totalorder %s24, 0
    %p150 = por %p148, %p149
    %p151 = scmp.ne.s32.totalorder %s139, %s140
    %p152 = scmp.eq.s32.totalorder %s25, 1
    %p153 = por %p151, %p152
    %p155 = scmp.ne.s32.totalorder %s140, %s154
    %p156 = scmp.eq.s32.totalorder %s25, 0
    %p157 = por %p155, %p156
    %s159 = sadd.s32 %s158, 1
    %p162 = scmp.eq.s32.totalorder %s19, 1
    %p163 = scmp.ne.s32.totalorder %s158, %s160
    %p164 = scmp.eq.s32.totalorder %s19, 0
    %p165 = por %p163, %p164
    %p166 = scmp.ne.s32.totalorder %s158, %s160
    %p167 = scmp.eq.s32.totalorder %s24, 1
    %p168 = por %p166, %p167
    %p169 = scmp.ne.s32.totalorder %s160, %s161
    %p170 = scmp.eq.s32.totalorder %s24, 0
    %p171 = por %p169, %p170
    %p172 = scmp.ne.s32.totalorder %s160, %s161
    %p173 = scmp.eq.s32.totalorder %s25, 1
    %p174 = por %p172, %p173
    %p176 = scmp.ne.s32.totalorder %s161, %s175
    %p177 = scmp.eq.s32.totalorder %s25, 0
    %p178 = por %p176, %p177
    %s180 = sadd.s32 %s179, 1
    %p183 = scmp.eq.s32.totalorder %s19, 1
    %p184 = scmp.ne.s32.totalorder %s179, %s181
    %p185 = scmp.eq.s32.totalorder %s19, 0
    %p186 = por %p184, %p185
    %p187 = scmp.ne.s32.totalorder %s179, %s181
    %p188 = scmp.eq.s32.totalorder %s24, 1
    %p189 = por %p187, %p188
    %p190 = scmp.ne.s32.totalorder %s181, %s182
    %p191 = scmp.eq.s32.totalorder %s24, 0
    %p192 = por %p190, %p191
    %p193 = scmp.ne.s32.totalorder %s181, %s182
    %p194 = scmp.eq.s32.totalorder %s25, 1
    %p195 = por %p193, %p194
    %p197 = scmp.ne.s32.totalorder %s182, %s196
    %p198 = scmp.eq.s32.totalorder %s25, 0
    %p199 = por %p197, %p198
    %s201 = sadd.s32 %s200, 1
    %p204 = scmp.eq.s32.totalorder %s19, 1
    %p205 = scmp.ne.s32.totalorder %s200, %s202
    %p206 = scmp.eq.s32.totalorder %s19, 0
    %p207 = por %p205, %p206
    %p208 = scmp.ne.s32.totalorder %s200, %s202
    %p209 = scmp.eq.s32.totalorder %s24, 1
    %p210 = por %p208, %p209
    %p211 = scmp.ne.s32.totalorder %s202, %s203
    %p212 = scmp.eq.s32.totalorder %s24, 0
    %p213 = por %p211, %p212
    %p214 = scmp.ne.s32.totalorder %s202, %s203
    %p215 = scmp.eq.s32.totalorder %s25, 1
    %p216 = por %p214, %p215
    %p218 = scmp.ne.s32.totalorder %s203, %s217
    %p219 = scmp.eq.s32.totalorder %s25, 0
    %p220 = por %p218, %p219
    %s222 = sadd.s32 %s221, 1
    %p225 = scmp.eq.s32.totalorder %s19, 1
    %p226 = scmp.ne.s32.totalorder %s221, %s223
    %p227 = scmp.eq.s32.totalorder %s19, 0
    %p228 = por %p226, %p227
    %p229 = scmp.ne.s32.totalorder %s221, %s223
    %p230 = scmp.eq.s32.totalorder %s24, 1
    %p231 = por %p229, %p230
    %p232 = scmp.ne.s32.totalorder %s223, %s224
    %p233 = scmp.eq.s32.totalorder %s24, 0
    %p234 = por %p232, %p233
    %p235 = scmp.ne.s32.totalorder %s223, %s224
    %p236 = scmp.eq.s32.totalorder %s25, 1
    %p237 = por %p235, %p236
    %p239 = scmp.ne.s32.totalorder %s224, %s238
    %p240 = scmp.eq.s32.totalorder %s25, 0
    %p241 = por %p239, %p240
    %s243 = sadd.s32 %s242, 1
    %p246 = scmp.eq.s32.totalorder %s19, 1
    %p247 = scmp.ne.s32.totalorder %s242, %s244
    %p248 = scmp.eq.s32.totalorder %s19, 0
    %p249 = por %p247, %p248
    %p250 = scmp.ne.s32.totalorder %s242, %s244
    %p251 = scmp.eq.s32.totalorder %s24, 1
    %p252 = por %p250, %p251
    %p253 = scmp.ne.s32.totalorder %s244, %s245
    %p254 = scmp.eq.s32.totalorder %s24, 0
    %p255 = por %p253, %p254
    %p256 = scmp.ne.s32.totalorder %s244, %s245
    %p257 = scmp.eq.s32.totalorder %s25, 1
    %p258 = por %p256, %p257
    %p260 = scmp.ne.s32.totalorder %s245, %s259
    %p261 = scmp.eq.s32.totalorder %s25, 0
    %p262 = por %p260, %p261
    %s264 = sadd.s32 %s263, 1
    %p267 = scmp.eq.s32.totalorder %s19, 1
    %p268 = scmp.ne.s32.totalorder %s263, %s265
    %p269 = scmp.eq.s32.totalorder %s19, 0
    %p270 = por %p268, %p269
    %p271 = scmp.ne.s32.totalorder %s263, %s265
    %p272 = scmp.eq.s32.totalorder %s24, 1
    %p273 = por %p271, %p272
    %p274 = scmp.ne.s32.totalorder %s265, %s266
    %p275 = scmp.eq.s32.totalorder %s24, 0
    %p276 = por %p274, %p275
    %p277 = scmp.ne.s32.totalorder %s265, %s266
    %p278 = scmp.eq.s32.totalorder %s25, 1
    %p279 = por %p277, %p278
    %p281 = scmp.ne.s32.totalorder %s266, %s280
    %p282 = scmp.eq.s32.totalorder %s25, 0
    %p283 = por %p281, %p282
    %s285 = sadd.s32 %s284, 1
    %p288 = scmp.eq.s32.totalorder %s19, 1
    %p289 = scmp.ne.s32.totalorder %s284, %s286
    %p290 = scmp.eq.s32.totalorder %s19, 0
    %p291 = por %p289, %p290
    %p292 = scmp.ne.s32.totalorder %s284, %s286
    %p293 = scmp.eq.s32.totalorder %s24, 1
    %p294 = por %p292, %p293
    %p295 = scmp.ne.s32.totalorder %s286, %s287
    %p296 = scmp.eq.s32.totalorder %s24, 0
    %p297 = por %p295, %p296
    %p298 = scmp.ne.s32.totalorder %s286, %s287
    %p299 = scmp.eq.s32.totalorder %s25, 1
    %p300 = por %p298, %p299
    %p302 = scmp.ne.s32.totalorder %s287, %s301
    %p303 = scmp.eq.s32.totalorder %s25, 0
    %p304 = por %p302, %p303
    %s305 = ssub.s32 %s19, %s26
    %p306 = scmp.eq.s32.totalorder %s305, 0
    %s308 = sadd.s32 %s307, 1
    %s309 = scalar_select %p306, %s307, %s308
    %p312 = pneg %p306
    %p313 = scmp.eq.s32.totalorder %s19, 1
    %p314 = por %p312, %p313
    %p315 = scmp.ne.s32.totalorder %s307, %s310
    %p316 = scmp.eq.s32.totalorder %s19, 0
    %p317 = por %p315, %p316
    %p318 = scmp.ne.s32.totalorder %s307, %s310
    %p319 = scmp.eq.s32.totalorder %s24, 1
    %p320 = por %p318, %p319
    %p321 = scmp.ne.s32.totalorder %s310, %s311
    %p322 = scmp.eq.s32.totalorder %s24, 0
    %p323 = por %p321, %p322
    %p324 = scmp.ne.s32.totalorder %s310, %s311
    %p325 = scmp.eq.s32.totalorder %s25, 1
    %p326 = por %p324, %p325
    %p328 = scmp.ne.s32.totalorder %s311, %s327
    %p329 = scmp.eq.s32.totalorder %s25, 0
    %p330 = por %p328, %p329
    %p331 = scmp.le.s32.totalorder 1, %s19
    %p332 = scmp.lt.s32.totalorder %s19, 3
    %p333 = pnand %p331, %p332
    %p334 = pneg %p333
    // Predicated region
    $region9: #{body_gnn_forward.1} parent=5 // pred_check
      _
    $region10: #{body_gnn_forward.1} parent=5 // pred_check_branch
      %336 = sbr.rel (%p333) target = $region12
    $region11: #{body_gnn_forward.1} parent=5 // pred_region
      %s337 = ssub.s32 %s19, 1
      // Predicated region
      $region13: #{body_gnn_forward.1} parent=11 // pred_check
        %p338 = pneg %p66
      $region14: #{body_gnn_forward.1} parent=11 // pred_check_branch
        %340 = sbr.rel (%p338) target = $region16
      $region15: #{body_gnn_forward.1} parent=11 // pred_region
        _
      $region16: #{body_gnn_forward.1} parent=11 // pred_fallthru
        _
      // Predicated region
      $region17: #{body_gnn_forward.1} parent=11 // pred_check
        %p341 = pneg %p87
      $region18: #{body_gnn_forward.1} parent=11 // pred_check_branch
        %343 = sbr.rel (%p341) target = $region20
      $region19: #{body_gnn_forward.1} parent=11 // pred_region
        _
      $region20: #{body_gnn_forward.1} parent=11 // pred_fallthru
        _
      // Predicated region
      $region21: #{body_gnn_forward.1} parent=11 // pred_check
        %p344 = pneg %p108
      $region22: #{body_gnn_forward.1} parent=11 // pred_check_branch
        %346 = sbr.rel (%p344) target = $region24
      $region23: #{body_gnn_forward.1} parent=11 // pred_region
        _
      $region24: #{body_gnn_forward.1} parent=11 // pred_fallthru
        _
      // Predicated region
      $region25: #{body_gnn_forward.1} parent=11 // pred_check
        %p347 = pneg %p129
      $region26: #{body_gnn_forward.1} parent=11 // pred_check_branch
        %349 = sbr.rel (%p347) target = $region28
      $region27: #{body_gnn_forward.1} parent=11 // pred_region
        _
      $region28: #{body_gnn_forward.1} parent=11 // pred_fallthru
        _
      // Predicated region
      $region29: #{body_gnn_forward.1} parent=11 // pred_check
        %p350 = pneg %p150
      $region30: #{body_gnn_forward.1} parent=11 // pred_check_branch
        %352 = sbr.rel (%p350) target = $region32
      $region31: #{body_gnn_forward.1} parent=11 // pred_region
        _
      $region32: #{body_gnn_forward.1} parent=11 // pred_fallthru
        _
      // Predicated region
      $region33: #{body_gnn_forward.1} parent=11 // pred_check
        %p353 = pneg %p171
      $region34: #{body_gnn_forward.1} parent=11 // pred_check_branch
        %355 = sbr.rel (%p353) target = $region36
      $region35: #{body_gnn_forward.1} parent=11 // pred_region
        _
      $region36: #{body_gnn_forward.1} parent=11 // pred_fallthru
        _
      // Predicated region
      $region37: #{body_gnn_forward.1} parent=11 // pred_check
        %p356 = pneg %p192
      $region38: #{body_gnn_forward.1} parent=11 // pred_check_branch
        %358 = sbr.rel (%p356) target = $region40
      $region39: #{body_gnn_forward.1} parent=11 // pred_region
        _
      $region40: #{body_gnn_forward.1} parent=11 // pred_fallthru
        _
      // Predicated region
      $region41: #{body_gnn_forward.1} parent=11 // pred_check
        %p359 = pneg %p213
      $region42: #{body_gnn_forward.1} parent=11 // pred_check_branch
        %361 = sbr.rel (%p359) target = $region44
      $region43: #{body_gnn_forward.1} parent=11 // pred_region
        _
      $region44: #{body_gnn_forward.1} parent=11 // pred_fallthru
        _
      // Predicated region
      $region45: #{body_gnn_forward.1} parent=11 // pred_check
        %p362 = pneg %p234
      $region46: #{body_gnn_forward.1} parent=11 // pred_check_branch
        %364 = sbr.rel (%p362) target = $region48
      $region47: #{body_gnn_forward.1} parent=11 // pred_region
        _
      $region48: #{body_gnn_forward.1} parent=11 // pred_fallthru
        _
      // Predicated region
      $region49: #{body_gnn_forward.1} parent=11 // pred_check
        %p365 = pneg %p255
      $region50: #{body_gnn_forward.1} parent=11 // pred_check_branch
        %367 = sbr.rel (%p365) target = $region52
      $region51: #{body_gnn_forward.1} parent=11 // pred_region
        _
      $region52: #{body_gnn_forward.1} parent=11 // pred_fallthru
        _
      // Predicated region
      $region53: #{body_gnn_forward.1} parent=11 // pred_check
        %p368 = pneg %p276
      $region54: #{body_gnn_forward.1} parent=11 // pred_check_branch
        %370 = sbr.rel (%p368) target = $region56
      $region55: #{body_gnn_forward.1} parent=11 // pred_region
        _
      $region56: #{body_gnn_forward.1} parent=11 // pred_fallthru
        _
      // Predicated region
      $region57: #{body_gnn_forward.1} parent=11 // pred_check
        %p371 = pneg %p297
      $region58: #{body_gnn_forward.1} parent=11 // pred_check_branch
        %373 = sbr.rel (%p371) target = $region60
      $region59: #{body_gnn_forward.1} parent=11 // pred_region
        _
      $region60: #{body_gnn_forward.1} parent=11 // pred_fallthru
        _
    $region12: #{body_gnn_forward.1} parent=5 // pred_fallthru
      _
    %p374 = scmp.lt.s32.totalorder %s19, 2
    // Predicated region
    $region61: #{body_gnn_forward.1} parent=5 // pred_check
      %p375 = pneg %p374
    $region62: #{body_gnn_forward.1} parent=5 // pred_check_branch
      %377 = sbr.rel (%p375) target = $region64
    $region63: #{body_gnn_forward.1} parent=5 // pred_region
      // Predicated region
      $region65: #{body_gnn_forward.1} parent=63 // pred_check
        %p378 = pneg %p39
      $region66: #{body_gnn_forward.1} parent=63 // pred_check_branch
        %380 = sbr.rel (%p378) target = $region68
      $region67: #{body_gnn_forward.1} parent=63 // pred_region
        %p381 = scmp.lt.s32.totalorder %s19, 1
        %s382 = scalar_select %p381, %s19, 1
        %s383 = smul.addr %s382, 4
        %s384 = smul.addr %s383, 8
        %s385 = scalar_lea.vmem %s0, %s384
      $region68: #{body_gnn_forward.1} parent=63 // pred_fallthru
        _
    $region64: #{body_gnn_forward.1} parent=5 // pred_fallthru
      _
    %p386 = scmp.le.s32.totalorder 1, %s19
    %p387 = scmp.lt.s32.totalorder %s19, 3
    %p388 = pnand %p386, %p387
    %p389 = pneg %p388
    // Predicated region
    $region69: #{body_gnn_forward.1} parent=5 // pred_check
      _
    $region70: #{body_gnn_forward.1} parent=5 // pred_check_branch
      %391 = sbr.rel (%p388) target = $region72
    $region71: #{body_gnn_forward.1} parent=5 // pred_region
      %s392 = ssub.s32 %s19, 1
      %p393 = scmp.lt.s32.totalorder %s24, 1
      %s394 = scalar_select %p393, %s24, 1
      %s395 = smul.addr %s394, 4
      %s396 = smul.addr %s395, 8
      %s397 = scalar_lea.vmem %s0, %s396
      %p398 = pneg %p45
      %p399 = pneg %p42
      %p400 = pneg %p66
      %p401 = pneg %p63
      %p402 = pneg %p87
      %p403 = pneg %p84
      %p404 = pneg %p108
      %p405 = pneg %p105
      %p406 = pneg %p129
      %p407 = pneg %p126
      %p408 = pneg %p150
      %p409 = pneg %p147
      %p410 = pneg %p171
      %p411 = pneg %p168
      %p412 = pneg %p192
      %p413 = pneg %p189
      %p414 = pneg %p213
      %p415 = pneg %p210
      %p416 = pneg %p234
      %p417 = pneg %p231
      %p418 = pneg %p255
      %p419 = pneg %p252
      %p420 = pneg %p276
      %p421 = pneg %p273
      %p422 = pneg %p297
      %p423 = pneg %p294
      %p424 = pneg %p323
      %p425 = pneg %p320
      %p426 = scmp.lt.s32.totalorder %s24, 1
      %s427 = scalar_select %p426, %s24, 1
      %s428 = smul.addr %s427, 2
      %s429 = smul.addr %s428, 4
      %s430 = scalar_lea.vmem %s13, %s429
      %p431 = scmp.lt.s32.totalorder %s24, 1
      %s432 = scalar_select %p431, %s24, 1
      %s433 = smul.addr %s432, 4
      %s434 = smul.addr %s433, 8
      %s435 = scalar_lea.vmem %s0, %s434
      %p436 = scmp.lt.s32.totalorder %s24, 1
      %s437 = scalar_select %p436, %s24, 1
      %s438 = smul.addr %s437, 2
      %s439 = smul.addr %s438, 4
      %s440 = scalar_lea.vmem %s13, %s439
      %v441 = vld [vmem:[%s435] sm:$0xff]
      %v442 = vld [vmem:[%s435 + $0x8] sm:$0xff]
      %v443 = vld [vmem:[%s435 + $0x10] sm:$0xff]
      %v444 = vld [vmem:[%s435 + $0x18] sm:$0xff]
      %v445 = vld [vmem:[%s1] sm:$0xff]
      %v446 = vld [vmem:[%s1 + $0x8] sm:$0xff]
      %v447 = vld [vmem:[%s1 + $0x10] sm:$0xff]
      %v448 = vld [vmem:[%s1 + $0x18] sm:$0xff]
      %v449 = vld [vmem:[%s1 + $0x20] sm:$0xff]
      %v450 = vld [vmem:[%s1 + $0x28] sm:$0xff]
      %v451 = vld [vmem:[%s1 + $0x30] sm:$0xff]
      %v452 = vld [vmem:[%s1 + $0x38] sm:$0xff]
      %v453 = vld [vmem:[%s1 + $0x40] sm:$0xff]
      %v454 = vld [vmem:[%s1 + $0x48] sm:$0xff]
      %v455 = vld [vmem:[%s1 + $0x50] sm:$0xff]
      %v456 = vld [vmem:[%s1 + $0x58] sm:$0xff]
      %v457 = vld [vmem:[%s1 + $0x60] sm:$0xff]
      %v458 = vld [vmem:[%s1 + $0x68] sm:$0xff]
      %v459 = vld [vmem:[%s1 + $0x70] sm:$0xff]
      %v460 = vld [vmem:[%s1 + $0x78] sm:$0xff]
      %v463 = vcombine.low %v441, %v442
      %v464 = vcombine.high %v441, %v442
      %v466 = vunpack.c.l.s4 1966171168
      %v467 = vunpack.c.0.s8 %v466
      %v468 = vlaneseq
      %v469 = vshrl.u32 %v468, 7
      %v470 = vsub.s32 %v467, %v469
      %v471 = vrot.slane %v463, %v470
      %v473 = vunpack.c.l.s4 1966171168
      %v474 = vunpack.c.0.s8 %v473
      %v475 = vlaneseq
      %v476 = vshrl.u32 %v475, 7
      %v477 = vsub.s32 %v474, %v476
      %v478 = vrot.slane %v464, %v477
      %v479 = vcombine.high %v471, %v471
      %v480 = vcombine.high %v478, %v478
      %v482 = vunpack.c.l.s4 1966171168
      %v483 = vunpack.c.0.s8 %v482
      %v484 = vlaneseq
      %v485 = vshrl.u32 %v484, 7
      %v486 = vsub.s32 %v483, %v485
      %v487 = vrot.slane %v471, %v486
      %v489 = vunpack.c.l.s4 1966171168
      %v490 = vunpack.c.0.s8 %v489
      %v491 = vlaneseq
      %v492 = vshrl.u32 %v491, 7
      %v493 = vsub.s32 %v490, %v492
      %v494 = vrot.slane %v478, %v493
      %v496 = vunpack.c.l.s4 1966171168
      %v497 = vunpack.c.0.s8 %v496
      %v498 = vlaneseq
      %v499 = vshrl.u32 %v498, 7
      %v500 = vsub.s32 %v497, %v499
      %v501 = vrot.slane %v479, %v500
      %v503 = vunpack.c.l.s4 1966171168
      %v504 = vunpack.c.0.s8 %v503
      %v505 = vlaneseq
      %v506 = vshrl.u32 %v505, 7
      %v507 = vsub.s32 %v504, %v506
      %v508 = vrot.slane %v480, %v507
      %v509 = vcombine.high %v487, %v487
      %v510 = vcombine.high %v494, %v494
      %v511 = vcombine.high %v501, %v501
      %v512 = vcombine.high %v508, %v508
      %514 = vset.pattern.permute.xlu0 0
      %515 = vperm.xlu0 %514, %v445
      %v516 = vpop.permute.xlu0 %515
      %519 = vset.pattern.permute.xlu0 0
      %520 = vperm.xlu0 %519, %v446
      %v521 = vpop.permute.xlu0 %520
      %524 = vset.pattern.permute.xlu0 0
      %525 = vperm.xlu0 %524, %v447
      %v526 = vpop.permute.xlu0 %525
      %529 = vset.pattern.permute.xlu0 0
      %530 = vperm.xlu0 %529, %v448
      %v531 = vpop.permute.xlu0 %530
      %534 = vset.pattern.permute.xlu0 0
      %535 = vperm.xlu0 %534, %v449
      %v536 = vpop.permute.xlu0 %535
      %539 = vset.pattern.permute.xlu0 0
      %540 = vperm.xlu0 %539, %v450
      %v541 = vpop.permute.xlu0 %540
      %544 = vset.pattern.permute.xlu0 0
      %545 = vperm.xlu0 %544, %v451
      %v546 = vpop.permute.xlu0 %545
      %549 = vset.pattern.permute.xlu0 0
      %550 = vperm.xlu0 %549, %v452
      %v551 = vpop.permute.xlu0 %550
      %554 = vset.pattern.permute.xlu0 0
      %555 = vperm.xlu0 %554, %v453
      %v556 = vpop.permute.xlu0 %555
      %559 = vset.pattern.permute.xlu0 0
      %560 = vperm.xlu0 %559, %v454
      %v561 = vpop.permute.xlu0 %560
      %564 = vset.pattern.permute.xlu0 0
      %565 = vperm.xlu0 %564, %v455
      %v566 = vpop.permute.xlu0 %565
      %569 = vset.pattern.permute.xlu0 0
      %570 = vperm.xlu0 %569, %v456
      %v571 = vpop.permute.xlu0 %570
      %574 = vset.pattern.permute.xlu0 0
      %575 = vperm.xlu0 %574, %v457
      %v576 = vpop.permute.xlu0 %575
      %579 = vset.pattern.permute.xlu0 0
      %580 = vperm.xlu0 %579, %v458
      %v581 = vpop.permute.xlu0 %580
      %584 = vset.pattern.permute.xlu0 0
      %585 = vperm.xlu0 %584, %v459
      %v586 = vpop.permute.xlu0 %585
      %589 = vset.pattern.permute.xlu0 0
      %590 = vperm.xlu0 %589, %v460
      %v591 = vpop.permute.xlu0 %590
      %v593 = vlaneseq
      %v594 = vshrl.u32 %v593, 7
      %v595 = vsub.s32 0, %v594
      %v596 = vrot.slane %v487, %v595
      %v597 = vlaneseq
      %v598 = vshrl.u32 %v597, 7
      %v599 = vsub.s32 1, %v598
      %v600 = vrot.slane %v487, %v599
      %v601 = vlaneseq
      %v602 = vshrl.u32 %v601, 7
      %v603 = vsub.s32 0, %v602
      %v604 = vrot.slane %v501, %v603
      %v605 = vlaneseq
      %v606 = vshrl.u32 %v605, 7
      %v607 = vsub.s32 1, %v606
      %v608 = vrot.slane %v501, %v607
      %v609 = vlaneseq
      %v610 = vshrl.u32 %v609, 7
      %v611 = vsub.s32 0, %v610
      %v612 = vrot.slane %v509, %v611
      %v613 = vlaneseq
      %v614 = vshrl.u32 %v613, 7
      %v615 = vsub.s32 1, %v614
      %v616 = vrot.slane %v509, %v615
      %v617 = vlaneseq
      %v618 = vshrl.u32 %v617, 7
      %v619 = vsub.s32 0, %v618
      %v620 = vrot.slane %v511, %v619
      %v621 = vlaneseq
      %v622 = vshrl.u32 %v621, 7
      %v623 = vsub.s32 1, %v622
      %v624 = vrot.slane %v511, %v623
      %v625 = vlaneseq
      %v626 = vshrl.u32 %v625, 7
      %v627 = vsub.s32 0, %v626
      %v628 = vrot.slane %v494, %v627
      %v629 = vlaneseq
      %v630 = vshrl.u32 %v629, 7
      %v631 = vsub.s32 1, %v630
      %v632 = vrot.slane %v494, %v631
      %v633 = vlaneseq
      %v634 = vshrl.u32 %v633, 7
      %v635 = vsub.s32 0, %v634
      %v636 = vrot.slane %v508, %v635
      %v637 = vlaneseq
      %v638 = vshrl.u32 %v637, 7
      %v639 = vsub.s32 1, %v638
      %v640 = vrot.slane %v508, %v639
      %v641 = vlaneseq
      %v642 = vshrl.u32 %v641, 7
      %v643 = vsub.s32 0, %v642
      %v644 = vrot.slane %v510, %v643
      %v645 = vlaneseq
      %v646 = vshrl.u32 %v645, 7
      %v647 = vsub.s32 1, %v646
      %v648 = vrot.slane %v510, %v647
      %v649 = vlaneseq
      %v650 = vshrl.u32 %v649, 7
      %v651 = vsub.s32 0, %v650
      %v652 = vrot.slane %v512, %v651
      %v653 = vlaneseq
      %v654 = vshrl.u32 %v653, 7
      %v655 = vsub.s32 1, %v654
      %v656 = vrot.slane %v512, %v655
      %v673 = vmul.f32 %v516, %v596
      %v674 = vmul.f32 %v516, %v600
      %v675 = vmul.f32 %v521, %v596
      %v676 = vmul.f32 %v521, %v600
      %v677 = vmul.f32 %v526, %v604
      %v678 = vmul.f32 %v526, %v608
      %v679 = vmul.f32 %v531, %v604
      %v680 = vmul.f32 %v531, %v608
      %v681 = vmul.f32 %v536, %v612
      %v682 = vmul.f32 %v536, %v616
      %v683 = vmul.f32 %v541, %v612
      %v684 = vmul.f32 %v541, %v616
      %v685 = vmul.f32 %v546, %v620
      %v686 = vmul.f32 %v546, %v624
      %v687 = vmul.f32 %v551, %v620
      %v688 = vmul.f32 %v551, %v624
      %v689 = vmul.f32 %v556, %v628
      %v690 = vmul.f32 %v556, %v632
      %v691 = vmul.f32 %v561, %v628
      %v692 = vmul.f32 %v561, %v632
      %v693 = vmul.f32 %v566, %v636
      %v694 = vmul.f32 %v566, %v640
      %v695 = vmul.f32 %v571, %v636
      %v696 = vmul.f32 %v571, %v640
      %v697 = vmul.f32 %v576, %v644
      %v698 = vmul.f32 %v576, %v648
      %v699 = vmul.f32 %v581, %v644
      %v700 = vmul.f32 %v581, %v648
      %v701 = vmul.f32 %v586, %v652
      %v702 = vmul.f32 %v586, %v656
      %v703 = vmul.f32 %v591, %v652
      %v704 = vmul.f32 %v591, %v656
      %705 = vrot.lane.b32.xlu0 %v441, 127
      %v706 = vpop.permute.xlu0 %705
      %707 = vrot.lane.b32.xlu0 %v442, 127
      %v708 = vpop.permute.xlu0 %707
      %v709 = vlaneseq
      %v710 = vand.u32 %v709, 127
      %vm711 = vcmp.lt.s32.totalorder %v710, 127
      %v712 = vsel %vm711, %v706, %v708
      %v713 = vsel %vm711, %v708, %v706
      %s714 = scalar_lea.vmem %s1, 128
      %v715 = vld [vmem:[%s714] sm:$0xff]
      %v716 = vld [vmem:[%s714 + $0x8] sm:$0xff]
      %v717 = vld [vmem:[%s714 + $0x10] sm:$0xff]
      %v718 = vld [vmem:[%s714 + $0x18] sm:$0xff]
      %v719 = vld [vmem:[%s714 + $0x20] sm:$0xff]
      %v720 = vld [vmem:[%s714 + $0x28] sm:$0xff]
      %v721 = vld [vmem:[%s714 + $0x30] sm:$0xff]
      %v722 = vld [vmem:[%s714 + $0x38] sm:$0xff]
      %v723 = vld [vmem:[%s714 + $0x40] sm:$0xff]
      %v724 = vld [vmem:[%s714 + $0x48] sm:$0xff]
      %v725 = vld [vmem:[%s714 + $0x50] sm:$0xff]
      %v726 = vld [vmem:[%s714 + $0x58] sm:$0xff]
      %v727 = vld [vmem:[%s714 + $0x60] sm:$0xff]
      %v728 = vld [vmem:[%s714 + $0x68] sm:$0xff]
      %v729 = vld [vmem:[%s714 + $0x70] sm:$0xff]
      %v730 = vld [vmem:[%s714 + $0x78] sm:$0xff]
      %v733 = vcombine.low %v712, %v713
      %v734 = vcombine.high %v712, %v713
      %v736 = vunpack.c.l.s4 1966171168
      %v737 = vunpack.c.0.s8 %v736
      %v738 = vlaneseq
      %v739 = vshrl.u32 %v738, 7
      %v740 = vsub.s32 %v737, %v739
      %v741 = vrot.slane %v733, %v740
      %v743 = vunpack.c.l.s4 1966171168
      %v744 = vunpack.c.0.s8 %v743
      %v745 = vlaneseq
      %v746 = vshrl.u32 %v745, 7
      %v747 = vsub.s32 %v744, %v746
      %v748 = vrot.slane %v734, %v747
      %v749 = vcombine.high %v741, %v741
      %v750 = vcombine.high %v748, %v748
      %v752 = vunpack.c.l.s4 1966171168
      %v753 = vunpack.c.0.s8 %v752
      %v754 = vlaneseq
      %v755 = vshrl.u32 %v754, 7
      %v756 = vsub.s32 %v753, %v755
      %v757 = vrot.slane %v741, %v756
      %v759 = vunpack.c.l.s4 1966171168
      %v760 = vunpack.c.0.s8 %v759
      %v761 = vlaneseq
      %v762 = vshrl.u32 %v761, 7
      %v763 = vsub.s32 %v760, %v762
      %v764 = vrot.slane %v748, %v763
      %v766 = vunpack.c.l.s4 1966171168
      %v767 = vunpack.c.0.s8 %v766
      %v768 = vlaneseq
      %v769 = vshrl.u32 %v768, 7
      %v770 = vsub.s32 %v767, %v769
      %v771 = vrot.slane %v749, %v770
      %v773 = vunpack.c.l.s4 1966171168
      %v774 = vunpack.c.0.s8 %v773
      %v775 = vlaneseq
      %v776 = vshrl.u32 %v775, 7
      %v777 = vsub.s32 %v774, %v776
      %v778 = vrot.slane %v750, %v777
      %v779 = vcombine.high %v757, %v757
      %v780 = vcombine.high %v764, %v764
      %v781 = vcombine.high %v771, %v771
      %v782 = vcombine.high %v778, %v778
      %784 = vset.pattern.permute.xlu0 0
      %785 = vperm.xlu0 %784, %v715
      %v786 = vpop.permute.xlu0 %785
      %789 = vset.pattern.permute.xlu0 0
      %790 = vperm.xlu0 %789, %v716
      %v791 = vpop.permute.xlu0 %790
      %794 = vset.pattern.permute.xlu0 0
      %795 = vperm.xlu0 %794, %v717
      %v796 = vpop.permute.xlu0 %795
      %799 = vset.pattern.permute.xlu0 0
      %800 = vperm.xlu0 %799, %v718
      %v801 = vpop.permute.xlu0 %800
      %804 = vset.pattern.permute.xlu0 0
      %805 = vperm.xlu0 %804, %v719
      %v806 = vpop.permute.xlu0 %805
      %809 = vset.pattern.permute.xlu0 0
      %810 = vperm.xlu0 %809, %v720
      %v811 = vpop.permute.xlu0 %810
      %814 = vset.pattern.permute.xlu0 0
      %815 = vperm.xlu0 %814, %v721
      %v816 = vpop.permute.xlu0 %815
      %819 = vset.pattern.permute.xlu0 0
      %820 = vperm.xlu0 %819, %v722
      %v821 = vpop.permute.xlu0 %820
      %824 = vset.pattern.permute.xlu0 0
      %825 = vperm.xlu0 %824, %v723
      %v826 = vpop.permute.xlu0 %825
      %829 = vset.pattern.permute.xlu0 0
      %830 = vperm.xlu0 %829, %v724
      %v831 = vpop.permute.xlu0 %830
      %834 = vset.pattern.permute.xlu0 0
      %835 = vperm.xlu0 %834, %v725
      %v836 = vpop.permute.xlu0 %835
      %839 = vset.pattern.permute.xlu0 0
      %840 = vperm.xlu0 %839, %v726
      %v841 = vpop.permute.xlu0 %840
      %844 = vset.pattern.permute.xlu0 0
      %845 = vperm.xlu0 %844, %v727
      %v846 = vpop.permute.xlu0 %845
      %849 = vset.pattern.permute.xlu0 0
      %850 = vperm.xlu0 %849, %v728
      %v851 = vpop.permute.xlu0 %850
      %854 = vset.pattern.permute.xlu0 0
      %855 = vperm.xlu0 %854, %v729
      %v856 = vpop.permute.xlu0 %855
      %859 = vset.pattern.permute.xlu0 0
      %860 = vperm.xlu0 %859, %v730
      %v861 = vpop.permute.xlu0 %860
      %v863 = vlaneseq
      %v864 = vshrl.u32 %v863, 7
      %v865 = vsub.s32 0, %v864
      %v866 = vrot.slane %v757, %v865
      %v867 = vlaneseq
      %v868 = vshrl.u32 %v867, 7
      %v869 = vsub.s32 1, %v868
      %v870 = vrot.slane %v757, %v869
      %v871 = vlaneseq
      %v872 = vshrl.u32 %v871, 7
      %v873 = vsub.s32 0, %v872
      %v874 = vrot.slane %v771, %v873
      %v875 = vlaneseq
      %v876 = vshrl.u32 %v875, 7
      %v877 = vsub.s32 1, %v876
      %v878 = vrot.slane %v771, %v877
      %v879 = vlaneseq
      %v880 = vshrl.u32 %v879, 7
      %v881 = vsub.s32 0, %v880
      %v882 = vrot.slane %v779, %v881
      %v883 = vlaneseq
      %v884 = vshrl.u32 %v883, 7
      %v885 = vsub.s32 1, %v884
      %v886 = vrot.slane %v779, %v885
      %v887 = vlaneseq
      %v888 = vshrl.u32 %v887, 7
      %v889 = vsub.s32 0, %v888
      %v890 = vrot.slane %v781, %v889
      %v891 = vlaneseq
      %v892 = vshrl.u32 %v891, 7
      %v893 = vsub.s32 1, %v892
      %v894 = vrot.slane %v781, %v893
      %v895 = vlaneseq
      %v896 = vshrl.u32 %v895, 7
      %v897 = vsub.s32 0, %v896
      %v898 = vrot.slane %v764, %v897
      %v899 = vlaneseq
      %v900 = vshrl.u32 %v899, 7
      %v901 = vsub.s32 1, %v900
      %v902 = vrot.slane %v764, %v901
      %v903 = vlaneseq
      %v904 = vshrl.u32 %v903, 7
      %v905 = vsub.s32 0, %v904
      %v906 = vrot.slane %v778, %v905
      %v907 = vlaneseq
      %v908 = vshrl.u32 %v907, 7
      %v909 = vsub.s32 1, %v908
      %v910 = vrot.slane %v778, %v909
      %v911 = vlaneseq
      %v912 = vshrl.u32 %v911, 7
      %v913 = vsub.s32 0, %v912
      %v914 = vrot.slane %v780, %v913
      %v915 = vlaneseq
      %v916 = vshrl.u32 %v915, 7
      %v917 = vsub.s32 1, %v916
      %v918 = vrot.slane %v780, %v917
      %v919 = vlaneseq
      %v920 = vshrl.u32 %v919, 7
      %v921 = vsub.s32 0, %v920
      %v922 = vrot.slane %v782, %v921
      %v923 = vlaneseq
      %v924 = vshrl.u32 %v923, 7
      %v925 = vsub.s32 1, %v924
      %v926 = vrot.slane %v782, %v925
      %v943 = vmul.f32 %v786, %v866
      %v944 = vmul.f32 %v786, %v870
      %v945 = vmul.f32 %v791, %v866
      %v946 = vmul.f32 %v791, %v870
      %v947 = vmul.f32 %v796, %v874
      %v948 = vmul.f32 %v796, %v878
      %v949 = vmul.f32 %v801, %v874
      %v950 = vmul.f32 %v801, %v878
      %v951 = vmul.f32 %v806, %v882
      %v952 = vmul.f32 %v806, %v886
      %v953 = vmul.f32 %v811, %v882
      %v954 = vmul.f32 %v811, %v886
      %v955 = vmul.f32 %v816, %v890
      %v956 = vmul.f32 %v816, %v894
      %v957 = vmul.f32 %v821, %v890
      %v958 = vmul.f32 %v821, %v894
      %v959 = vmul.f32 %v826, %v898
      %v960 = vmul.f32 %v826, %v902
      %v961 = vmul.f32 %v831, %v898
      %v962 = vmul.f32 %v831, %v902
      %v963 = vmul.f32 %v836, %v906
      %v964 = vmul.f32 %v836, %v910
      %v965 = vmul.f32 %v841, %v906
      %v966 = vmul.f32 %v841, %v910
      %v967 = vmul.f32 %v846, %v914
      %v968 = vmul.f32 %v846, %v918
      %v969 = vmul.f32 %v851, %v914
      %v970 = vmul.f32 %v851, %v918
      %v971 = vmul.f32 %v856, %v922
      %v972 = vmul.f32 %v856, %v926
      %v973 = vmul.f32 %v861, %v922
      %v974 = vmul.f32 %v861, %v926
      %v975 = vadd.f32 %v673, %v943
      %v976 = vadd.f32 %v674, %v944
      %v977 = vadd.f32 %v675, %v945
      %v978 = vadd.f32 %v676, %v946
      %v979 = vadd.f32 %v677, %v947
      %v980 = vadd.f32 %v678, %v948
      %v981 = vadd.f32 %v679, %v949
      %v982 = vadd.f32 %v680, %v950
      %v983 = vadd.f32 %v681, %v951
      %v984 = vadd.f32 %v682, %v952
      %v985 = vadd.f32 %v683, %v953
      %v986 = vadd.f32 %v684, %v954
      %v987 = vadd.f32 %v685, %v955
      %v988 = vadd.f32 %v686, %v956
      %v989 = vadd.f32 %v687, %v957
      %v990 = vadd.f32 %v688, %v958
      %v991 = vadd.f32 %v689, %v959
      %v992 = vadd.f32 %v690, %v960
      %v993 = vadd.f32 %v691, %v961
      %v994 = vadd.f32 %v692, %v962
      %v995 = vadd.f32 %v693, %v963
      %v996 = vadd.f32 %v694, %v964
      %v997 = vadd.f32 %v695, %v965
      %v998 = vadd.f32 %v696, %v966
      %v999 = vadd.f32 %v697, %v967
      %v1000 = vadd.f32 %v698, %v968
      %v1001 = vadd.f32 %v699, %v969
      %v1002 = vadd.f32 %v700, %v970
      %v1003 = vadd.f32 %v701, %v971
      %v1004 = vadd.f32 %v702, %v972
      %v1005 = vadd.f32 %v703, %v973
      %v1006 = vadd.f32 %v704, %v974
      %1007 = vrot.lane.b32.xlu0 %v441, 126
      %v1008 = vpop.permute.xlu0 %1007
      %1009 = vrot.lane.b32.xlu0 %v442, 126
      %v1010 = vpop.permute.xlu0 %1009
      %vm1011 = vcmp.lt.s32.totalorder %v710, 126
      %v1012 = vsel %vm1011, %v1008, %v1010
      %v1013 = vsel %vm1011, %v1010, %v1008
      %s1014 = scalar_lea.vmem %s1, 256
      %v1015 = vld [vmem:[%s1014] sm:$0xff]
      %v1016 = vld [vmem:[%s1014 + $0x8] sm:$0xff]
      %v1017 = vld [vmem:[%s1014 + $0x10] sm:$0xff]
      %v1018 = vld [vmem:[%s1014 + $0x18] sm:$0xff]
      %v1019 = vld [vmem:[%s1014 + $0x20] sm:$0xff]
      %v1020 = vld [vmem:[%s1014 + $0x28] sm:$0xff]
      %v1021 = vld [vmem:[%s1014 + $0x30] sm:$0xff]
      %v1022 = vld [vmem:[%s1014 + $0x38] sm:$0xff]
      %v1023 = vld [vmem:[%s1014 + $0x40] sm:$0xff]
      %v1024 = vld [vmem:[%s1014 + $0x48] sm:$0xff]
      %v1025 = vld [vmem:[%s1014 + $0x50] sm:$0xff]
      %v1026 = vld [vmem:[%s1014 + $0x58] sm:$0xff]
      %v1027 = vld [vmem:[%s1014 + $0x60] sm:$0xff]
      %v1028 = vld [vmem:[%s1014 + $0x68] sm:$0xff]
      %v1029 = vld [vmem:[%s1014 + $0x70] sm:$0xff]
      %v1030 = vld [vmem:[%s1014 + $0x78] sm:$0xff]
      %v1033 = vcombine.low %v1012, %v1013
      %v1034 = vcombine.high %v1012, %v1013
      %v1036 = vunpack.c.l.s4 1966171168
      %v1037 = vunpack.c.0.s8 %v1036
      %v1038 = vlaneseq
      %v1039 = vshrl.u32 %v1038, 7
      %v1040 = vsub.s32 %v1037, %v1039
      %v1041 = vrot.slane %v1033, %v1040
      %v1043 = vunpack.c.l.s4 1966171168
      %v1044 = vunpack.c.0.s8 %v1043
      %v1045 = vlaneseq
      %v1046 = vshrl.u32 %v1045, 7
      %v1047 = vsub.s32 %v1044, %v1046
      %v1048 = vrot.slane %v1034, %v1047
      %v1049 = vcombine.high %v1041, %v1041
      %v1050 = vcombine.high %v1048, %v1048
      %v1052 = vunpack.c.l.s4 1966171168
      %v1053 = vunpack.c.0.s8 %v1052
      %v1054 = vlaneseq
      %v1055 = vshrl.u32 %v1054, 7
      %v1056 = vsub.s32 %v1053, %v1055
      %v1057 = vrot.slane %v1041, %v1056
      %v1059 = vunpack.c.l.s4 1966171168
      %v1060 = vunpack.c.0.s8 %v1059
      %v1061 = vlaneseq
      %v1062 = vshrl.u32 %v1061, 7
      %v1063 = vsub.s32 %v1060, %v1062
      %v1064 = vrot.slane %v1048, %v1063
      %v1066 = vunpack.c.l.s4 1966171168
      %v1067 = vunpack.c.0.s8 %v1066
      %v1068 = vlaneseq
      %v1069 = vshrl.u32 %v1068, 7
      %v1070 = vsub.s32 %v1067, %v1069
      %v1071 = vrot.slane %v1049, %v1070
      %v1073 = vunpack.c.l.s4 1966171168
      %v1074 = vunpack.c.0.s8 %v1073
      %v1075 = vlaneseq
      %v1076 = vshrl.u32 %v1075, 7
      %v1077 = vsub.s32 %v1074, %v1076
      %v1078 = vrot.slane %v1050, %v1077
      %v1079 = vcombine.high %v1057, %v1057
      %v1080 = vcombine.high %v1064, %v1064
      %v1081 = vcombine.high %v1071, %v1071
      %v1082 = vcombine.high %v1078, %v1078
      %1084 = vset.pattern.permute.xlu0 0
      %1085 = vperm.xlu0 %1084, %v1015
      %v1086 = vpop.permute.xlu0 %1085
      %1089 = vset.pattern.permute.xlu0 0
      %1090 = vperm.xlu0 %1089, %v1016
      %v1091 = vpop.permute.xlu0 %1090
      %1094 = vset.pattern.permute.xlu0 0
      %1095 = vperm.xlu0 %1094, %v1017
      %v1096 = vpop.permute.xlu0 %1095
      %1099 = vset.pattern.permute.xlu0 0
      %1100 = vperm.xlu0 %1099, %v1018
      %v1101 = vpop.permute.xlu0 %1100
      %1104 = vset.pattern.permute.xlu0 0
      %1105 = vperm.xlu0 %1104, %v1019
      %v1106 = vpop.permute.xlu0 %1105
      %1109 = vset.pattern.permute.xlu0 0
      %1110 = vperm.xlu0 %1109, %v1020
      %v1111 = vpop.permute.xlu0 %1110
      %1114 = vset.pattern.permute.xlu0 0
      %1115 = vperm.xlu0 %1114, %v1021
      %v1116 = vpop.permute.xlu0 %1115
      %1119 = vset.pattern.permute.xlu0 0
      %1120 = vperm.xlu0 %1119, %v1022
      %v1121 = vpop.permute.xlu0 %1120
      %1124 = vset.pattern.permute.xlu0 0
      %1125 = vperm.xlu0 %1124, %v1023
      %v1126 = vpop.permute.xlu0 %1125
      %1129 = vset.pattern.permute.xlu0 0
      %1130 = vperm.xlu0 %1129, %v1024
      %v1131 = vpop.permute.xlu0 %1130
      %1134 = vset.pattern.permute.xlu0 0
      %1135 = vperm.xlu0 %1134, %v1025
      %v1136 = vpop.permute.xlu0 %1135
      %1139 = vset.pattern.permute.xlu0 0
      %1140 = vperm.xlu0 %1139, %v1026
      %v1141 = vpop.permute.xlu0 %1140
      %1144 = vset.pattern.permute.xlu0 0
      %1145 = vperm.xlu0 %1144, %v1027
      %v1146 = vpop.permute.xlu0 %1145
      %1149 = vset.pattern.permute.xlu0 0
      %1150 = vperm.xlu0 %1149, %v1028
      %v1151 = vpop.permute.xlu0 %1150
      %1154 = vset.pattern.permute.xlu0 0
      %1155 = vperm.xlu0 %1154, %v1029
      %v1156 = vpop.permute.xlu0 %1155
      %1159 = vset.pattern.permute.xlu0 0
      %1160 = vperm.xlu0 %1159, %v1030
      %v1161 = vpop.permute.xlu0 %1160
      %v1163 = vlaneseq
      %v1164 = vshrl.u32 %v1163, 7
      %v1165 = vsub.s32 0, %v1164
      %v1166 = vrot.slane %v1057, %v1165
      %v1167 = vlaneseq
      %v1168 = vshrl.u32 %v1167, 7
      %v1169 = vsub.s32 1, %v1168
      %v1170 = vrot.slane %v1057, %v1169
      %v1171 = vlaneseq
      %v1172 = vshrl.u32 %v1171, 7
      %v1173 = vsub.s32 0, %v1172
      %v1174 = vrot.slane %v1071, %v1173
      %v1175 = vlaneseq
      %v1176 = vshrl.u32 %v1175, 7
      %v1177 = vsub.s32 1, %v1176
      %v1178 = vrot.slane %v1071, %v1177
      %v1179 = vlaneseq
      %v1180 = vshrl.u32 %v1179, 7
      %v1181 = vsub.s32 0, %v1180
      %v1182 = vrot.slane %v1079, %v1181
      %v1183 = vlaneseq
      %v1184 = vshrl.u32 %v1183, 7
      %v1185 = vsub.s32 1, %v1184
      %v1186 = vrot.slane %v1079, %v1185
      %v1187 = vlaneseq
      %v1188 = vshrl.u32 %v1187, 7
      %v1189 = vsub.s32 0, %v1188
      %v1190 = vrot.slane %v1081, %v1189
      %v1191 = vlaneseq
      %v1192 = vshrl.u32 %v1191, 7
      %v1193 = vsub.s32 1, %v1192
      %v1194 = vrot.slane %v1081, %v1193
      %v1195 = vlaneseq
      %v1196 = vshrl.u32 %v1195, 7
      %v1197 = vsub.s32 0, %v1196
      %v1198 = vrot.slane %v1064, %v1197
      %v1199 = vlaneseq
      %v1200 = vshrl.u32 %v1199, 7
      %v1201 = vsub.s32 1, %v1200
      %v1202 = vrot.slane %v1064, %v1201
      %v1203 = vlaneseq
      %v1204 = vshrl.u32 %v1203, 7
      %v1205 = vsub.s32 0, %v1204
      %v1206 = vrot.slane %v1078, %v1205
      %v1207 = vlaneseq
      %v1208 = vshrl.u32 %v1207, 7
      %v1209 = vsub.s32 1, %v1208
      %v1210 = vrot.slane %v1078, %v1209
      %v1211 = vlaneseq
      %v1212 = vshrl.u32 %v1211, 7
      %v1213 = vsub.s32 0, %v1212
      %v1214 = vrot.slane %v1080, %v1213
      %v1215 = vlaneseq
      %v1216 = vshrl.u32 %v1215, 7
      %v1217 = vsub.s32 1, %v1216
      %v1218 = vrot.slane %v1080, %v1217
      %v1219 = vlaneseq
      %v1220 = vshrl.u32 %v1219, 7
      %v1221 = vsub.s32 0, %v1220
      %v1222 = vrot.slane %v1082, %v1221
      %v1223 = vlaneseq
      %v1224 = vshrl.u32 %v1223, 7
      %v1225 = vsub.s32 1, %v1224
      %v1226 = vrot.slane %v1082, %v1225
      %v1243 = vmul.f32 %v1086, %v1166
      %v1244 = vmul.f32 %v1086, %v1170
      %v1245 = vmul.f32 %v1091, %v1166
      %v1246 = vmul.f32 %v1091, %v1170
      %v1247 = vmul.f32 %v1096, %v1174
      %v1248 = vmul.f32 %v1096, %v1178
      %v1249 = vmul.f32 %v1101, %v1174
      %v1250 = vmul.f32 %v1101, %v1178
      %v1251 = vmul.f32 %v1106, %v1182
      %v1252 = vmul.f32 %v1106, %v1186
      %v1253 = vmul.f32 %v1111, %v1182
      %v1254 = vmul.f32 %v1111, %v1186
      %v1255 = vmul.f32 %v1116, %v1190
      %v1256 = vmul.f32 %v1116, %v1194
      %v1257 = vmul.f32 %v1121, %v1190
      %v1258 = vmul.f32 %v1121, %v1194
      %v1259 = vmul.f32 %v1126, %v1198
      %v1260 = vmul.f32 %v1126, %v1202
      %v1261 = vmul.f32 %v1131, %v1198
      %v1262 = vmul.f32 %v1131, %v1202
      %v1263 = vmul.f32 %v1136, %v1206
      %v1264 = vmul.f32 %v1136, %v1210
      %v1265 = vmul.f32 %v1141, %v1206
      %v1266 = vmul.f32 %v1141, %v1210
      %v1267 = vmul.f32 %v1146, %v1214
      %v1268 = vmul.f32 %v1146, %v1218
      %v1269 = vmul.f32 %v1151, %v1214
      %v1270 = vmul.f32 %v1151, %v1218
      %v1271 = vmul.f32 %v1156, %v1222
      %v1272 = vmul.f32 %v1156, %v1226
      %v1273 = vmul.f32 %v1161, %v1222
      %v1274 = vmul.f32 %v1161, %v1226
      %v1275 = vadd.f32 %v975, %v1243
      %v1276 = vadd.f32 %v976, %v1244
      %v1277 = vadd.f32 %v977, %v1245
      %v1278 = vadd.f32 %v978, %v1246
      %v1279 = vadd.f32 %v979, %v1247
      %v1280 = vadd.f32 %v980, %v1248
      %v1281 = vadd.f32 %v981, %v1249
      %v1282 = vadd.f32 %v982, %v1250
      %v1283 = vadd.f32 %v983, %v1251
      %v1284 = vadd.f32 %v984, %v1252
      %v1285 = vadd.f32 %v985, %v1253
      %v1286 = vadd.f32 %v986, %v1254
      %v1287 = vadd.f32 %v987, %v1255
      %v1288 = vadd.f32 %v988, %v1256
      %v1289 = vadd.f32 %v989, %v1257
      %v1290 = vadd.f32 %v990, %v1258
      %v1291 = vadd.f32 %v991, %v1259
      %v1292 = vadd.f32 %v992, %v1260
      %v1293 = vadd.f32 %v993, %v1261
      %v1294 = vadd.f32 %v994, %v1262
      %v1295 = vadd.f32 %v995, %v1263
      %v1296 = vadd.f32 %v996, %v1264
      %v1297 = vadd.f32 %v997, %v1265
      %v1298 = vadd.f32 %v998, %v1266
      %v1299 = vadd.f32 %v999, %v1267
      %v1300 = vadd.f32 %v1000, %v1268
      %v1301 = vadd.f32 %v1001, %v1269
      %v1302 = vadd.f32 %v1002, %v1270
      %v1303 = vadd.f32 %v1003, %v1271
      %v1304 = vadd.f32 %v1004, %v1272
      %v1305 = vadd.f32 %v1005, %v1273
      %v1306 = vadd.f32 %v1006, %v1274
      %v1307 = vld [vmem:[%s2] sm:$0xff]
      %v1308 = vld [vmem:[%s2 + $0x8] sm:$0xff]
      %v1309 = vld [vmem:[%s2 + $0x10] sm:$0xff]
      %v1310 = vld [vmem:[%s2 + $0x18] sm:$0xff]
      %v1311 = vld [vmem:[%s2 + $0x20] sm:$0xff]
      %v1312 = vld [vmem:[%s2 + $0x28] sm:$0xff]
      %v1313 = vld [vmem:[%s2 + $0x30] sm:$0xff]
      %v1314 = vld [vmem:[%s2 + $0x38] sm:$0xff]
      %v1315 = vld [vmem:[%s2 + $0x40] sm:$0xff]
      %v1316 = vld [vmem:[%s2 + $0x48] sm:$0xff]
      %v1317 = vld [vmem:[%s2 + $0x50] sm:$0xff]
      %v1318 = vld [vmem:[%s2 + $0x58] sm:$0xff]
      %v1319 = vld [vmem:[%s2 + $0x60] sm:$0xff]
      %v1320 = vld [vmem:[%s2 + $0x68] sm:$0xff]
      %v1321 = vld [vmem:[%s2 + $0x70] sm:$0xff]
      %v1322 = vld [vmem:[%s2 + $0x78] sm:$0xff]
      %1324 = vset.pattern.permute.xlu0 0
      %1325 = vperm.xlu0 %1324, %v1307
      %v1326 = vpop.permute.xlu0 %1325
      %1329 = vset.pattern.permute.xlu0 0
      %1330 = vperm.xlu0 %1329, %v1308
      %v1331 = vpop.permute.xlu0 %1330
      %1334 = vset.pattern.permute.xlu0 0
      %1335 = vperm.xlu0 %1334, %v1309
      %v1336 = vpop.permute.xlu0 %1335
      %1339 = vset.pattern.permute.xlu0 0
      %1340 = vperm.xlu0 %1339, %v1310
      %v1341 = vpop.permute.xlu0 %1340
      %1344 = vset.pattern.permute.xlu0 0
      %1345 = vperm.xlu0 %1344, %v1311
      %v1346 = vpop.permute.xlu0 %1345
      %1349 = vset.pattern.permute.xlu0 0
      %1350 = vperm.xlu0 %1349, %v1312
      %v1351 = vpop.permute.xlu0 %1350
      %1354 = vset.pattern.permute.xlu0 0
      %1355 = vperm.xlu0 %1354, %v1313
      %v1356 = vpop.permute.xlu0 %1355
      %1359 = vset.pattern.permute.xlu0 0
      %1360 = vperm.xlu0 %1359, %v1314
      %v1361 = vpop.permute.xlu0 %1360
      %1364 = vset.pattern.permute.xlu0 0
      %1365 = vperm.xlu0 %1364, %v1315
      %v1366 = vpop.permute.xlu0 %1365
      %1369 = vset.pattern.permute.xlu0 0
      %1370 = vperm.xlu0 %1369, %v1316
      %v1371 = vpop.permute.xlu0 %1370
      %1374 = vset.pattern.permute.xlu0 0
      %1375 = vperm.xlu0 %1374, %v1317
      %v1376 = vpop.permute.xlu0 %1375
      %1379 = vset.pattern.permute.xlu0 0
      %1380 = vperm.xlu0 %1379, %v1318
      %v1381 = vpop.permute.xlu0 %1380
      %1384 = vset.pattern.permute.xlu0 0
      %1385 = vperm.xlu0 %1384, %v1319
      %v1386 = vpop.permute.xlu0 %1385
      %1389 = vset.pattern.permute.xlu0 0
      %1390 = vperm.xlu0 %1389, %v1320
      %v1391 = vpop.permute.xlu0 %1390
      %1394 = vset.pattern.permute.xlu0 0
      %1395 = vperm.xlu0 %1394, %v1321
      %v1396 = vpop.permute.xlu0 %1395
      %1399 = vset.pattern.permute.xlu0 0
      %1400 = vperm.xlu0 %1399, %v1322
      %v1401 = vpop.permute.xlu0 %1400
      %v1403 = vadd.f32 %v1275, %v1326
      %v1404 = vadd.f32 %v1276, %v1326
      %v1405 = vadd.f32 %v1277, %v1331
      %v1406 = vadd.f32 %v1278, %v1331
      %v1407 = vadd.f32 %v1279, %v1336
      %v1408 = vadd.f32 %v1280, %v1336
      %v1409 = vadd.f32 %v1281, %v1341
      %v1410 = vadd.f32 %v1282, %v1341
      %v1411 = vadd.f32 %v1283, %v1346
      %v1412 = vadd.f32 %v1284, %v1346
      %v1413 = vadd.f32 %v1285, %v1351
      %v1414 = vadd.f32 %v1286, %v1351
      %v1415 = vadd.f32 %v1287, %v1356
      %v1416 = vadd.f32 %v1288, %v1356
      %v1417 = vadd.f32 %v1289, %v1361
      %v1418 = vadd.f32 %v1290, %v1361
      %v1419 = vadd.f32 %v1291, %v1366
      %v1420 = vadd.f32 %v1292, %v1366
      %v1421 = vadd.f32 %v1293, %v1371
      %v1422 = vadd.f32 %v1294, %v1371
      %v1423 = vadd.f32 %v1295, %v1376
      %v1424 = vadd.f32 %v1296, %v1376
      %v1425 = vadd.f32 %v1297, %v1381
      %v1426 = vadd.f32 %v1298, %v1381
      %v1427 = vadd.f32 %v1299, %v1386
      %v1428 = vadd.f32 %v1300, %v1386
      %v1429 = vadd.f32 %v1301, %v1391
      %v1430 = vadd.f32 %v1302, %v1391
      %v1431 = vadd.f32 %v1303, %v1396
      %v1432 = vadd.f32 %v1304, %v1396
      %v1433 = vadd.f32 %v1305, %v1401
      %v1434 = vadd.f32 %v1306, %v1401
      %vm1435 = vcmp.gt.f32.partialorder %v1403, 0.0
      %vm1436 = vcmp.gt.f32.partialorder %v1404, 0.0
      %vm1437 = vcmp.gt.f32.partialorder %v1405, 0.0
      %vm1438 = vcmp.gt.f32.partialorder %v1406, 0.0
      %vm1439 = vcmp.gt.f32.partialorder %v1407, 0.0
      %vm1440 = vcmp.gt.f32.partialorder %v1408, 0.0
      %vm1441 = vcmp.gt.f32.partialorder %v1409, 0.0
      %vm1442 = vcmp.gt.f32.partialorder %v1410, 0.0
      %vm1443 = vcmp.gt.f32.partialorder %v1411, 0.0
      %vm1444 = vcmp.gt.f32.partialorder %v1412, 0.0
      %vm1445 = vcmp.gt.f32.partialorder %v1413, 0.0
      %vm1446 = vcmp.gt.f32.partialorder %v1414, 0.0
      %vm1447 = vcmp.gt.f32.partialorder %v1415, 0.0
      %vm1448 = vcmp.gt.f32.partialorder %v1416, 0.0
      %vm1449 = vcmp.gt.f32.partialorder %v1417, 0.0
      %vm1450 = vcmp.gt.f32.partialorder %v1418, 0.0
      %vm1451 = vcmp.gt.f32.partialorder %v1419, 0.0
      %vm1452 = vcmp.gt.f32.partialorder %v1420, 0.0
      %vm1453 = vcmp.gt.f32.partialorder %v1421, 0.0
      %vm1454 = vcmp.gt.f32.partialorder %v1422, 0.0
      %vm1455 = vcmp.gt.f32.partialorder %v1423, 0.0
      %vm1456 = vcmp.gt.f32.partialorder %v1424, 0.0
      %vm1457 = vcmp.gt.f32.partialorder %v1425, 0.0
      %vm1458 = vcmp.gt.f32.partialorder %v1426, 0.0
      %vm1459 = vcmp.gt.f32.partialorder %v1427, 0.0
      %vm1460 = vcmp.gt.f32.partialorder %v1428, 0.0
      %vm1461 = vcmp.gt.f32.partialorder %v1429, 0.0
      %vm1462 = vcmp.gt.f32.partialorder %v1430, 0.0
      %vm1463 = vcmp.gt.f32.partialorder %v1431, 0.0
      %vm1464 = vcmp.gt.f32.partialorder %v1432, 0.0
      %vm1465 = vcmp.gt.f32.partialorder %v1433, 0.0
      %vm1466 = vcmp.gt.f32.partialorder %v1434, 0.0
      %v1467 = vmul.f32 %v1403, 0.01
      %v1468 = vmul.f32 %v1404, 0.01
      %v1469 = vmul.f32 %v1405, 0.01
      %v1470 = vmul.f32 %v1406, 0.01
      %v1471 = vmul.f32 %v1407, 0.01
      %v1472 = vmul.f32 %v1408, 0.01
      %v1473 = vmul.f32 %v1409, 0.01
      %v1474 = vmul.f32 %v1410, 0.01
      %v1475 = vmul.f32 %v1411, 0.01
      %v1476 = vmul.f32 %v1412, 0.01
      %v1477 = vmul.f32 %v1413, 0.01
      %v1478 = vmul.f32 %v1414, 0.01
      %v1479 = vmul.f32 %v1415, 0.01
      %v1480 = vmul.f32 %v1416, 0.01
      %v1481 = vmul.f32 %v1417, 0.01
      %v1482 = vmul.f32 %v1418, 0.01
      %v1483 = vmul.f32 %v1419, 0.01
      %v1484 = vmul.f32 %v1420, 0.01
      %v1485 = vmul.f32 %v1421, 0.01
      %v1486 = vmul.f32 %v1422, 0.01
      %v1487 = vmul.f32 %v1423, 0.01
      %v1488 = vmul.f32 %v1424, 0.01
      %v1489 = vmul.f32 %v1425, 0.01
      %v1490 = vmul.f32 %v1426, 0.01
      %v1491 = vmul.f32 %v1427, 0.01
      %v1492 = vmul.f32 %v1428, 0.01
      %v1493 = vmul.f32 %v1429, 0.01
      %v1494 = vmul.f32 %v1430, 0.01
      %v1495 = vmul.f32 %v1431, 0.01
      %v1496 = vmul.f32 %v1432, 0.01
      %v1497 = vmul.f32 %v1433, 0.01
      %v1498 = vmul.f32 %v1434, 0.01
      %v1499 = vsel %vm1435, %v1403, %v1467
      %v1500 = vsel %vm1436, %v1404, %v1468
      %v1501 = vsel %vm1437, %v1405, %v1469
      %v1502 = vsel %vm1438, %v1406, %v1470
      %v1503 = vsel %vm1439, %v1407, %v1471
      %v1504 = vsel %vm1440, %v1408, %v1472
      %v1505 = vsel %vm1441, %v1409, %v1473
      %v1506 = vsel %vm1442, %v1410, %v1474
      %v1507 = vsel %vm1443, %v1411, %v1475
      %v1508 = vsel %vm1444, %v1412, %v1476
      %v1509 = vsel %vm1445, %v1413, %v1477
      %v1510 = vsel %vm1446, %v1414, %v1478
      %v1511 = vsel %vm1447, %v1415, %v1479
      %v1512 = vsel %vm1448, %v1416, %v1480
      %v1513 = vsel %vm1449, %v1417, %v1481
      %v1514 = vsel %vm1450, %v1418, %v1482
      %v1515 = vsel %vm1451, %v1419, %v1483
      %v1516 = vsel %vm1452, %v1420, %v1484
      %v1517 = vsel %vm1453, %v1421, %v1485
      %v1518 = vsel %vm1454, %v1422, %v1486
      %v1519 = vsel %vm1455, %v1423, %v1487
      %v1520 = vsel %vm1456, %v1424, %v1488
      %v1521 = vsel %vm1457, %v1425, %v1489
      %v1522 = vsel %vm1458, %v1426, %v1490
      %v1523 = vsel %vm1459, %v1427, %v1491
      %v1524 = vsel %vm1460, %v1428, %v1492
      %v1525 = vsel %vm1461, %v1429, %v1493
      %v1526 = vsel %vm1462, %v1430, %v1494
      %v1527 = vsel %vm1463, %v1431, %v1495
      %v1528 = vsel %vm1464, %v1432, %v1496
      %v1529 = vsel %vm1465, %v1433, %v1497
      %v1530 = vsel %vm1466, %v1434, %v1498
      %v1531 = vld [vmem:[%s3] sm:$0xff]
      %v1532 = vld [vmem:[%s3 + $0x8] sm:$0xff]
      %v1533 = vld [vmem:[%s3 + $0x10] sm:$0xff]
      %v1534 = vld [vmem:[%s3 + $0x18] sm:$0xff]
      %v1535 = vld [vmem:[%s3 + $0x20] sm:$0xff]
      %v1536 = vld [vmem:[%s3 + $0x28] sm:$0xff]
      %v1537 = vld [vmem:[%s3 + $0x30] sm:$0xff]
      %v1538 = vld [vmem:[%s3 + $0x38] sm:$0xff]
      %v1539 = vld [vmem:[%s3 + $0x40] sm:$0xff]
      %v1540 = vld [vmem:[%s3 + $0x48] sm:$0xff]
      %v1541 = vld [vmem:[%s3 + $0x50] sm:$0xff]
      %v1542 = vld [vmem:[%s3 + $0x58] sm:$0xff]
      %v1543 = vld [vmem:[%s3 + $0x60] sm:$0xff]
      %v1544 = vld [vmem:[%s3 + $0x68] sm:$0xff]
      %v1545 = vld [vmem:[%s3 + $0x70] sm:$0xff]
      %v1546 = vld [vmem:[%s3 + $0x78] sm:$0xff]
      %1548 = vset.pattern.permute.xlu0 0
      %1549 = vperm.xlu0 %1548, %v1531
      %v1550 = vpop.permute.xlu0 %1549
      %1553 = vset.pattern.permute.xlu0 0
      %1554 = vperm.xlu0 %1553, %v1532
      %v1555 = vpop.permute.xlu0 %1554
      %1558 = vset.pattern.permute.xlu0 0
      %1559 = vperm.xlu0 %1558, %v1533
      %v1560 = vpop.permute.xlu0 %1559
      %1563 = vset.pattern.permute.xlu0 0
      %1564 = vperm.xlu0 %1563, %v1534
      %v1565 = vpop.permute.xlu0 %1564
      %1568 = vset.pattern.permute.xlu0 0
      %1569 = vperm.xlu0 %1568, %v1535
      %v1570 = vpop.permute.xlu0 %1569
      %1573 = vset.pattern.permute.xlu0 0
      %1574 = vperm.xlu0 %1573, %v1536
      %v1575 = vpop.permute.xlu0 %1574
      %1578 = vset.pattern.permute.xlu0 0
      %1579 = vperm.xlu0 %1578, %v1537
      %v1580 = vpop.permute.xlu0 %1579
      %1583 = vset.pattern.permute.xlu0 0
      %1584 = vperm.xlu0 %1583, %v1538
      %v1585 = vpop.permute.xlu0 %1584
      %1588 = vset.pattern.permute.xlu0 0
      %1589 = vperm.xlu0 %1588, %v1539
      %v1590 = vpop.permute.xlu0 %1589
      %1593 = vset.pattern.permute.xlu0 0
      %1594 = vperm.xlu0 %1593, %v1540
      %v1595 = vpop.permute.xlu0 %1594
      %1598 = vset.pattern.permute.xlu0 0
      %1599 = vperm.xlu0 %1598, %v1541
      %v1600 = vpop.permute.xlu0 %1599
      %1603 = vset.pattern.permute.xlu0 0
      %1604 = vperm.xlu0 %1603, %v1542
      %v1605 = vpop.permute.xlu0 %1604
      %1608 = vset.pattern.permute.xlu0 0
      %1609 = vperm.xlu0 %1608, %v1543
      %v1610 = vpop.permute.xlu0 %1609
      %1613 = vset.pattern.permute.xlu0 0
      %1614 = vperm.xlu0 %1613, %v1544
      %v1615 = vpop.permute.xlu0 %1614
      %1618 = vset.pattern.permute.xlu0 0
      %1619 = vperm.xlu0 %1618, %v1545
      %v1620 = vpop.permute.xlu0 %1619
      %1623 = vset.pattern.permute.xlu0 0
      %1624 = vperm.xlu0 %1623, %v1546
      %v1625 = vpop.permute.xlu0 %1624
      %v1627 = vmul.f32 %v1550, %v1499
      %v1628 = vmul.f32 %v1550, %v1500
      %v1629 = vmul.f32 %v1555, %v1501
      %v1630 = vmul.f32 %v1555, %v1502
      %v1631 = vmul.f32 %v1560, %v1503
      %v1632 = vmul.f32 %v1560, %v1504
      %v1633 = vmul.f32 %v1565, %v1505
      %v1634 = vmul.f32 %v1565, %v1506
      %v1635 = vmul.f32 %v1570, %v1507
      %v1636 = vmul.f32 %v1570, %v1508
      %v1637 = vmul.f32 %v1575, %v1509
      %v1638 = vmul.f32 %v1575, %v1510
      %v1639 = vmul.f32 %v1580, %v1511
      %v1640 = vmul.f32 %v1580, %v1512
      %v1641 = vmul.f32 %v1585, %v1513
      %v1642 = vmul.f32 %v1585, %v1514
      %v1643 = vmul.f32 %v1590, %v1515
      %v1644 = vmul.f32 %v1590, %v1516
      %v1645 = vmul.f32 %v1595, %v1517
      %v1646 = vmul.f32 %v1595, %v1518
      %v1647 = vmul.f32 %v1600, %v1519
      %v1648 = vmul.f32 %v1600, %v1520
      %v1649 = vmul.f32 %v1605, %v1521
      %v1650 = vmul.f32 %v1605, %v1522
      %v1651 = vmul.f32 %v1610, %v1523
      %v1652 = vmul.f32 %v1610, %v1524
      %v1653 = vmul.f32 %v1615, %v1525
      %v1654 = vmul.f32 %v1615, %v1526
      %v1655 = vmul.f32 %v1620, %v1527
      %v1656 = vmul.f32 %v1620, %v1528
      %v1657 = vmul.f32 %v1625, %v1529
      %v1658 = vmul.f32 %v1625, %v1530
      %v1659 = vadd.f32 %v1627, %v1629
      %v1660 = vrot.slane %v1659, 4
      %v1661 = vadd.f32 %v1659, %v1660
      %v1662 = vrot.slane %v1661, 2
      %v1663 = vadd.f32 %v1661, %v1662
      %v1664 = vrot.slane %v1663, 1
      %v1665 = vadd.f32 %v1663, %v1664
      %v1666 = vadd.f32 %v1628, %v1630
      %v1667 = vrot.slane %v1666, 4
      %v1668 = vadd.f32 %v1666, %v1667
      %v1669 = vrot.slane %v1668, 2
      %v1670 = vadd.f32 %v1668, %v1669
      %v1671 = vrot.slane %v1670, 1
      %v1672 = vadd.f32 %v1670, %v1671
      %v1673 = vadd.f32 %v1631, %v1633
      %v1674 = vrot.slane %v1673, 4
      %v1675 = vadd.f32 %v1673, %v1674
      %v1676 = vrot.slane %v1675, 2
      %v1677 = vadd.f32 %v1675, %v1676
      %v1678 = vrot.slane %v1677, 1
      %v1679 = vadd.f32 %v1677, %v1678
      %v1680 = vadd.f32 %v1632, %v1634
      %v1681 = vrot.slane %v1680, 4
      %v1682 = vadd.f32 %v1680, %v1681
      %v1683 = vrot.slane %v1682, 2
      %v1684 = vadd.f32 %v1682, %v1683
      %v1685 = vrot.slane %v1684, 1
      %v1686 = vadd.f32 %v1684, %v1685
      %v1687 = vadd.f32 %v1635, %v1637
      %v1688 = vrot.slane %v1687, 4
      %v1689 = vadd.f32 %v1687, %v1688
      %v1690 = vrot.slane %v1689, 2
      %v1691 = vadd.f32 %v1689, %v1690
      %v1692 = vrot.slane %v1691, 1
      %v1693 = vadd.f32 %v1691, %v1692
      %v1694 = vadd.f32 %v1636, %v1638
      %v1695 = vrot.slane %v1694, 4
      %v1696 = vadd.f32 %v1694, %v1695
      %v1697 = vrot.slane %v1696, 2
      %v1698 = vadd.f32 %v1696, %v1697
      %v1699 = vrot.slane %v1698, 1
      %v1700 = vadd.f32 %v1698, %v1699
      %v1701 = vadd.f32 %v1639, %v1641
      %v1702 = vrot.slane %v1701, 4
      %v1703 = vadd.f32 %v1701, %v1702
      %v1704 = vrot.slane %v1703, 2
      %v1705 = vadd.f32 %v1703, %v1704
      %v1706 = vrot.slane %v1705, 1
      %v1707 = vadd.f32 %v1705, %v1706
      %v1708 = vadd.f32 %v1640, %v1642
      %v1709 = vrot.slane %v1708, 4
      %v1710 = vadd.f32 %v1708, %v1709
      %v1711 = vrot.slane %v1710, 2
      %v1712 = vadd.f32 %v1710, %v1711
      %v1713 = vrot.slane %v1712, 1
      %v1714 = vadd.f32 %v1712, %v1713
      %v1715 = vadd.f32 %v1643, %v1645
      %v1716 = vrot.slane %v1715, 4
      %v1717 = vadd.f32 %v1715, %v1716
      %v1718 = vrot.slane %v1717, 2
      %v1719 = vadd.f32 %v1717, %v1718
      %v1720 = vrot.slane %v1719, 1
      %v1721 = vadd.f32 %v1719, %v1720
      %v1722 = vadd.f32 %v1644, %v1646
      %v1723 = vrot.slane %v1722, 4
      %v1724 = vadd.f32 %v1722, %v1723
      %v1725 = vrot.slane %v1724, 2
      %v1726 = vadd.f32 %v1724, %v1725
      %v1727 = vrot.slane %v1726, 1
      %v1728 = vadd.f32 %v1726, %v1727
      %v1729 = vadd.f32 %v1647, %v1649
      %v1730 = vrot.slane %v1729, 4
      %v1731 = vadd.f32 %v1729, %v1730
      %v1732 = vrot.slane %v1731, 2
      %v1733 = vadd.f32 %v1731, %v1732
      %v1734 = vrot.slane %v1733, 1
      %v1735 = vadd.f32 %v1733, %v1734
      %v1736 = vadd.f32 %v1648, %v1650
      %v1737 = vrot.slane %v1736, 4
      %v1738 = vadd.f32 %v1736, %v1737
      %v1739 = vrot.slane %v1738, 2
      %v1740 = vadd.f32 %v1738, %v1739
      %v1741 = vrot.slane %v1740, 1
      %v1742 = vadd.f32 %v1740, %v1741
      %v1743 = vadd.f32 %v1651, %v1653
      %v1744 = vrot.slane %v1743, 4
      %v1745 = vadd.f32 %v1743, %v1744
      %v1746 = vrot.slane %v1745, 2
      %v1747 = vadd.f32 %v1745, %v1746
      %v1748 = vrot.slane %v1747, 1
      %v1749 = vadd.f32 %v1747, %v1748
      %v1750 = vadd.f32 %v1652, %v1654
      %v1751 = vrot.slane %v1750, 4
      %v1752 = vadd.f32 %v1750, %v1751
      %v1753 = vrot.slane %v1752, 2
      %v1754 = vadd.f32 %v1752, %v1753
      %v1755 = vrot.slane %v1754, 1
      %v1756 = vadd.f32 %v1754, %v1755
      %v1757 = vadd.f32 %v1655, %v1657
      %v1758 = vrot.slane %v1757, 4
      %v1759 = vadd.f32 %v1757, %v1758
      %v1760 = vrot.slane %v1759, 2
      %v1761 = vadd.f32 %v1759, %v1760
      %v1762 = vrot.slane %v1761, 1
      %v1763 = vadd.f32 %v1761, %v1762
      %v1764 = vadd.f32 %v1656, %v1658
      %v1765 = vrot.slane %v1764, 4
      %v1766 = vadd.f32 %v1764, %v1765
      %v1767 = vrot.slane %v1766, 2
      %v1768 = vadd.f32 %v1766, %v1767
      %v1769 = vrot.slane %v1768, 1
      %v1770 = vadd.f32 %v1768, %v1769
      %1771 = vrot.lane.b32.xlu0 %v1499, 127
      %v1772 = vpop.permute.xlu0 %1771
      %1773 = vrot.lane.b32.xlu0 %v1501, 127
      %v1774 = vpop.permute.xlu0 %1773
      %1775 = vrot.lane.b32.xlu0 %v1503, 127
      %v1776 = vpop.permute.xlu0 %1775
      %1777 = vrot.lane.b32.xlu0 %v1505, 127
      %v1778 = vpop.permute.xlu0 %1777
      %1779 = vrot.lane.b32.xlu0 %v1507, 127
      %v1780 = vpop.permute.xlu0 %1779
      %1781 = vrot.lane.b32.xlu0 %v1509, 127
      %v1782 = vpop.permute.xlu0 %1781
      %1783 = vrot.lane.b32.xlu0 %v1511, 127
      %v1784 = vpop.permute.xlu0 %1783
      %1785 = vrot.lane.b32.xlu0 %v1513, 127
      %v1786 = vpop.permute.xlu0 %1785
      %1787 = vrot.lane.b32.xlu0 %v1515, 127
      %v1788 = vpop.permute.xlu0 %1787
      %1789 = vrot.lane.b32.xlu0 %v1517, 127
      %v1790 = vpop.permute.xlu0 %1789
      %1791 = vrot.lane.b32.xlu0 %v1519, 127
      %v1792 = vpop.permute.xlu0 %1791
      %1793 = vrot.lane.b32.xlu0 %v1521, 127
      %v1794 = vpop.permute.xlu0 %1793
      %1795 = vrot.lane.b32.xlu0 %v1523, 127
      %v1796 = vpop.permute.xlu0 %1795
      %1797 = vrot.lane.b32.xlu0 %v1525, 127
      %v1798 = vpop.permute.xlu0 %1797
      %1799 = vrot.lane.b32.xlu0 %v1527, 127
      %v1800 = vpop.permute.xlu0 %1799
      %1801 = vrot.lane.b32.xlu0 %v1529, 127
      %v1802 = vpop.permute.xlu0 %1801
      %1803 = vrot.lane.b32.xlu0 %v1500, 127
      %v1804 = vpop.permute.xlu0 %1803
      %1805 = vrot.lane.b32.xlu0 %v1502, 127
      %v1806 = vpop.permute.xlu0 %1805
      %1807 = vrot.lane.b32.xlu0 %v1504, 127
      %v1808 = vpop.permute.xlu0 %1807
      %1809 = vrot.lane.b32.xlu0 %v1506, 127
      %v1810 = vpop.permute.xlu0 %1809
      %1811 = vrot.lane.b32.xlu0 %v1508, 127
      %v1812 = vpop.permute.xlu0 %1811
      %1813 = vrot.lane.b32.xlu0 %v1510, 127
      %v1814 = vpop.permute.xlu0 %1813
      %1815 = vrot.lane.b32.xlu0 %v1512, 127
      %v1816 = vpop.permute.xlu0 %1815
      %1817 = vrot.lane.b32.xlu0 %v1514, 127
      %v1818 = vpop.permute.xlu0 %1817
      %1819 = vrot.lane.b32.xlu0 %v1516, 127
      %v1820 = vpop.permute.xlu0 %1819
      %1821 = vrot.lane.b32.xlu0 %v1518, 127
      %v1822 = vpop.permute.xlu0 %1821
      %1823 = vrot.lane.b32.xlu0 %v1520, 127
      %v1824 = vpop.permute.xlu0 %1823
      %1825 = vrot.lane.b32.xlu0 %v1522, 127
      %v1826 = vpop.permute.xlu0 %1825
      %1827 = vrot.lane.b32.xlu0 %v1524, 127
      %v1828 = vpop.permute.xlu0 %1827
      %1829 = vrot.lane.b32.xlu0 %v1526, 127
      %v1830 = vpop.permute.xlu0 %1829
      %1831 = vrot.lane.b32.xlu0 %v1528, 127
      %v1832 = vpop.permute.xlu0 %1831
      %1833 = vrot.lane.b32.xlu0 %v1530, 127
      %v1834 = vpop.permute.xlu0 %1833
      %v1835 = vsel %vm711, %v1772, %v1804
      %v1836 = vsel %vm711, %v1774, %v1806
      %v1837 = vsel %vm711, %v1776, %v1808
      %v1838 = vsel %vm711, %v1778, %v1810
      %v1839 = vsel %vm711, %v1780, %v1812
      %v1840 = vsel %vm711, %v1782, %v1814
      %v1841 = vsel %vm711, %v1784, %v1816
      %v1842 = vsel %vm711, %v1786, %v1818
      %v1843 = vsel %vm711, %v1788, %v1820
      %v1844 = vsel %vm711, %v1790, %v1822
      %v1845 = vsel %vm711, %v1792, %v1824
      %v1846 = vsel %vm711, %v1794, %v1826
      %v1847 = vsel %vm711, %v1796, %v1828
      %v1848 = vsel %vm711, %v1798, %v1830
      %v1849 = vsel %vm711, %v1800, %v1832
      %v1850 = vsel %vm711, %v1802, %v1834
      %v1851 = vsel %vm711, %v1804, %v1772
      %v1852 = vsel %vm711, %v1806, %v1774
      %v1853 = vsel %vm711, %v1808, %v1776
      %v1854 = vsel %vm711, %v1810, %v1778
      %v1855 = vsel %vm711, %v1812, %v1780
      %v1856 = vsel %vm711, %v1814, %v1782
      %v1857 = vsel %vm711, %v1816, %v1784
      %v1858 = vsel %vm711, %v1818, %v1786
      %v1859 = vsel %vm711, %v1820, %v1788
      %v1860 = vsel %vm711, %v1822, %v1790
      %v1861 = vsel %vm711, %v1824, %v1792
      %v1862 = vsel %vm711, %v1826, %v1794
      %v1863 = vsel %vm711, %v1828, %v1796
      %v1864 = vsel %vm711, %v1830, %v1798
      %v1865 = vsel %vm711, %v1832, %v1800
      %v1866 = vsel %vm711, %v1834, %v1802
      %s1867 = scalar_lea.vmem %s3, 128
      %v1868 = vld [vmem:[%s1867] sm:$0xff]
      %v1869 = vld [vmem:[%s1867 + $0x8] sm:$0xff]
      %v1870 = vld [vmem:[%s1867 + $0x10] sm:$0xff]
      %v1871 = vld [vmem:[%s1867 + $0x18] sm:$0xff]
      %v1872 = vld [vmem:[%s1867 + $0x20] sm:$0xff]
      %v1873 = vld [vmem:[%s1867 + $0x28] sm:$0xff]
      %v1874 = vld [vmem:[%s1867 + $0x30] sm:$0xff]
      %v1875 = vld [vmem:[%s1867 + $0x38] sm:$0xff]
      %v1876 = vld [vmem:[%s1867 + $0x40] sm:$0xff]
      %v1877 = vld [vmem:[%s1867 + $0x48] sm:$0xff]
      %v1878 = vld [vmem:[%s1867 + $0x50] sm:$0xff]
      %v1879 = vld [vmem:[%s1867 + $0x58] sm:$0xff]
      %v1880 = vld [vmem:[%s1867 + $0x60] sm:$0xff]
      %v1881 = vld [vmem:[%s1867 + $0x68] sm:$0xff]
      %v1882 = vld [vmem:[%s1867 + $0x70] sm:$0xff]
      %v1883 = vld [vmem:[%s1867 + $0x78] sm:$0xff]
      %1885 = vset.pattern.permute.xlu0 0
      %1886 = vperm.xlu0 %1885, %v1868
      %v1887 = vpop.permute.xlu0 %1886
      %1890 = vset.pattern.permute.xlu0 0
      %1891 = vperm.xlu0 %1890, %v1869
      %v1892 = vpop.permute.xlu0 %1891
      %1895 = vset.pattern.permute.xlu0 0
      %1896 = vperm.xlu0 %1895, %v1870
      %v1897 = vpop.permute.xlu0 %1896
      %1900 = vset.pattern.permute.xlu0 0
      %1901 = vperm.xlu0 %1900, %v1871
      %v1902 = vpop.permute.xlu0 %1901
      %1905 = vset.pattern.permute.xlu0 0
      %1906 = vperm.xlu0 %1905, %v1872
      %v1907 = vpop.permute.xlu0 %1906
      %1910 = vset.pattern.permute.xlu0 0
      %1911 = vperm.xlu0 %1910, %v1873
      %v1912 = vpop.permute.xlu0 %1911
      %1915 = vset.pattern.permute.xlu0 0
      %1916 = vperm.xlu0 %1915, %v1874
      %v1917 = vpop.permute.xlu0 %1916
      %1920 = vset.pattern.permute.xlu0 0
      %1921 = vperm.xlu0 %1920, %v1875
      %v1922 = vpop.permute.xlu0 %1921
      %1925 = vset.pattern.permute.xlu0 0
      %1926 = vperm.xlu0 %1925, %v1876
      %v1927 = vpop.permute.xlu0 %1926
      %1930 = vset.pattern.permute.xlu0 0
      %1931 = vperm.xlu0 %1930, %v1877
      %v1932 = vpop.permute.xlu0 %1931
      %1935 = vset.pattern.permute.xlu0 0
      %1936 = vperm.xlu0 %1935, %v1878
      %v1937 = vpop.permute.xlu0 %1936
      %1940 = vset.pattern.permute.xlu0 0
      %1941 = vperm.xlu0 %1940, %v1879
      %v1942 = vpop.permute.xlu0 %1941
      %1945 = vset.pattern.permute.xlu0 0
      %1946 = vperm.xlu0 %1945, %v1880
      %v1947 = vpop.permute.xlu0 %1946
      %1950 = vset.pattern.permute.xlu0 0
      %1951 = vperm.xlu0 %1950, %v1881
      %v1952 = vpop.permute.xlu0 %1951
      %1955 = vset.pattern.permute.xlu0 0
      %1956 = vperm.xlu0 %1955, %v1882
      %v1957 = vpop.permute.xlu0 %1956
      %1960 = vset.pattern.permute.xlu0 0
      %1961 = vperm.xlu0 %1960, %v1883
      %v1962 = vpop.permute.xlu0 %1961
      %v1964 = vmul.f32 %v1887, %v1835
      %v1965 = vmul.f32 %v1887, %v1851
      %v1966 = vmul.f32 %v1892, %v1836
      %v1967 = vmul.f32 %v1892, %v1852
      %v1968 = vmul.f32 %v1897, %v1837
      %v1969 = vmul.f32 %v1897, %v1853
      %v1970 = vmul.f32 %v1902, %v1838
      %v1971 = vmul.f32 %v1902, %v1854
      %v1972 = vmul.f32 %v1907, %v1839
      %v1973 = vmul.f32 %v1907, %v1855
      %v1974 = vmul.f32 %v1912, %v1840
      %v1975 = vmul.f32 %v1912, %v1856
      %v1976 = vmul.f32 %v1917, %v1841
      %v1977 = vmul.f32 %v1917, %v1857
      %v1978 = vmul.f32 %v1922, %v1842
      %v1979 = vmul.f32 %v1922, %v1858
      %v1980 = vmul.f32 %v1927, %v1843
      %v1981 = vmul.f32 %v1927, %v1859
      %v1982 = vmul.f32 %v1932, %v1844
      %v1983 = vmul.f32 %v1932, %v1860
      %v1984 = vmul.f32 %v1937, %v1845
      %v1985 = vmul.f32 %v1937, %v1861
      %v1986 = vmul.f32 %v1942, %v1846
      %v1987 = vmul.f32 %v1942, %v1862
      %v1988 = vmul.f32 %v1947, %v1847
      %v1989 = vmul.f32 %v1947, %v1863
      %v1990 = vmul.f32 %v1952, %v1848
      %v1991 = vmul.f32 %v1952, %v1864
      %v1992 = vmul.f32 %v1957, %v1849
      %v1993 = vmul.f32 %v1957, %v1865
      %v1994 = vmul.f32 %v1962, %v1850
      %v1995 = vmul.f32 %v1962, %v1866
      %v1996 = vadd.f32 %v1964, %v1966
      %v1997 = vrot.slane %v1996, 4
      %v1998 = vadd.f32 %v1996, %v1997
      %v1999 = vrot.slane %v1998, 2
      %v2000 = vadd.f32 %v1998, %v1999
      %v2001 = vrot.slane %v2000, 1
      %v2002 = vadd.f32 %v2000, %v2001
      %v2003 = vadd.f32 %v1965, %v1967
      %v2004 = vrot.slane %v2003, 4
      %v2005 = vadd.f32 %v2003, %v2004
      %v2006 = vrot.slane %v2005, 2
      %v2007 = vadd.f32 %v2005, %v2006
      %v2008 = vrot.slane %v2007, 1
      %v2009 = vadd.f32 %v2007, %v2008
      %v2010 = vadd.f32 %v1968, %v1970
      %v2011 = vrot.slane %v2010, 4
      %v2012 = vadd.f32 %v2010, %v2011
      %v2013 = vrot.slane %v2012, 2
      %v2014 = vadd.f32 %v2012, %v2013
      %v2015 = vrot.slane %v2014, 1
      %v2016 = vadd.f32 %v2014, %v2015
      %v2017 = vadd.f32 %v1969, %v1971
      %v2018 = vrot.slane %v2017, 4
      %v2019 = vadd.f32 %v2017, %v2018
      %v2020 = vrot.slane %v2019, 2
      %v2021 = vadd.f32 %v2019, %v2020
      %v2022 = vrot.slane %v2021, 1
      %v2023 = vadd.f32 %v2021, %v2022
      %v2024 = vadd.f32 %v1972, %v1974
      %v2025 = vrot.slane %v2024, 4
      %v2026 = vadd.f32 %v2024, %v2025
      %v2027 = vrot.slane %v2026, 2
      %v2028 = vadd.f32 %v2026, %v2027
      %v2029 = vrot.slane %v2028, 1
      %v2030 = vadd.f32 %v2028, %v2029
      %v2031 = vadd.f32 %v1973, %v1975
      %v2032 = vrot.slane %v2031, 4
      %v2033 = vadd.f32 %v2031, %v2032
      %v2034 = vrot.slane %v2033, 2
      %v2035 = vadd.f32 %v2033, %v2034
      %v2036 = vrot.slane %v2035, 1
      %v2037 = vadd.f32 %v2035, %v2036
      %v2038 = vadd.f32 %v1976, %v1978
      %v2039 = vrot.slane %v2038, 4
      %v2040 = vadd.f32 %v2038, %v2039
      %v2041 = vrot.slane %v2040, 2
      %v2042 = vadd.f32 %v2040, %v2041
      %v2043 = vrot.slane %v2042, 1
      %v2044 = vadd.f32 %v2042, %v2043
      %v2045 = vadd.f32 %v1977, %v1979
      %v2046 = vrot.slane %v2045, 4
      %v2047 = vadd.f32 %v2045, %v2046
      %v2048 = vrot.slane %v2047, 2
      %v2049 = vadd.f32 %v2047, %v2048
      %v2050 = vrot.slane %v2049, 1
      %v2051 = vadd.f32 %v2049, %v2050
      %v2052 = vadd.f32 %v1980, %v1982
      %v2053 = vrot.slane %v2052, 4
      %v2054 = vadd.f32 %v2052, %v2053
      %v2055 = vrot.slane %v2054, 2
      %v2056 = vadd.f32 %v2054, %v2055
      %v2057 = vrot.slane %v2056, 1
      %v2058 = vadd.f32 %v2056, %v2057
      %v2059 = vadd.f32 %v1981, %v1983
      %v2060 = vrot.slane %v2059, 4
      %v2061 = vadd.f32 %v2059, %v2060
      %v2062 = vrot.slane %v2061, 2
      %v2063 = vadd.f32 %v2061, %v2062
      %v2064 = vrot.slane %v2063, 1
      %v2065 = vadd.f32 %v2063, %v2064
      %v2066 = vadd.f32 %v1984, %v1986
      %v2067 = vrot.slane %v2066, 4
      %v2068 = vadd.f32 %v2066, %v2067
      %v2069 = vrot.slane %v2068, 2
      %v2070 = vadd.f32 %v2068, %v2069
      %v2071 = vrot.slane %v2070, 1
      %v2072 = vadd.f32 %v2070, %v2071
      %v2073 = vadd.f32 %v1985, %v1987
      %v2074 = vrot.slane %v2073, 4
      %v2075 = vadd.f32 %v2073, %v2074
      %v2076 = vrot.slane %v2075, 2
      %v2077 = vadd.f32 %v2075, %v2076
      %v2078 = vrot.slane %v2077, 1
      %v2079 = vadd.f32 %v2077, %v2078
      %v2080 = vadd.f32 %v1988, %v1990
      %v2081 = vrot.slane %v2080, 4
      %v2082 = vadd.f32 %v2080, %v2081
      %v2083 = vrot.slane %v2082, 2
      %v2084 = vadd.f32 %v2082, %v2083
      %v2085 = vrot.slane %v2084, 1
      %v2086 = vadd.f32 %v2084, %v2085
      %v2087 = vadd.f32 %v1989, %v1991
      %v2088 = vrot.slane %v2087, 4
      %v2089 = vadd.f32 %v2087, %v2088
      %v2090 = vrot.slane %v2089, 2
      %v2091 = vadd.f32 %v2089, %v2090
      %v2092 = vrot.slane %v2091, 1
      %v2093 = vadd.f32 %v2091, %v2092
      %v2094 = vadd.f32 %v1992, %v1994
      %v2095 = vrot.slane %v2094, 4
      %v2096 = vadd.f32 %v2094, %v2095
      %v2097 = vrot.slane %v2096, 2
      %v2098 = vadd.f32 %v2096, %v2097
      %v2099 = vrot.slane %v2098, 1
      %v2100 = vadd.f32 %v2098, %v2099
      %v2101 = vadd.f32 %v1993, %v1995
      %v2102 = vrot.slane %v2101, 4
      %v2103 = vadd.f32 %v2101, %v2102
      %v2104 = vrot.slane %v2103, 2
      %v2105 = vadd.f32 %v2103, %v2104
      %v2106 = vrot.slane %v2105, 1
      %v2107 = vadd.f32 %v2105, %v2106
      %v2108 = vadd.f32 %v1665, %v2002
      %v2109 = vadd.f32 %v1672, %v2009
      %v2110 = vadd.f32 %v1679, %v2016
      %v2111 = vadd.f32 %v1686, %v2023
      %v2112 = vadd.f32 %v1693, %v2030
      %v2113 = vadd.f32 %v1700, %v2037
      %v2114 = vadd.f32 %v1707, %v2044
      %v2115 = vadd.f32 %v1714, %v2051
      %v2116 = vadd.f32 %v1721, %v2058
      %v2117 = vadd.f32 %v1728, %v2065
      %v2118 = vadd.f32 %v1735, %v2072
      %v2119 = vadd.f32 %v1742, %v2079
      %v2120 = vadd.f32 %v1749, %v2086
      %v2121 = vadd.f32 %v1756, %v2093
      %v2122 = vadd.f32 %v1763, %v2100
      %v2123 = vadd.f32 %v1770, %v2107
      %2124 = vrot.lane.b32.xlu0 %v1499, 126
      %v2125 = vpop.permute.xlu0 %2124
      %2126 = vrot.lane.b32.xlu0 %v1501, 126
      %v2127 = vpop.permute.xlu0 %2126
      %2128 = vrot.lane.b32.xlu0 %v1503, 126
      %v2129 = vpop.permute.xlu0 %2128
      %2130 = vrot.lane.b32.xlu0 %v1505, 126
      %v2131 = vpop.permute.xlu0 %2130
      %2132 = vrot.lane.b32.xlu0 %v1507, 126
      %v2133 = vpop.permute.xlu0 %2132
      %2134 = vrot.lane.b32.xlu0 %v1509, 126
      %v2135 = vpop.permute.xlu0 %2134
      %2136 = vrot.lane.b32.xlu0 %v1511, 126
      %v2137 = vpop.permute.xlu0 %2136
      %2138 = vrot.lane.b32.xlu0 %v1513, 126
      %v2139 = vpop.permute.xlu0 %2138
      %2140 = vrot.lane.b32.xlu0 %v1515, 126
      %v2141 = vpop.permute.xlu0 %2140
      %2142 = vrot.lane.b32.xlu0 %v1517, 126
      %v2143 = vpop.permute.xlu0 %2142
      %2144 = vrot.lane.b32.xlu0 %v1519, 126
      %v2145 = vpop.permute.xlu0 %2144
      %2146 = vrot.lane.b32.xlu0 %v1521, 126
      %v2147 = vpop.permute.xlu0 %2146
      %2148 = vrot.lane.b32.xlu0 %v1523, 126
      %v2149 = vpop.permute.xlu0 %2148
      %2150 = vrot.lane.b32.xlu0 %v1525, 126
      %v2151 = vpop.permute.xlu0 %2150
      %2152 = vrot.lane.b32.xlu0 %v1527, 126
      %v2153 = vpop.permute.xlu0 %2152
      %2154 = vrot.lane.b32.xlu0 %v1529, 126
      %v2155 = vpop.permute.xlu0 %2154
      %2156 = vrot.lane.b32.xlu0 %v1500, 126
      %v2157 = vpop.permute.xlu0 %2156
      %2158 = vrot.lane.b32.xlu0 %v1502, 126
      %v2159 = vpop.permute.xlu0 %2158
      %2160 = vrot.lane.b32.xlu0 %v1504, 126
      %v2161 = vpop.permute.xlu0 %2160
      %2162 = vrot.lane.b32.xlu0 %v1506, 126
      %v2163 = vpop.permute.xlu0 %2162
      %2164 = vrot.lane.b32.xlu0 %v1508, 126
      %v2165 = vpop.permute.xlu0 %2164
      %2166 = vrot.lane.b32.xlu0 %v1510, 126
      %v2167 = vpop.permute.xlu0 %2166
      %2168 = vrot.lane.b32.xlu0 %v1512, 126
      %v2169 = vpop.permute.xlu0 %2168
      %2170 = vrot.lane.b32.xlu0 %v1514, 126
      %v2171 = vpop.permute.xlu0 %2170
      %2172 = vrot.lane.b32.xlu0 %v1516, 126
      %v2173 = vpop.permute.xlu0 %2172
      %2174 = vrot.lane.b32.xlu0 %v1518, 126
      %v2175 = vpop.permute.xlu0 %2174
      %2176 = vrot.lane.b32.xlu0 %v1520, 126
      %v2177 = vpop.permute.xlu0 %2176
      %2178 = vrot.lane.b32.xlu0 %v1522, 126
      %v2179 = vpop.permute.xlu0 %2178
      %2180 = vrot.lane.b32.xlu0 %v1524, 126
      %v2181 = vpop.permute.xlu0 %2180
      %2182 = vrot.lane.b32.xlu0 %v1526, 126
      %v2183 = vpop.permute.xlu0 %2182
      %2184 = vrot.lane.b32.xlu0 %v1528, 126
      %v2185 = vpop.permute.xlu0 %2184
      %2186 = vrot.lane.b32.xlu0 %v1530, 126
      %v2187 = vpop.permute.xlu0 %2186
      %v2188 = vsel %vm1011, %v2125, %v2157
      %v2189 = vsel %vm1011, %v2127, %v2159
      %v2190 = vsel %vm1011, %v2129, %v2161
      %v2191 = vsel %vm1011, %v2131, %v2163
      %v2192 = vsel %vm1011, %v2133, %v2165
      %v2193 = vsel %vm1011, %v2135, %v2167
      %v2194 = vsel %vm1011, %v2137, %v2169
      %v2195 = vsel %vm1011, %v2139, %v2171
      %v2196 = vsel %vm1011, %v2141, %v2173
      %v2197 = vsel %vm1011, %v2143, %v2175
      %v2198 = vsel %vm1011, %v2145, %v2177
      %v2199 = vsel %vm1011, %v2147, %v2179
      %v2200 = vsel %vm1011, %v2149, %v2181
      %v2201 = vsel %vm1011, %v2151, %v2183
      %v2202 = vsel %vm1011, %v2153, %v2185
      %v2203 = vsel %vm1011, %v2155, %v2187
      %v2204 = vsel %vm1011, %v2157, %v2125
      %v2205 = vsel %vm1011, %v2159, %v2127
      %v2206 = vsel %vm1011, %v2161, %v2129
      %v2207 = vsel %vm1011, %v2163, %v2131
      %v2208 = vsel %vm1011, %v2165, %v2133
      %v2209 = vsel %vm1011, %v2167, %v2135
      %v2210 = vsel %vm1011, %v2169, %v2137
      %v2211 = vsel %vm1011, %v2171, %v2139
      %v2212 = vsel %vm1011, %v2173, %v2141
      %v2213 = vsel %vm1011, %v2175, %v2143
      %v2214 = vsel %vm1011, %v2177, %v2145
      %v2215 = vsel %vm1011, %v2179, %v2147
      %v2216 = vsel %vm1011, %v2181, %v2149
      %v2217 = vsel %vm1011, %v2183, %v2151
      %v2218 = vsel %vm1011, %v2185, %v2153
      %v2219 = vsel %vm1011, %v2187, %v2155
      %s2220 = scalar_lea.vmem %s3, 256
      %v2221 = vld [vmem:[%s2220] sm:$0xff]
      %v2222 = vld [vmem:[%s2220 + $0x8] sm:$0xff]
      %v2223 = vld [vmem:[%s2220 + $0x10] sm:$0xff]
      %v2224 = vld [vmem:[%s2220 + $0x18] sm:$0xff]
      %v2225 = vld [vmem:[%s2220 + $0x20] sm:$0xff]
      %v2226 = vld [vmem:[%s2220 + $0x28] sm:$0xff]
      %v2227 = vld [vmem:[%s2220 + $0x30] sm:$0xff]
      %v2228 = vld [vmem:[%s2220 + $0x38] sm:$0xff]
      %v2229 = vld [vmem:[%s2220 + $0x40] sm:$0xff]
      %v2230 = vld [vmem:[%s2220 + $0x48] sm:$0xff]
      %v2231 = vld [vmem:[%s2220 + $0x50] sm:$0xff]
      %v2232 = vld [vmem:[%s2220 + $0x58] sm:$0xff]
      %v2233 = vld [vmem:[%s2220 + $0x60] sm:$0xff]
      %v2234 = vld [vmem:[%s2220 + $0x68] sm:$0xff]
      %v2235 = vld [vmem:[%s2220 + $0x70] sm:$0xff]
      %v2236 = vld [vmem:[%s2220 + $0x78] sm:$0xff]
      %2238 = vset.pattern.permute.xlu0 0
      %2239 = vperm.xlu0 %2238, %v2221
      %v2240 = vpop.permute.xlu0 %2239
      %2243 = vset.pattern.permute.xlu0 0
      %2244 = vperm.xlu0 %2243, %v2222
      %v2245 = vpop.permute.xlu0 %2244
      %2248 = vset.pattern.permute.xlu0 0
      %2249 = vperm.xlu0 %2248, %v2223
      %v2250 = vpop.permute.xlu0 %2249
      %2253 = vset.pattern.permute.xlu0 0
      %2254 = vperm.xlu0 %2253, %v2224
      %v2255 = vpop.permute.xlu0 %2254
      %2258 = vset.pattern.permute.xlu0 0
      %2259 = vperm.xlu0 %2258, %v2225
      %v2260 = vpop.permute.xlu0 %2259
      %2263 = vset.pattern.permute.xlu0 0
      %2264 = vperm.xlu0 %2263, %v2226
      %v2265 = vpop.permute.xlu0 %2264
      %2268 = vset.pattern.permute.xlu0 0
      %2269 = vperm.xlu0 %2268, %v2227
      %v2270 = vpop.permute.xlu0 %2269
      %2273 = vset.pattern.permute.xlu0 0
      %2274 = vperm.xlu0 %2273, %v2228
      %v2275 = vpop.permute.xlu0 %2274
      %2278 = vset.pattern.permute.xlu0 0
      %2279 = vperm.xlu0 %2278, %v2229
      %v2280 = vpop.permute.xlu0 %2279
      %2283 = vset.pattern.permute.xlu0 0
      %2284 = vperm.xlu0 %2283, %v2230
      %v2285 = vpop.permute.xlu0 %2284
      %2288 = vset.pattern.permute.xlu0 0
      %2289 = vperm.xlu0 %2288, %v2231
      %v2290 = vpop.permute.xlu0 %2289
      %2293 = vset.pattern.permute.xlu0 0
      %2294 = vperm.xlu0 %2293, %v2232
      %v2295 = vpop.permute.xlu0 %2294
      %2298 = vset.pattern.permute.xlu0 0
      %2299 = vperm.xlu0 %2298, %v2233
      %v2300 = vpop.permute.xlu0 %2299
      %2303 = vset.pattern.permute.xlu0 0
      %2304 = vperm.xlu0 %2303, %v2234
      %v2305 = vpop.permute.xlu0 %2304
      %2308 = vset.pattern.permute.xlu0 0
      %2309 = vperm.xlu0 %2308, %v2235
      %v2310 = vpop.permute.xlu0 %2309
      %2313 = vset.pattern.permute.xlu0 0
      %2314 = vperm.xlu0 %2313, %v2236
      %v2315 = vpop.permute.xlu0 %2314
      %v2317 = vmul.f32 %v2240, %v2188
      %v2318 = vmul.f32 %v2240, %v2204
      %v2319 = vmul.f32 %v2245, %v2189
      %v2320 = vmul.f32 %v2245, %v2205
      %v2321 = vmul.f32 %v2250, %v2190
      %v2322 = vmul.f32 %v2250, %v2206
      %v2323 = vmul.f32 %v2255, %v2191
      %v2324 = vmul.f32 %v2255, %v2207
      %v2325 = vmul.f32 %v2260, %v2192
      %v2326 = vmul.f32 %v2260, %v2208
      %v2327 = vmul.f32 %v2265, %v2193
      %v2328 = vmul.f32 %v2265, %v2209
      %v2329 = vmul.f32 %v2270, %v2194
      %v2330 = vmul.f32 %v2270, %v2210
      %v2331 = vmul.f32 %v2275, %v2195
      %v2332 = vmul.f32 %v2275, %v2211
      %v2333 = vmul.f32 %v2280, %v2196
      %v2334 = vmul.f32 %v2280, %v2212
      %v2335 = vmul.f32 %v2285, %v2197
      %v2336 = vmul.f32 %v2285, %v2213
      %v2337 = vmul.f32 %v2290, %v2198
      %v2338 = vmul.f32 %v2290, %v2214
      %v2339 = vmul.f32 %v2295, %v2199
      %v2340 = vmul.f32 %v2295, %v2215
      %v2341 = vmul.f32 %v2300, %v2200
      %v2342 = vmul.f32 %v2300, %v2216
      %v2343 = vmul.f32 %v2305, %v2201
      %v2344 = vmul.f32 %v2305, %v2217
      %v2345 = vmul.f32 %v2310, %v2202
      %v2346 = vmul.f32 %v2310, %v2218
      %v2347 = vmul.f32 %v2315, %v2203
      %v2348 = vmul.f32 %v2315, %v2219
      %v2349 = vadd.f32 %v2317, %v2319
      %v2350 = vrot.slane %v2349, 4
      %v2351 = vadd.f32 %v2349, %v2350
      %v2352 = vrot.slane %v2351, 2
      %v2353 = vadd.f32 %v2351, %v2352
      %v2354 = vrot.slane %v2353, 1
      %v2355 = vadd.f32 %v2353, %v2354
      %v2356 = vadd.f32 %v2318, %v2320
      %v2357 = vrot.slane %v2356, 4
      %v2358 = vadd.f32 %v2356, %v2357
      %v2359 = vrot.slane %v2358, 2
      %v2360 = vadd.f32 %v2358, %v2359
      %v2361 = vrot.slane %v2360, 1
      %v2362 = vadd.f32 %v2360, %v2361
      %v2363 = vadd.f32 %v2321, %v2323
      %v2364 = vrot.slane %v2363, 4
      %v2365 = vadd.f32 %v2363, %v2364
      %v2366 = vrot.slane %v2365, 2
      %v2367 = vadd.f32 %v2365, %v2366
      %v2368 = vrot.slane %v2367, 1
      %v2369 = vadd.f32 %v2367, %v2368
      %v2370 = vadd.f32 %v2322, %v2324
      %v2371 = vrot.slane %v2370, 4
      %v2372 = vadd.f32 %v2370, %v2371
      %v2373 = vrot.slane %v2372, 2
      %v2374 = vadd.f32 %v2372, %v2373
      %v2375 = vrot.slane %v2374, 1
      %v2376 = vadd.f32 %v2374, %v2375
      %v2377 = vadd.f32 %v2325, %v2327
      %v2378 = vrot.slane %v2377, 4
      %v2379 = vadd.f32 %v2377, %v2378
      %v2380 = vrot.slane %v2379, 2
      %v2381 = vadd.f32 %v2379, %v2380
      %v2382 = vrot.slane %v2381, 1
      %v2383 = vadd.f32 %v2381, %v2382
      %v2384 = vadd.f32 %v2326, %v2328
      %v2385 = vrot.slane %v2384, 4
      %v2386 = vadd.f32 %v2384, %v2385
      %v2387 = vrot.slane %v2386, 2
      %v2388 = vadd.f32 %v2386, %v2387
      %v2389 = vrot.slane %v2388, 1
      %v2390 = vadd.f32 %v2388, %v2389
      %v2391 = vadd.f32 %v2329, %v2331
      %v2392 = vrot.slane %v2391, 4
      %v2393 = vadd.f32 %v2391, %v2392
      %v2394 = vrot.slane %v2393, 2
      %v2395 = vadd.f32 %v2393, %v2394
      %v2396 = vrot.slane %v2395, 1
      %v2397 = vadd.f32 %v2395, %v2396
      %v2398 = vadd.f32 %v2330, %v2332
      %v2399 = vrot.slane %v2398, 4
      %v2400 = vadd.f32 %v2398, %v2399
      %v2401 = vrot.slane %v2400, 2
      %v2402 = vadd.f32 %v2400, %v2401
      %v2403 = vrot.slane %v2402, 1
      %v2404 = vadd.f32 %v2402, %v2403
      %v2405 = vadd.f32 %v2333, %v2335
      %v2406 = vrot.slane %v2405, 4
      %v2407 = vadd.f32 %v2405, %v2406
      %v2408 = vrot.slane %v2407, 2
      %v2409 = vadd.f32 %v2407, %v2408
      %v2410 = vrot.slane %v2409, 1
      %v2411 = vadd.f32 %v2409, %v2410
      %v2412 = vadd.f32 %v2334, %v2336
      %v2413 = vrot.slane %v2412, 4
      %v2414 = vadd.f32 %v2412, %v2413
      %v2415 = vrot.slane %v2414, 2
      %v2416 = vadd.f32 %v2414, %v2415
      %v2417 = vrot.slane %v2416, 1
      %v2418 = vadd.f32 %v2416, %v2417
      %v2419 = vadd.f32 %v2337, %v2339
      %v2420 = vrot.slane %v2419, 4
      %v2421 = vadd.f32 %v2419, %v2420
      %v2422 = vrot.slane %v2421, 2
      %v2423 = vadd.f32 %v2421, %v2422
      %v2424 = vrot.slane %v2423, 1
      %v2425 = vadd.f32 %v2423, %v2424
      %v2426 = vadd.f32 %v2338, %v2340
      %v2427 = vrot.slane %v2426, 4
      %v2428 = vadd.f32 %v2426, %v2427
      %v2429 = vrot.slane %v2428, 2
      %v2430 = vadd.f32 %v2428, %v2429
      %v2431 = vrot.slane %v2430, 1
      %v2432 = vadd.f32 %v2430, %v2431
      %v2433 = vadd.f32 %v2341, %v2343
      %v2434 = vrot.slane %v2433, 4
      %v2435 = vadd.f32 %v2433, %v2434
      %v2436 = vrot.slane %v2435, 2
      %v2437 = vadd.f32 %v2435, %v2436
      %v2438 = vrot.slane %v2437, 1
      %v2439 = vadd.f32 %v2437, %v2438
      %v2440 = vadd.f32 %v2342, %v2344
      %v2441 = vrot.slane %v2440, 4
      %v2442 = vadd.f32 %v2440, %v2441
      %v2443 = vrot.slane %v2442, 2
      %v2444 = vadd.f32 %v2442, %v2443
      %v2445 = vrot.slane %v2444, 1
      %v2446 = vadd.f32 %v2444, %v2445
      %v2447 = vadd.f32 %v2345, %v2347
      %v2448 = vrot.slane %v2447, 4
      %v2449 = vadd.f32 %v2447, %v2448
      %v2450 = vrot.slane %v2449, 2
      %v2451 = vadd.f32 %v2449, %v2450
      %v2452 = vrot.slane %v2451, 1
      %v2453 = vadd.f32 %v2451, %v2452
      %v2454 = vadd.f32 %v2346, %v2348
      %v2455 = vrot.slane %v2454, 4
      %v2456 = vadd.f32 %v2454, %v2455
      %v2457 = vrot.slane %v2456, 2
      %v2458 = vadd.f32 %v2456, %v2457
      %v2459 = vrot.slane %v2458, 1
      %v2460 = vadd.f32 %v2458, %v2459
      %v2461 = vadd.f32 %v2108, %v2355
      %v2462 = vadd.f32 %v2109, %v2362
      %v2463 = vadd.f32 %v2110, %v2369
      %v2464 = vadd.f32 %v2111, %v2376
      %v2465 = vadd.f32 %v2112, %v2383
      %v2466 = vadd.f32 %v2113, %v2390
      %v2467 = vadd.f32 %v2114, %v2397
      %v2468 = vadd.f32 %v2115, %v2404
      %v2469 = vadd.f32 %v2116, %v2411
      %v2470 = vadd.f32 %v2117, %v2418
      %v2471 = vadd.f32 %v2118, %v2425
      %v2472 = vadd.f32 %v2119, %v2432
      %v2473 = vadd.f32 %v2120, %v2439
      %v2474 = vadd.f32 %v2121, %v2446
      %v2475 = vadd.f32 %v2122, %v2453
      %v2476 = vadd.f32 %v2123, %v2460
      %v2477 = vld [vmem:[%s4] sm:$0xff]
      %2479 = vset.pattern.permute.xlu0 0
      %2480 = vperm.xlu0 %2479, %v2477
      %v2481 = vpop.permute.xlu0 %2480
      %v2482 = vrot.slane %v2481, 1
      %v2483 = vrot.slane %v2481, 2
      %v2484 = vrot.slane %v2481, 3
      %v2485 = vrot.slane %v2481, 4
      %v2486 = vrot.slane %v2481, 5
      %v2487 = vrot.slane %v2481, 6
      %v2488 = vrot.slane %v2481, 7
      %v2497 = vadd.f32 %v2461, %v2481
      %v2498 = vadd.f32 %v2462, %v2481
      %v2499 = vadd.f32 %v2463, %v2482
      %v2500 = vadd.f32 %v2464, %v2482
      %v2501 = vadd.f32 %v2465, %v2483
      %v2502 = vadd.f32 %v2466, %v2483
      %v2503 = vadd.f32 %v2467, %v2484
      %v2504 = vadd.f32 %v2468, %v2484
      %v2505 = vadd.f32 %v2469, %v2485
      %v2506 = vadd.f32 %v2470, %v2485
      %v2507 = vadd.f32 %v2471, %v2486
      %v2508 = vadd.f32 %v2472, %v2486
      %v2509 = vadd.f32 %v2473, %v2487
      %v2510 = vadd.f32 %v2474, %v2487
      %v2511 = vadd.f32 %v2475, %v2488
      %v2512 = vadd.f32 %v2476, %v2488
      %vm2513 = vcmp.gt.f32.partialorder %v2497, 0.0
      %vm2514 = vcmp.gt.f32.partialorder %v2498, 0.0
      %vm2515 = vcmp.gt.f32.partialorder %v2499, 0.0
      %vm2516 = vcmp.gt.f32.partialorder %v2500, 0.0
      %vm2517 = vcmp.gt.f32.partialorder %v2501, 0.0
      %vm2518 = vcmp.gt.f32.partialorder %v2502, 0.0
      %vm2519 = vcmp.gt.f32.partialorder %v2503, 0.0
      %vm2520 = vcmp.gt.f32.partialorder %v2504, 0.0
      %vm2521 = vcmp.gt.f32.partialorder %v2505, 0.0
      %vm2522 = vcmp.gt.f32.partialorder %v2506, 0.0
      %vm2523 = vcmp.gt.f32.partialorder %v2507, 0.0
      %vm2524 = vcmp.gt.f32.partialorder %v2508, 0.0
      %vm2525 = vcmp.gt.f32.partialorder %v2509, 0.0
      %vm2526 = vcmp.gt.f32.partialorder %v2510, 0.0
      %vm2527 = vcmp.gt.f32.partialorder %v2511, 0.0
      %vm2528 = vcmp.gt.f32.partialorder %v2512, 0.0
      %v2529 = vmul.f32 %v2497, 0.01
      %v2530 = vmul.f32 %v2498, 0.01
      %v2531 = vmul.f32 %v2499, 0.01
      %v2532 = vmul.f32 %v2500, 0.01
      %v2533 = vmul.f32 %v2501, 0.01
      %v2534 = vmul.f32 %v2502, 0.01
      %v2535 = vmul.f32 %v2503, 0.01
      %v2536 = vmul.f32 %v2504, 0.01
      %v2537 = vmul.f32 %v2505, 0.01
      %v2538 = vmul.f32 %v2506, 0.01
      %v2539 = vmul.f32 %v2507, 0.01
      %v2540 = vmul.f32 %v2508, 0.01
      %v2541 = vmul.f32 %v2509, 0.01
      %v2542 = vmul.f32 %v2510, 0.01
      %v2543 = vmul.f32 %v2511, 0.01
      %v2544 = vmul.f32 %v2512, 0.01
      %v2545 = vsel %vm2513, %v2497, %v2529
      %v2546 = vsel %vm2514, %v2498, %v2530
      %v2547 = vsel %vm2515, %v2499, %v2531
      %v2548 = vsel %vm2516, %v2500, %v2532
      %v2549 = vsel %vm2517, %v2501, %v2533
      %v2550 = vsel %vm2518, %v2502, %v2534
      %v2551 = vsel %vm2519, %v2503, %v2535
      %v2552 = vsel %vm2520, %v2504, %v2536
      %v2553 = vsel %vm2521, %v2505, %v2537
      %v2554 = vsel %vm2522, %v2506, %v2538
      %v2555 = vsel %vm2523, %v2507, %v2539
      %v2556 = vsel %vm2524, %v2508, %v2540
      %v2557 = vsel %vm2525, %v2509, %v2541
      %v2558 = vsel %vm2526, %v2510, %v2542
      %v2559 = vsel %vm2527, %v2511, %v2543
      %v2560 = vsel %vm2528, %v2512, %v2544
      %v2563 = vcombine.low %v443, %v444
      %v2564 = vcombine.high %v443, %v444
      %v2566 = vunpack.c.l.s4 1966171168
      %v2567 = vunpack.c.0.s8 %v2566
      %v2568 = vlaneseq
      %v2569 = vshrl.u32 %v2568, 7
      %v2570 = vsub.s32 %v2567, %v2569
      %v2571 = vrot.slane %v2563, %v2570
      %v2573 = vunpack.c.l.s4 1966171168
      %v2574 = vunpack.c.0.s8 %v2573
      %v2575 = vlaneseq
      %v2576 = vshrl.u32 %v2575, 7
      %v2577 = vsub.s32 %v2574, %v2576
      %v2578 = vrot.slane %v2564, %v2577
      %v2579 = vcombine.high %v2571, %v2571
      %v2580 = vcombine.high %v2578, %v2578
      %v2582 = vunpack.c.l.s4 1966171168
      %v2583 = vunpack.c.0.s8 %v2582
      %v2584 = vlaneseq
      %v2585 = vshrl.u32 %v2584, 7
      %v2586 = vsub.s32 %v2583, %v2585
      %v2587 = vrot.slane %v2571, %v2586
      %v2589 = vunpack.c.l.s4 1966171168
      %v2590 = vunpack.c.0.s8 %v2589
      %v2591 = vlaneseq
      %v2592 = vshrl.u32 %v2591, 7
      %v2593 = vsub.s32 %v2590, %v2592
      %v2594 = vrot.slane %v2578, %v2593
      %v2596 = vunpack.c.l.s4 1966171168
      %v2597 = vunpack.c.0.s8 %v2596
      %v2598 = vlaneseq
      %v2599 = vshrl.u32 %v2598, 7
      %v2600 = vsub.s32 %v2597, %v2599
      %v2601 = vrot.slane %v2579, %v2600
      %v2603 = vunpack.c.l.s4 1966171168
      %v2604 = vunpack.c.0.s8 %v2603
      %v2605 = vlaneseq
      %v2606 = vshrl.u32 %v2605, 7
      %v2607 = vsub.s32 %v2604, %v2606
      %v2608 = vrot.slane %v2580, %v2607
      %v2609 = vcombine.high %v2587, %v2587
      %v2610 = vcombine.high %v2594, %v2594
      %v2611 = vcombine.high %v2601, %v2601
      %v2612 = vcombine.high %v2608, %v2608
      %v2613 = vlaneseq
      %v2614 = vshrl.u32 %v2613, 7
      %v2615 = vsub.s32 0, %v2614
      %v2616 = vrot.slane %v2587, %v2615
      %v2617 = vlaneseq
      %v2618 = vshrl.u32 %v2617, 7
      %v2619 = vsub.s32 1, %v2618
      %v2620 = vrot.slane %v2587, %v2619
      %v2621 = vlaneseq
      %v2622 = vshrl.u32 %v2621, 7
      %v2623 = vsub.s32 0, %v2622
      %v2624 = vrot.slane %v2601, %v2623
      %v2625 = vlaneseq
      %v2626 = vshrl.u32 %v2625, 7
      %v2627 = vsub.s32 1, %v2626
      %v2628 = vrot.slane %v2601, %v2627
      %v2629 = vlaneseq
      %v2630 = vshrl.u32 %v2629, 7
      %v2631 = vsub.s32 0, %v2630
      %v2632 = vrot.slane %v2609, %v2631
      %v2633 = vlaneseq
      %v2634 = vshrl.u32 %v2633, 7
      %v2635 = vsub.s32 1, %v2634
      %v2636 = vrot.slane %v2609, %v2635
      %v2637 = vlaneseq
      %v2638 = vshrl.u32 %v2637, 7
      %v2639 = vsub.s32 0, %v2638
      %v2640 = vrot.slane %v2611, %v2639
      %v2641 = vlaneseq
      %v2642 = vshrl.u32 %v2641, 7
      %v2643 = vsub.s32 1, %v2642
      %v2644 = vrot.slane %v2611, %v2643
      %v2645 = vlaneseq
      %v2646 = vshrl.u32 %v2645, 7
      %v2647 = vsub.s32 0, %v2646
      %v2648 = vrot.slane %v2594, %v2647
      %v2649 = vlaneseq
      %v2650 = vshrl.u32 %v2649, 7
      %v2651 = vsub.s32 1, %v2650
      %v2652 = vrot.slane %v2594, %v2651
      %v2653 = vlaneseq
      %v2654 = vshrl.u32 %v2653, 7
      %v2655 = vsub.s32 0, %v2654
      %v2656 = vrot.slane %v2608, %v2655
      %v2657 = vlaneseq
      %v2658 = vshrl.u32 %v2657, 7
      %v2659 = vsub.s32 1, %v2658
      %v2660 = vrot.slane %v2608, %v2659
      %v2661 = vlaneseq
      %v2662 = vshrl.u32 %v2661, 7
      %v2663 = vsub.s32 0, %v2662
      %v2664 = vrot.slane %v2610, %v2663
      %v2665 = vlaneseq
      %v2666 = vshrl.u32 %v2665, 7
      %v2667 = vsub.s32 1, %v2666
      %v2668 = vrot.slane %v2610, %v2667
      %v2669 = vlaneseq
      %v2670 = vshrl.u32 %v2669, 7
      %v2671 = vsub.s32 0, %v2670
      %v2672 = vrot.slane %v2612, %v2671
      %v2673 = vlaneseq
      %v2674 = vshrl.u32 %v2673, 7
      %v2675 = vsub.s32 1, %v2674
      %v2676 = vrot.slane %v2612, %v2675
      %v2693 = vmul.f32 %v516, %v2616
      %v2694 = vmul.f32 %v516, %v2620
      %v2695 = vmul.f32 %v521, %v2616
      %v2696 = vmul.f32 %v521, %v2620
      %v2697 = vmul.f32 %v526, %v2624
      %v2698 = vmul.f32 %v526, %v2628
      %v2699 = vmul.f32 %v531, %v2624
      %v2700 = vmul.f32 %v531, %v2628
      %v2701 = vmul.f32 %v536, %v2632
      %v2702 = vmul.f32 %v536, %v2636
      %v2703 = vmul.f32 %v541, %v2632
      %v2704 = vmul.f32 %v541, %v2636
      %v2705 = vmul.f32 %v546, %v2640
      %v2706 = vmul.f32 %v546, %v2644
      %v2707 = vmul.f32 %v551, %v2640
      %v2708 = vmul.f32 %v551, %v2644
      %v2709 = vmul.f32 %v556, %v2648
      %v2710 = vmul.f32 %v556, %v2652
      %v2711 = vmul.f32 %v561, %v2648
      %v2712 = vmul.f32 %v561, %v2652
      %v2713 = vmul.f32 %v566, %v2656
      %v2714 = vmul.f32 %v566, %v2660
      %v2715 = vmul.f32 %v571, %v2656
      %v2716 = vmul.f32 %v571, %v2660
      %v2717 = vmul.f32 %v576, %v2664
      %v2718 = vmul.f32 %v576, %v2668
      %v2719 = vmul.f32 %v581, %v2664
      %v2720 = vmul.f32 %v581, %v2668
      %v2721 = vmul.f32 %v586, %v2672
      %v2722 = vmul.f32 %v586, %v2676
      %v2723 = vmul.f32 %v591, %v2672
      %v2724 = vmul.f32 %v591, %v2676
      %2725 = vrot.lane.b32.xlu0 %v443, 127
      %v2726 = vpop.permute.xlu0 %2725
      %2727 = vrot.lane.b32.xlu0 %v444, 127
      %v2728 = vpop.permute.xlu0 %2727
      %v2729 = vsel %vm711, %v2726, %v2728
      %v2730 = vsel %vm711, %v2728, %v2726
      %v2733 = vcombine.low %v2729, %v2730
      %v2734 = vcombine.high %v2729, %v2730
      %v2736 = vunpack.c.l.s4 1966171168
      %v2737 = vunpack.c.0.s8 %v2736
      %v2738 = vlaneseq
      %v2739 = vshrl.u32 %v2738, 7
      %v2740 = vsub.s32 %v2737, %v2739
      %v2741 = vrot.slane %v2733, %v2740
      %v2743 = vunpack.c.l.s4 1966171168
      %v2744 = vunpack.c.0.s8 %v2743
      %v2745 = vlaneseq
      %v2746 = vshrl.u32 %v2745, 7
      %v2747 = vsub.s32 %v2744, %v2746
      %v2748 = vrot.slane %v2734, %v2747
      %v2749 = vcombine.high %v2741, %v2741
      %v2750 = vcombine.high %v2748, %v2748
      %v2752 = vunpack.c.l.s4 1966171168
      %v2753 = vunpack.c.0.s8 %v2752
      %v2754 = vlaneseq
      %v2755 = vshrl.u32 %v2754, 7
      %v2756 = vsub.s32 %v2753, %v2755
      %v2757 = vrot.slane %v2741, %v2756
      %v2759 = vunpack.c.l.s4 1966171168
      %v2760 = vunpack.c.0.s8 %v2759
      %v2761 = vlaneseq
      %v2762 = vshrl.u32 %v2761, 7
      %v2763 = vsub.s32 %v2760, %v2762
      %v2764 = vrot.slane %v2748, %v2763
      %v2766 = vunpack.c.l.s4 1966171168
      %v2767 = vunpack.c.0.s8 %v2766
      %v2768 = vlaneseq
      %v2769 = vshrl.u32 %v2768, 7
      %v2770 = vsub.s32 %v2767, %v2769
      %v2771 = vrot.slane %v2749, %v2770
      %v2773 = vunpack.c.l.s4 1966171168
      %v2774 = vunpack.c.0.s8 %v2773
      %v2775 = vlaneseq
      %v2776 = vshrl.u32 %v2775, 7
      %v2777 = vsub.s32 %v2774, %v2776
      %v2778 = vrot.slane %v2750, %v2777
      %v2779 = vcombine.high %v2757, %v2757
      %v2780 = vcombine.high %v2764, %v2764
      %v2781 = vcombine.high %v2771, %v2771
      %v2782 = vcombine.high %v2778, %v2778
      %v2783 = vlaneseq
      %v2784 = vshrl.u32 %v2783, 7
      %v2785 = vsub.s32 0, %v2784
      %v2786 = vrot.slane %v2757, %v2785
      %v2787 = vlaneseq
      %v2788 = vshrl.u32 %v2787, 7
      %v2789 = vsub.s32 1, %v2788
      %v2790 = vrot.slane %v2757, %v2789
      %v2791 = vlaneseq
      %v2792 = vshrl.u32 %v2791, 7
      %v2793 = vsub.s32 0, %v2792
      %v2794 = vrot.slane %v2771, %v2793
      %v2795 = vlaneseq
      %v2796 = vshrl.u32 %v2795, 7
      %v2797 = vsub.s32 1, %v2796
      %v2798 = vrot.slane %v2771, %v2797
      %v2799 = vlaneseq
      %v2800 = vshrl.u32 %v2799, 7
      %v2801 = vsub.s32 0, %v2800
      %v2802 = vrot.slane %v2779, %v2801
      %v2803 = vlaneseq
      %v2804 = vshrl.u32 %v2803, 7
      %v2805 = vsub.s32 1, %v2804
      %v2806 = vrot.slane %v2779, %v2805
      %v2807 = vlaneseq
      %v2808 = vshrl.u32 %v2807, 7
      %v2809 = vsub.s32 0, %v2808
      %v2810 = vrot.slane %v2781, %v2809
      %v2811 = vlaneseq
      %v2812 = vshrl.u32 %v2811, 7
      %v2813 = vsub.s32 1, %v2812
      %v2814 = vrot.slane %v2781, %v2813
      %v2815 = vlaneseq
      %v2816 = vshrl.u32 %v2815, 7
      %v2817 = vsub.s32 0, %v2816
      %v2818 = vrot.slane %v2764, %v2817
      %v2819 = vlaneseq
      %v2820 = vshrl.u32 %v2819, 7
      %v2821 = vsub.s32 1, %v2820
      %v2822 = vrot.slane %v2764, %v2821
      %v2823 = vlaneseq
      %v2824 = vshrl.u32 %v2823, 7
      %v2825 = vsub.s32 0, %v2824
      %v2826 = vrot.slane %v2778, %v2825
      %v2827 = vlaneseq
      %v2828 = vshrl.u32 %v2827, 7
      %v2829 = vsub.s32 1, %v2828
      %v2830 = vrot.slane %v2778, %v2829
      %v2831 = vlaneseq
      %v2832 = vshrl.u32 %v2831, 7
      %v2833 = vsub.s32 0, %v2832
      %v2834 = vrot.slane %v2780, %v2833
      %v2835 = vlaneseq
      %v2836 = vshrl.u32 %v2835, 7
      %v2837 = vsub.s32 1, %v2836
      %v2838 = vrot.slane %v2780, %v2837
      %v2839 = vlaneseq
      %v2840 = vshrl.u32 %v2839, 7
      %v2841 = vsub.s32 0, %v2840
      %v2842 = vrot.slane %v2782, %v2841
      %v2843 = vlaneseq
      %v2844 = vshrl.u32 %v2843, 7
      %v2845 = vsub.s32 1, %v2844
      %v2846 = vrot.slane %v2782, %v2845
      %v2863 = vmul.f32 %v786, %v2786
      %v2864 = vmul.f32 %v786, %v2790
      %v2865 = vmul.f32 %v791, %v2786
      %v2866 = vmul.f32 %v791, %v2790
      %v2867 = vmul.f32 %v796, %v2794
      %v2868 = vmul.f32 %v796, %v2798
      %v2869 = vmul.f32 %v801, %v2794
      %v2870 = vmul.f32 %v801, %v2798
      %v2871 = vmul.f32 %v806, %v2802
      %v2872 = vmul.f32 %v806, %v2806
      %v2873 = vmul.f32 %v811, %v2802
      %v2874 = vmul.f32 %v811, %v2806
      %v2875 = vmul.f32 %v816, %v2810
      %v2876 = vmul.f32 %v816, %v2814
      %v2877 = vmul.f32 %v821, %v2810
      %v2878 = vmul.f32 %v821, %v2814
      %v2879 = vmul.f32 %v826, %v2818
      %v2880 = vmul.f32 %v826, %v2822
      %v2881 = vmul.f32 %v831, %v2818
      %v2882 = vmul.f32 %v831, %v2822
      %v2883 = vmul.f32 %v836, %v2826
      %v2884 = vmul.f32 %v836, %v2830
      %v2885 = vmul.f32 %v841, %v2826
      %v2886 = vmul.f32 %v841, %v2830
      %v2887 = vmul.f32 %v846, %v2834
      %v2888 = vmul.f32 %v846, %v2838
      %v2889 = vmul.f32 %v851, %v2834
      %v2890 = vmul.f32 %v851, %v2838
      %v2891 = vmul.f32 %v856, %v2842
      %v2892 = vmul.f32 %v856, %v2846
      %v2893 = vmul.f32 %v861, %v2842
      %v2894 = vmul.f32 %v861, %v2846
      %v2895 = vadd.f32 %v2693, %v2863
      %v2896 = vadd.f32 %v2694, %v2864
      %v2897 = vadd.f32 %v2695, %v2865
      %v2898 = vadd.f32 %v2696, %v2866
      %v2899 = vadd.f32 %v2697, %v2867
      %v2900 = vadd.f32 %v2698, %v2868
      %v2901 = vadd.f32 %v2699, %v2869
      %v2902 = vadd.f32 %v2700, %v2870
      %v2903 = vadd.f32 %v2701, %v2871
      %v2904 = vadd.f32 %v2702, %v2872
      %v2905 = vadd.f32 %v2703, %v2873
      %v2906 = vadd.f32 %v2704, %v2874
      %v2907 = vadd.f32 %v2705, %v2875
      %v2908 = vadd.f32 %v2706, %v2876
      %v2909 = vadd.f32 %v2707, %v2877
      %v2910 = vadd.f32 %v2708, %v2878
      %v2911 = vadd.f32 %v2709, %v2879
      %v2912 = vadd.f32 %v2710, %v2880
      %v2913 = vadd.f32 %v2711, %v2881
      %v2914 = vadd.f32 %v2712, %v2882
      %v2915 = vadd.f32 %v2713, %v2883
      %v2916 = vadd.f32 %v2714, %v2884
      %v2917 = vadd.f32 %v2715, %v2885
      %v2918 = vadd.f32 %v2716, %v2886
      %v2919 = vadd.f32 %v2717, %v2887
      %v2920 = vadd.f32 %v2718, %v2888
      %v2921 = vadd.f32 %v2719, %v2889
      %v2922 = vadd.f32 %v2720, %v2890
      %v2923 = vadd.f32 %v2721, %v2891
      %v2924 = vadd.f32 %v2722, %v2892
      %v2925 = vadd.f32 %v2723, %v2893
      %v2926 = vadd.f32 %v2724, %v2894
      %2927 = vrot.lane.b32.xlu0 %v443, 126
      %v2928 = vpop.permute.xlu0 %2927
      %2929 = vrot.lane.b32.xlu0 %v444, 126
      %v2930 = vpop.permute.xlu0 %2929
      %v2931 = vsel %vm1011, %v2928, %v2930
      %v2932 = vsel %vm1011, %v2930, %v2928
      %v2935 = vcombine.low %v2931, %v2932
      %v2936 = vcombine.high %v2931, %v2932
      %v2938 = vunpack.c.l.s4 1966171168
      %v2939 = vunpack.c.0.s8 %v2938
      %v2940 = vlaneseq
      %v2941 = vshrl.u32 %v2940, 7
      %v2942 = vsub.s32 %v2939, %v2941
      %v2943 = vrot.slane %v2935, %v2942
      %v2945 = vunpack.c.l.s4 1966171168
      %v2946 = vunpack.c.0.s8 %v2945
      %v2947 = vlaneseq
      %v2948 = vshrl.u32 %v2947, 7
      %v2949 = vsub.s32 %v2946, %v2948
      %v2950 = vrot.slane %v2936, %v2949
      %v2951 = vcombine.high %v2943, %v2943
      %v2952 = vcombine.high %v2950, %v2950
      %v2954 = vunpack.c.l.s4 1966171168
      %v2955 = vunpack.c.0.s8 %v2954
      %v2956 = vlaneseq
      %v2957 = vshrl.u32 %v2956, 7
      %v2958 = vsub.s32 %v2955, %v2957
      %v2959 = vrot.slane %v2943, %v2958
      %v2961 = vunpack.c.l.s4 1966171168
      %v2962 = vunpack.c.0.s8 %v2961
      %v2963 = vlaneseq
      %v2964 = vshrl.u32 %v2963, 7
      %v2965 = vsub.s32 %v2962, %v2964
      %v2966 = vrot.slane %v2950, %v2965
      %v2968 = vunpack.c.l.s4 1966171168
      %v2969 = vunpack.c.0.s8 %v2968
      %v2970 = vlaneseq
      %v2971 = vshrl.u32 %v2970, 7
      %v2972 = vsub.s32 %v2969, %v2971
      %v2973 = vrot.slane %v2951, %v2972
      %v2975 = vunpack.c.l.s4 1966171168
      %v2976 = vunpack.c.0.s8 %v2975
      %v2977 = vlaneseq
      %v2978 = vshrl.u32 %v2977, 7
      %v2979 = vsub.s32 %v2976, %v2978
      %v2980 = vrot.slane %v2952, %v2979
      %v2981 = vcombine.high %v2959, %v2959
      %v2982 = vcombine.high %v2966, %v2966
      %v2983 = vcombine.high %v2973, %v2973
      %v2984 = vcombine.high %v2980, %v2980
      %v2985 = vlaneseq
      %v2986 = vshrl.u32 %v2985, 7
      %v2987 = vsub.s32 0, %v2986
      %v2988 = vrot.slane %v2959, %v2987
      %v2989 = vlaneseq
      %v2990 = vshrl.u32 %v2989, 7
      %v2991 = vsub.s32 1, %v2990
      %v2992 = vrot.slane %v2959, %v2991
      %v2993 = vlaneseq
      %v2994 = vshrl.u32 %v2993, 7
      %v2995 = vsub.s32 0, %v2994
      %v2996 = vrot.slane %v2973, %v2995
      %v2997 = vlaneseq
      %v2998 = vshrl.u32 %v2997, 7
      %v2999 = vsub.s32 1, %v2998
      %v3000 = vrot.slane %v2973, %v2999
      %v3001 = vlaneseq
      %v3002 = vshrl.u32 %v3001, 7
      %v3003 = vsub.s32 0, %v3002
      %v3004 = vrot.slane %v2981, %v3003
      %v3005 = vlaneseq
      %v3006 = vshrl.u32 %v3005, 7
      %v3007 = vsub.s32 1, %v3006
      %v3008 = vrot.slane %v2981, %v3007
      %v3009 = vlaneseq
      %v3010 = vshrl.u32 %v3009, 7
      %v3011 = vsub.s32 0, %v3010
      %v3012 = vrot.slane %v2983, %v3011
      %v3013 = vlaneseq
      %v3014 = vshrl.u32 %v3013, 7
      %v3015 = vsub.s32 1, %v3014
      %v3016 = vrot.slane %v2983, %v3015
      %v3017 = vlaneseq
      %v3018 = vshrl.u32 %v3017, 7
      %v3019 = vsub.s32 0, %v3018
      %v3020 = vrot.slane %v2966, %v3019
      %v3021 = vlaneseq
      %v3022 = vshrl.u32 %v3021, 7
      %v3023 = vsub.s32 1, %v3022
      %v3024 = vrot.slane %v2966, %v3023
      %v3025 = vlaneseq
      %v3026 = vshrl.u32 %v3025, 7
      %v3027 = vsub.s32 0, %v3026
      %v3028 = vrot.slane %v2980, %v3027
      %v3029 = vlaneseq
      %v3030 = vshrl.u32 %v3029, 7
      %v3031 = vsub.s32 1, %v3030
      %v3032 = vrot.slane %v2980, %v3031
      %v3033 = vlaneseq
      %v3034 = vshrl.u32 %v3033, 7
      %v3035 = vsub.s32 0, %v3034
      %v3036 = vrot.slane %v2982, %v3035
      %v3037 = vlaneseq
      %v3038 = vshrl.u32 %v3037, 7
      %v3039 = vsub.s32 1, %v3038
      %v3040 = vrot.slane %v2982, %v3039
      %v3041 = vlaneseq
      %v3042 = vshrl.u32 %v3041, 7
      %v3043 = vsub.s32 0, %v3042
      %v3044 = vrot.slane %v2984, %v3043
      %v3045 = vlaneseq
      %v3046 = vshrl.u32 %v3045, 7
      %v3047 = vsub.s32 1, %v3046
      %v3048 = vrot.slane %v2984, %v3047
      %v3065 = vmul.f32 %v1086, %v2988
      %v3066 = vmul.f32 %v1086, %v2992
      %v3067 = vmul.f32 %v1091, %v2988
      %v3068 = vmul.f32 %v1091, %v2992
      %v3069 = vmul.f32 %v1096, %v2996
      %v3070 = vmul.f32 %v1096, %v3000
      %v3071 = vmul.f32 %v1101, %v2996
      %v3072 = vmul.f32 %v1101, %v3000
      %v3073 = vmul.f32 %v1106, %v3004
      %v3074 = vmul.f32 %v1106, %v3008
      %v3075 = vmul.f32 %v1111, %v3004
      %v3076 = vmul.f32 %v1111, %v3008
      %v3077 = vmul.f32 %v1116, %v3012
      %v3078 = vmul.f32 %v1116, %v3016
      %v3079 = vmul.f32 %v1121, %v3012
      %v3080 = vmul.f32 %v1121, %v3016
      %v3081 = vmul.f32 %v1126, %v3020
      %v3082 = vmul.f32 %v1126, %v3024
      %v3083 = vmul.f32 %v1131, %v3020
      %v3084 = vmul.f32 %v1131, %v3024
      %v3085 = vmul.f32 %v1136, %v3028
      %v3086 = vmul.f32 %v1136, %v3032
      %v3087 = vmul.f32 %v1141, %v3028
      %v3088 = vmul.f32 %v1141, %v3032
      %v3089 = vmul.f32 %v1146, %v3036
      %v3090 = vmul.f32 %v1146, %v3040
      %v3091 = vmul.f32 %v1151, %v3036
      %v3092 = vmul.f32 %v1151, %v3040
      %v3093 = vmul.f32 %v1156, %v3044
      %v3094 = vmul.f32 %v1156, %v3048
      %v3095 = vmul.f32 %v1161, %v3044
      %v3096 = vmul.f32 %v1161, %v3048
      %v3097 = vadd.f32 %v2895, %v3065
      %v3098 = vadd.f32 %v2896, %v3066
      %v3099 = vadd.f32 %v2897, %v3067
      %v3100 = vadd.f32 %v2898, %v3068
      %v3101 = vadd.f32 %v2899, %v3069
      %v3102 = vadd.f32 %v2900, %v3070
      %v3103 = vadd.f32 %v2901, %v3071
      %v3104 = vadd.f32 %v2902, %v3072
      %v3105 = vadd.f32 %v2903, %v3073
      %v3106 = vadd.f32 %v2904, %v3074
      %v3107 = vadd.f32 %v2905, %v3075
      %v3108 = vadd.f32 %v2906, %v3076
      %v3109 = vadd.f32 %v2907, %v3077
      %v3110 = vadd.f32 %v2908, %v3078
      %v3111 = vadd.f32 %v2909, %v3079
      %v3112 = vadd.f32 %v2910, %v3080
      %v3113 = vadd.f32 %v2911, %v3081
      %v3114 = vadd.f32 %v2912, %v3082
      %v3115 = vadd.f32 %v2913, %v3083
      %v3116 = vadd.f32 %v2914, %v3084
      %v3117 = vadd.f32 %v2915, %v3085
      %v3118 = vadd.f32 %v2916, %v3086
      %v3119 = vadd.f32 %v2917, %v3087
      %v3120 = vadd.f32 %v2918, %v3088
      %v3121 = vadd.f32 %v2919, %v3089
      %v3122 = vadd.f32 %v2920, %v3090
      %v3123 = vadd.f32 %v2921, %v3091
      %v3124 = vadd.f32 %v2922, %v3092
      %v3125 = vadd.f32 %v2923, %v3093
      %v3126 = vadd.f32 %v2924, %v3094
      %v3127 = vadd.f32 %v2925, %v3095
      %v3128 = vadd.f32 %v2926, %v3096
      %v3129 = vadd.f32 %v3097, %v1326
      %v3130 = vadd.f32 %v3098, %v1326
      %v3131 = vadd.f32 %v3099, %v1331
      %v3132 = vadd.f32 %v3100, %v1331
      %v3133 = vadd.f32 %v3101, %v1336
      %v3134 = vadd.f32 %v3102, %v1336
      %v3135 = vadd.f32 %v3103, %v1341
      %v3136 = vadd.f32 %v3104, %v1341
      %v3137 = vadd.f32 %v3105, %v1346
      %v3138 = vadd.f32 %v3106, %v1346
      %v3139 = vadd.f32 %v3107, %v1351
      %v3140 = vadd.f32 %v3108, %v1351
      %v3141 = vadd.f32 %v3109, %v1356
      %v3142 = vadd.f32 %v3110, %v1356
      %v3143 = vadd.f32 %v3111, %v1361
      %v3144 = vadd.f32 %v3112, %v1361
      %v3145 = vadd.f32 %v3113, %v1366
      %v3146 = vadd.f32 %v3114, %v1366
      %v3147 = vadd.f32 %v3115, %v1371
      %v3148 = vadd.f32 %v3116, %v1371
      %v3149 = vadd.f32 %v3117, %v1376
      %v3150 = vadd.f32 %v3118, %v1376
      %v3151 = vadd.f32 %v3119, %v1381
      %v3152 = vadd.f32 %v3120, %v1381
      %v3153 = vadd.f32 %v3121, %v1386
      %v3154 = vadd.f32 %v3122, %v1386
      %v3155 = vadd.f32 %v3123, %v1391
      %v3156 = vadd.f32 %v3124, %v1391
      %v3157 = vadd.f32 %v3125, %v1396
      %v3158 = vadd.f32 %v3126, %v1396
      %v3159 = vadd.f32 %v3127, %v1401
      %v3160 = vadd.f32 %v3128, %v1401
      %vm3161 = vcmp.gt.f32.partialorder %v3129, 0.0
      %vm3162 = vcmp.gt.f32.partialorder %v3130, 0.0
      %vm3163 = vcmp.gt.f32.partialorder %v3131, 0.0
      %vm3164 = vcmp.gt.f32.partialorder %v3132, 0.0
      %vm3165 = vcmp.gt.f32.partialorder %v3133, 0.0
      %vm3166 = vcmp.gt.f32.partialorder %v3134, 0.0
      %vm3167 = vcmp.gt.f32.partialorder %v3135, 0.0
      %vm3168 = vcmp.gt.f32.partialorder %v3136, 0.0
      %vm3169 = vcmp.gt.f32.partialorder %v3137, 0.0
      %vm3170 = vcmp.gt.f32.partialorder %v3138, 0.0
      %vm3171 = vcmp.gt.f32.partialorder %v3139, 0.0
      %vm3172 = vcmp.gt.f32.partialorder %v3140, 0.0
      %vm3173 = vcmp.gt.f32.partialorder %v3141, 0.0
      %vm3174 = vcmp.gt.f32.partialorder %v3142, 0.0
      %vm3175 = vcmp.gt.f32.partialorder %v3143, 0.0
      %vm3176 = vcmp.gt.f32.partialorder %v3144, 0.0
      %vm3177 = vcmp.gt.f32.partialorder %v3145, 0.0
      %vm3178 = vcmp.gt.f32.partialorder %v3146, 0.0
      %vm3179 = vcmp.gt.f32.partialorder %v3147, 0.0
      %vm3180 = vcmp.gt.f32.partialorder %v3148, 0.0
      %vm3181 = vcmp.gt.f32.partialorder %v3149, 0.0
      %vm3182 = vcmp.gt.f32.partialorder %v3150, 0.0
      %vm3183 = vcmp.gt.f32.partialorder %v3151, 0.0
      %vm3184 = vcmp.gt.f32.partialorder %v3152, 0.0
      %vm3185 = vcmp.gt.f32.partialorder %v3153, 0.0
      %vm3186 = vcmp.gt.f32.partialorder %v3154, 0.0
      %vm3187 = vcmp.gt.f32.partialorder %v3155, 0.0
      %vm3188 = vcmp.gt.f32.partialorder %v3156, 0.0
      %vm3189 = vcmp.gt.f32.partialorder %v3157, 0.0
      %vm3190 = vcmp.gt.f32.partialorder %v3158, 0.0
      %vm3191 = vcmp.gt.f32.partialorder %v3159, 0.0
      %vm3192 = vcmp.gt.f32.partialorder %v3160, 0.0
      %v3193 = vmul.f32 %v3129, 0.01
      %v3194 = vmul.f32 %v3130, 0.01
      %v3195 = vmul.f32 %v3131, 0.01
      %v3196 = vmul.f32 %v3132, 0.01
      %v3197 = vmul.f32 %v3133, 0.01
      %v3198 = vmul.f32 %v3134, 0.01
      %v3199 = vmul.f32 %v3135, 0.01
      %v3200 = vmul.f32 %v3136, 0.01
      %v3201 = vmul.f32 %v3137, 0.01
      %v3202 = vmul.f32 %v3138, 0.01
      %v3203 = vmul.f32 %v3139, 0.01
      %v3204 = vmul.f32 %v3140, 0.01
      %v3205 = vmul.f32 %v3141, 0.01
      %v3206 = vmul.f32 %v3142, 0.01
      %v3207 = vmul.f32 %v3143, 0.01
      %v3208 = vmul.f32 %v3144, 0.01
      %v3209 = vmul.f32 %v3145, 0.01
      %v3210 = vmul.f32 %v3146, 0.01
      %v3211 = vmul.f32 %v3147, 0.01
      %v3212 = vmul.f32 %v3148, 0.01
      %v3213 = vmul.f32 %v3149, 0.01
      %v3214 = vmul.f32 %v3150, 0.01
      %v3215 = vmul.f32 %v3151, 0.01
      %v3216 = vmul.f32 %v3152, 0.01
      %v3217 = vmul.f32 %v3153, 0.01
      %v3218 = vmul.f32 %v3154, 0.01
      %v3219 = vmul.f32 %v3155, 0.01
      %v3220 = vmul.f32 %v3156, 0.01
      %v3221 = vmul.f32 %v3157, 0.01
      %v3222 = vmul.f32 %v3158, 0.01
      %v3223 = vmul.f32 %v3159, 0.01
      %v3224 = vmul.f32 %v3160, 0.01
      %v3225 = vsel %vm3161, %v3129, %v3193
      %v3226 = vsel %vm3162, %v3130, %v3194
      %v3227 = vsel %vm3163, %v3131, %v3195
      %v3228 = vsel %vm3164, %v3132, %v3196
      %v3229 = vsel %vm3165, %v3133, %v3197
      %v3230 = vsel %vm3166, %v3134, %v3198
      %v3231 = vsel %vm3167, %v3135, %v3199
      %v3232 = vsel %vm3168, %v3136, %v3200
      %v3233 = vsel %vm3169, %v3137, %v3201
      %v3234 = vsel %vm3170, %v3138, %v3202
      %v3235 = vsel %vm3171, %v3139, %v3203
      %v3236 = vsel %vm3172, %v3140, %v3204
      %v3237 = vsel %vm3173, %v3141, %v3205
      %v3238 = vsel %vm3174, %v3142, %v3206
      %v3239 = vsel %vm3175, %v3143, %v3207
      %v3240 = vsel %vm3176, %v3144, %v3208
      %v3241 = vsel %vm3177, %v3145, %v3209
      %v3242 = vsel %vm3178, %v3146, %v3210
      %v3243 = vsel %vm3179, %v3147, %v3211
      %v3244 = vsel %vm3180, %v3148, %v3212
      %v3245 = vsel %vm3181, %v3149, %v3213
      %v3246 = vsel %vm3182, %v3150, %v3214
      %v3247 = vsel %vm3183, %v3151, %v3215
      %v3248 = vsel %vm3184, %v3152, %v3216
      %v3249 = vsel %vm3185, %v3153, %v3217
      %v3250 = vsel %vm3186, %v3154, %v3218
      %v3251 = vsel %vm3187, %v3155, %v3219
      %v3252 = vsel %vm3188, %v3156, %v3220
      %v3253 = vsel %vm3189, %v3157, %v3221
      %v3254 = vsel %vm3190, %v3158, %v3222
      %v3255 = vsel %vm3191, %v3159, %v3223
      %v3256 = vsel %vm3192, %v3160, %v3224
      %v3257 = vmul.f32 %v1550, %v3225
      %v3258 = vmul.f32 %v1550, %v3226
      %v3259 = vmul.f32 %v1555, %v3227
      %v3260 = vmul.f32 %v1555, %v3228
      %v3261 = vmul.f32 %v1560, %v3229
      %v3262 = vmul.f32 %v1560, %v3230
      %v3263 = vmul.f32 %v1565, %v3231
      %v3264 = vmul.f32 %v1565, %v3232
      %v3265 = vmul.f32 %v1570, %v3233
      %v3266 = vmul.f32 %v1570, %v3234
      %v3267 = vmul.f32 %v1575, %v3235
      %v3268 = vmul.f32 %v1575, %v3236
      %v3269 = vmul.f32 %v1580, %v3237
      %v3270 = vmul.f32 %v1580, %v3238
      %v3271 = vmul.f32 %v1585, %v3239
      %v3272 = vmul.f32 %v1585, %v3240
      %v3273 = vmul.f32 %v1590, %v3241
      %v3274 = vmul.f32 %v1590, %v3242
      %v3275 = vmul.f32 %v1595, %v3243
      %v3276 = vmul.f32 %v1595, %v3244
      %v3277 = vmul.f32 %v1600, %v3245
      %v3278 = vmul.f32 %v1600, %v3246
      %v3279 = vmul.f32 %v1605, %v3247
      %v3280 = vmul.f32 %v1605, %v3248
      %v3281 = vmul.f32 %v1610, %v3249
      %v3282 = vmul.f32 %v1610, %v3250
      %v3283 = vmul.f32 %v1615, %v3251
      %v3284 = vmul.f32 %v1615, %v3252
      %v3285 = vmul.f32 %v1620, %v3253
      %v3286 = vmul.f32 %v1620, %v3254
      %v3287 = vmul.f32 %v1625, %v3255
      %v3288 = vmul.f32 %v1625, %v3256
      %v3289 = vadd.f32 %v3257, %v3259
      %v3290 = vrot.slane %v3289, 4
      %v3291 = vadd.f32 %v3289, %v3290
      %v3292 = vrot.slane %v3291, 2
      %v3293 = vadd.f32 %v3291, %v3292
      %v3294 = vrot.slane %v3293, 1
      %v3295 = vadd.f32 %v3293, %v3294
      %v3296 = vadd.f32 %v3258, %v3260
      %v3297 = vrot.slane %v3296, 4
      %v3298 = vadd.f32 %v3296, %v3297
      %v3299 = vrot.slane %v3298, 2
      %v3300 = vadd.f32 %v3298, %v3299
      %v3301 = vrot.slane %v3300, 1
      %v3302 = vadd.f32 %v3300, %v3301
      %v3303 = vadd.f32 %v3261, %v3263
      %v3304 = vrot.slane %v3303, 4
      %v3305 = vadd.f32 %v3303, %v3304
      %v3306 = vrot.slane %v3305, 2
      %v3307 = vadd.f32 %v3305, %v3306
      %v3308 = vrot.slane %v3307, 1
      %v3309 = vadd.f32 %v3307, %v3308
      %v3310 = vadd.f32 %v3262, %v3264
      %v3311 = vrot.slane %v3310, 4
      %v3312 = vadd.f32 %v3310, %v3311
      %v3313 = vrot.slane %v3312, 2
      %v3314 = vadd.f32 %v3312, %v3313
      %v3315 = vrot.slane %v3314, 1
      %v3316 = vadd.f32 %v3314, %v3315
      %v3317 = vadd.f32 %v3265, %v3267
      %v3318 = vrot.slane %v3317, 4
      %v3319 = vadd.f32 %v3317, %v3318
      %v3320 = vrot.slane %v3319, 2
      %v3321 = vadd.f32 %v3319, %v3320
      %v3322 = vrot.slane %v3321, 1
      %v3323 = vadd.f32 %v3321, %v3322
      %v3324 = vadd.f32 %v3266, %v3268
      %v3325 = vrot.slane %v3324, 4
      %v3326 = vadd.f32 %v3324, %v3325
      %v3327 = vrot.slane %v3326, 2
      %v3328 = vadd.f32 %v3326, %v3327
      %v3329 = vrot.slane %v3328, 1
      %v3330 = vadd.f32 %v3328, %v3329
      %v3331 = vadd.f32 %v3269, %v3271
      %v3332 = vrot.slane %v3331, 4
      %v3333 = vadd.f32 %v3331, %v3332
      %v3334 = vrot.slane %v3333, 2
      %v3335 = vadd.f32 %v3333, %v3334
      %v3336 = vrot.slane %v3335, 1
      %v3337 = vadd.f32 %v3335, %v3336
      %v3338 = vadd.f32 %v3270, %v3272
      %v3339 = vrot.slane %v3338, 4
      %v3340 = vadd.f32 %v3338, %v3339
      %v3341 = vrot.slane %v3340, 2
      %v3342 = vadd.f32 %v3340, %v3341
      %v3343 = vrot.slane %v3342, 1
      %v3344 = vadd.f32 %v3342, %v3343
      %v3345 = vadd.f32 %v3273, %v3275
      %v3346 = vrot.slane %v3345, 4
      %v3347 = vadd.f32 %v3345, %v3346
      %v3348 = vrot.slane %v3347, 2
      %v3349 = vadd.f32 %v3347, %v3348
      %v3350 = vrot.slane %v3349, 1
      %v3351 = vadd.f32 %v3349, %v3350
      %v3352 = vadd.f32 %v3274, %v3276
      %v3353 = vrot.slane %v3352, 4
      %v3354 = vadd.f32 %v3352, %v3353
      %v3355 = vrot.slane %v3354, 2
      %v3356 = vadd.f32 %v3354, %v3355
      %v3357 = vrot.slane %v3356, 1
      %v3358 = vadd.f32 %v3356, %v3357
      %v3359 = vadd.f32 %v3277, %v3279
      %v3360 = vrot.slane %v3359, 4
      %v3361 = vadd.f32 %v3359, %v3360
      %v3362 = vrot.slane %v3361, 2
      %v3363 = vadd.f32 %v3361, %v3362
      %v3364 = vrot.slane %v3363, 1
      %v3365 = vadd.f32 %v3363, %v3364
      %v3366 = vadd.f32 %v3278, %v3280
      %v3367 = vrot.slane %v3366, 4
      %v3368 = vadd.f32 %v3366, %v3367
      %v3369 = vrot.slane %v3368, 2
      %v3370 = vadd.f32 %v3368, %v3369
      %v3371 = vrot.slane %v3370, 1
      %v3372 = vadd.f32 %v3370, %v3371
      %v3373 = vadd.f32 %v3281, %v3283
      %v3374 = vrot.slane %v3373, 4
      %v3375 = vadd.f32 %v3373, %v3374
      %v3376 = vrot.slane %v3375, 2
      %v3377 = vadd.f32 %v3375, %v3376
      %v3378 = vrot.slane %v3377, 1
      %v3379 = vadd.f32 %v3377, %v3378
      %v3380 = vadd.f32 %v3282, %v3284
      %v3381 = vrot.slane %v3380, 4
      %v3382 = vadd.f32 %v3380, %v3381
      %v3383 = vrot.slane %v3382, 2
      %v3384 = vadd.f32 %v3382, %v3383
      %v3385 = vrot.slane %v3384, 1
      %v3386 = vadd.f32 %v3384, %v3385
      %v3387 = vadd.f32 %v3285, %v3287
      %v3388 = vrot.slane %v3387, 4
      %v3389 = vadd.f32 %v3387, %v3388
      %v3390 = vrot.slane %v3389, 2
      %v3391 = vadd.f32 %v3389, %v3390
      %v3392 = vrot.slane %v3391, 1
      %v3393 = vadd.f32 %v3391, %v3392
      %v3394 = vadd.f32 %v3286, %v3288
      %v3395 = vrot.slane %v3394, 4
      %v3396 = vadd.f32 %v3394, %v3395
      %v3397 = vrot.slane %v3396, 2
      %v3398 = vadd.f32 %v3396, %v3397
      %v3399 = vrot.slane %v3398, 1
      %v3400 = vadd.f32 %v3398, %v3399
      %3401 = vrot.lane.b32.xlu0 %v3225, 127
      %v3402 = vpop.permute.xlu0 %3401
      %3403 = vrot.lane.b32.xlu0 %v3227, 127
      %v3404 = vpop.permute.xlu0 %3403
      %3405 = vrot.lane.b32.xlu0 %v3229, 127
      %v3406 = vpop.permute.xlu0 %3405
      %3407 = vrot.lane.b32.xlu0 %v3231, 127
      %v3408 = vpop.permute.xlu0 %3407
      %3409 = vrot.lane.b32.xlu0 %v3233, 127
      %v3410 = vpop.permute.xlu0 %3409
      %3411 = vrot.lane.b32.xlu0 %v3235, 127
      %v3412 = vpop.permute.xlu0 %3411
      %3413 = vrot.lane.b32.xlu0 %v3237, 127
      %v3414 = vpop.permute.xlu0 %3413
      %3415 = vrot.lane.b32.xlu0 %v3239, 127
      %v3416 = vpop.permute.xlu0 %3415
      %3417 = vrot.lane.b32.xlu0 %v3241, 127
      %v3418 = vpop.permute.xlu0 %3417
      %3419 = vrot.lane.b32.xlu0 %v3243, 127
      %v3420 = vpop.permute.xlu0 %3419
      %3421 = vrot.lane.b32.xlu0 %v3245, 127
      %v3422 = vpop.permute.xlu0 %3421
      %3423 = vrot.lane.b32.xlu0 %v3247, 127
      %v3424 = vpop.permute.xlu0 %3423
      %3425 = vrot.lane.b32.xlu0 %v3249, 127
      %v3426 = vpop.permute.xlu0 %3425
      %3427 = vrot.lane.b32.xlu0 %v3251, 127
      %v3428 = vpop.permute.xlu0 %3427
      %3429 = vrot.lane.b32.xlu0 %v3253, 127
      %v3430 = vpop.permute.xlu0 %3429
      %3431 = vrot.lane.b32.xlu0 %v3255, 127
      %v3432 = vpop.permute.xlu0 %3431
      %3433 = vrot.lane.b32.xlu0 %v3226, 127
      %v3434 = vpop.permute.xlu0 %3433
      %3435 = vrot.lane.b32.xlu0 %v3228, 127
      %v3436 = vpop.permute.xlu0 %3435
      %3437 = vrot.lane.b32.xlu0 %v3230, 127
      %v3438 = vpop.permute.xlu0 %3437
      %3439 = vrot.lane.b32.xlu0 %v3232, 127
      %v3440 = vpop.permute.xlu0 %3439
      %3441 = vrot.lane.b32.xlu0 %v3234, 127
      %v3442 = vpop.permute.xlu0 %3441
      %3443 = vrot.lane.b32.xlu0 %v3236, 127
      %v3444 = vpop.permute.xlu0 %3443
      %3445 = vrot.lane.b32.xlu0 %v3238, 127
      %v3446 = vpop.permute.xlu0 %3445
      %3447 = vrot.lane.b32.xlu0 %v3240, 127
      %v3448 = vpop.permute.xlu0 %3447
      %3449 = vrot.lane.b32.xlu0 %v3242, 127
      %v3450 = vpop.permute.xlu0 %3449
      %3451 = vrot.lane.b32.xlu0 %v3244, 127
      %v3452 = vpop.permute.xlu0 %3451
      %3453 = vrot.lane.b32.xlu0 %v3246, 127
      %v3454 = vpop.permute.xlu0 %3453
      %3455 = vrot.lane.b32.xlu0 %v3248, 127
      %v3456 = vpop.permute.xlu0 %3455
      %3457 = vrot.lane.b32.xlu0 %v3250, 127
      %v3458 = vpop.permute.xlu0 %3457
      %3459 = vrot.lane.b32.xlu0 %v3252, 127
      %v3460 = vpop.permute.xlu0 %3459
      %3461 = vrot.lane.b32.xlu0 %v3254, 127
      %v3462 = vpop.permute.xlu0 %3461
      %3463 = vrot.lane.b32.xlu0 %v3256, 127
      %v3464 = vpop.permute.xlu0 %3463
      %v3465 = vsel %vm711, %v3402, %v3434
      %v3466 = vsel %vm711, %v3404, %v3436
      %v3467 = vsel %vm711, %v3406, %v3438
      %v3468 = vsel %vm711, %v3408, %v3440
      %v3469 = vsel %vm711, %v3410, %v3442
      %v3470 = vsel %vm711, %v3412, %v3444
      %v3471 = vsel %vm711, %v3414, %v3446
      %v3472 = vsel %vm711, %v3416, %v3448
      %v3473 = vsel %vm711, %v3418, %v3450
      %v3474 = vsel %vm711, %v3420, %v3452
      %v3475 = vsel %vm711, %v3422, %v3454
      %v3476 = vsel %vm711, %v3424, %v3456
      %v3477 = vsel %vm711, %v3426, %v3458
      %v3478 = vsel %vm711, %v3428, %v3460
      %v3479 = vsel %vm711, %v3430, %v3462
      %v3480 = vsel %vm711, %v3432, %v3464
      %v3481 = vsel %vm711, %v3434, %v3402
      %v3482 = vsel %vm711, %v3436, %v3404
      %v3483 = vsel %vm711, %v3438, %v3406
      %v3484 = vsel %vm711, %v3440, %v3408
      %v3485 = vsel %vm711, %v3442, %v3410
      %v3486 = vsel %vm711, %v3444, %v3412
      %v3487 = vsel %vm711, %v3446, %v3414
      %v3488 = vsel %vm711, %v3448, %v3416
      %v3489 = vsel %vm711, %v3450, %v3418
      %v3490 = vsel %vm711, %v3452, %v3420
      %v3491 = vsel %vm711, %v3454, %v3422
      %v3492 = vsel %vm711, %v3456, %v3424
      %v3493 = vsel %vm711, %v3458, %v3426
      %v3494 = vsel %vm711, %v3460, %v3428
      %v3495 = vsel %vm711, %v3462, %v3430
      %v3496 = vsel %vm711, %v3464, %v3432
      %v3497 = vmul.f32 %v1887, %v3465
      %v3498 = vmul.f32 %v1887, %v3481
      %v3499 = vmul.f32 %v1892, %v3466
      %v3500 = vmul.f32 %v1892, %v3482
      %v3501 = vmul.f32 %v1897, %v3467
      %v3502 = vmul.f32 %v1897, %v3483
      %v3503 = vmul.f32 %v1902, %v3468
      %v3504 = vmul.f32 %v1902, %v3484
      %v3505 = vmul.f32 %v1907, %v3469
      %v3506 = vmul.f32 %v1907, %v3485
      %v3507 = vmul.f32 %v1912, %v3470
      %v3508 = vmul.f32 %v1912, %v3486
      %v3509 = vmul.f32 %v1917, %v3471
      %v3510 = vmul.f32 %v1917, %v3487
      %v3511 = vmul.f32 %v1922, %v3472
      %v3512 = vmul.f32 %v1922, %v3488
      %v3513 = vmul.f32 %v1927, %v3473
      %v3514 = vmul.f32 %v1927, %v3489
      %v3515 = vmul.f32 %v1932, %v3474
      %v3516 = vmul.f32 %v1932, %v3490
      %v3517 = vmul.f32 %v1937, %v3475
      %v3518 = vmul.f32 %v1937, %v3491
      %v3519 = vmul.f32 %v1942, %v3476
      %v3520 = vmul.f32 %v1942, %v3492
      %v3521 = vmul.f32 %v1947, %v3477
      %v3522 = vmul.f32 %v1947, %v3493
      %v3523 = vmul.f32 %v1952, %v3478
      %v3524 = vmul.f32 %v1952, %v3494
      %v3525 = vmul.f32 %v1957, %v3479
      %v3526 = vmul.f32 %v1957, %v3495
      %v3527 = vmul.f32 %v1962, %v3480
      %v3528 = vmul.f32 %v1962, %v3496
      %v3529 = vadd.f32 %v3497, %v3499
      %v3530 = vrot.slane %v3529, 4
      %v3531 = vadd.f32 %v3529, %v3530
      %v3532 = vrot.slane %v3531, 2
      %v3533 = vadd.f32 %v3531, %v3532
      %v3534 = vrot.slane %v3533, 1
      %v3535 = vadd.f32 %v3533, %v3534
      %v3536 = vadd.f32 %v3498, %v3500
      %v3537 = vrot.slane %v3536, 4
      %v3538 = vadd.f32 %v3536, %v3537
      %v3539 = vrot.slane %v3538, 2
      %v3540 = vadd.f32 %v3538, %v3539
      %v3541 = vrot.slane %v3540, 1
      %v3542 = vadd.f32 %v3540, %v3541
      %v3543 = vadd.f32 %v3501, %v3503
      %v3544 = vrot.slane %v3543, 4
      %v3545 = vadd.f32 %v3543, %v3544
      %v3546 = vrot.slane %v3545, 2
      %v3547 = vadd.f32 %v3545, %v3546
      %v3548 = vrot.slane %v3547, 1
      %v3549 = vadd.f32 %v3547, %v3548
      %v3550 = vadd.f32 %v3502, %v3504
      %v3551 = vrot.slane %v3550, 4
      %v3552 = vadd.f32 %v3550, %v3551
      %v3553 = vrot.slane %v3552, 2
      %v3554 = vadd.f32 %v3552, %v3553
      %v3555 = vrot.slane %v3554, 1
      %v3556 = vadd.f32 %v3554, %v3555
      %v3557 = vadd.f32 %v3505, %v3507
      %v3558 = vrot.slane %v3557, 4
      %v3559 = vadd.f32 %v3557, %v3558
      %v3560 = vrot.slane %v3559, 2
      %v3561 = vadd.f32 %v3559, %v3560
      %v3562 = vrot.slane %v3561, 1
      %v3563 = vadd.f32 %v3561, %v3562
      %v3564 = vadd.f32 %v3506, %v3508
      %v3565 = vrot.slane %v3564, 4
      %v3566 = vadd.f32 %v3564, %v3565
      %v3567 = vrot.slane %v3566, 2
      %v3568 = vadd.f32 %v3566, %v3567
      %v3569 = vrot.slane %v3568, 1
      %v3570 = vadd.f32 %v3568, %v3569
      %v3571 = vadd.f32 %v3509, %v3511
      %v3572 = vrot.slane %v3571, 4
      %v3573 = vadd.f32 %v3571, %v3572
      %v3574 = vrot.slane %v3573, 2
      %v3575 = vadd.f32 %v3573, %v3574
      %v3576 = vrot.slane %v3575, 1
      %v3577 = vadd.f32 %v3575, %v3576
      %v3578 = vadd.f32 %v3510, %v3512
      %v3579 = vrot.slane %v3578, 4
      %v3580 = vadd.f32 %v3578, %v3579
      %v3581 = vrot.slane %v3580, 2
      %v3582 = vadd.f32 %v3580, %v3581
      %v3583 = vrot.slane %v3582, 1
      %v3584 = vadd.f32 %v3582, %v3583
      %v3585 = vadd.f32 %v3513, %v3515
      %v3586 = vrot.slane %v3585, 4
      %v3587 = vadd.f32 %v3585, %v3586
      %v3588 = vrot.slane %v3587, 2
      %v3589 = vadd.f32 %v3587, %v3588
      %v3590 = vrot.slane %v3589, 1
      %v3591 = vadd.f32 %v3589, %v3590
      %v3592 = vadd.f32 %v3514, %v3516
      %v3593 = vrot.slane %v3592, 4
      %v3594 = vadd.f32 %v3592, %v3593
      %v3595 = vrot.slane %v3594, 2
      %v3596 = vadd.f32 %v3594, %v3595
      %v3597 = vrot.slane %v3596, 1
      %v3598 = vadd.f32 %v3596, %v3597
      %v3599 = vadd.f32 %v3517, %v3519
      %v3600 = vrot.slane %v3599, 4
      %v3601 = vadd.f32 %v3599, %v3600
      %v3602 = vrot.slane %v3601, 2
      %v3603 = vadd.f32 %v3601, %v3602
      %v3604 = vrot.slane %v3603, 1
      %v3605 = vadd.f32 %v3603, %v3604
      %v3606 = vadd.f32 %v3518, %v3520
      %v3607 = vrot.slane %v3606, 4
      %v3608 = vadd.f32 %v3606, %v3607
      %v3609 = vrot.slane %v3608, 2
      %v3610 = vadd.f32 %v3608, %v3609
      %v3611 = vrot.slane %v3610, 1
      %v3612 = vadd.f32 %v3610, %v3611
      %v3613 = vadd.f32 %v3521, %v3523
      %v3614 = vrot.slane %v3613, 4
      %v3615 = vadd.f32 %v3613, %v3614
      %v3616 = vrot.slane %v3615, 2
      %v3617 = vadd.f32 %v3615, %v3616
      %v3618 = vrot.slane %v3617, 1
      %v3619 = vadd.f32 %v3617, %v3618
      %v3620 = vadd.f32 %v3522, %v3524
      %v3621 = vrot.slane %v3620, 4
      %v3622 = vadd.f32 %v3620, %v3621
      %v3623 = vrot.slane %v3622, 2
      %v3624 = vadd.f32 %v3622, %v3623
      %v3625 = vrot.slane %v3624, 1
      %v3626 = vadd.f32 %v3624, %v3625
      %v3627 = vadd.f32 %v3525, %v3527
      %v3628 = vrot.slane %v3627, 4
      %v3629 = vadd.f32 %v3627, %v3628
      %v3630 = vrot.slane %v3629, 2
      %v3631 = vadd.f32 %v3629, %v3630
      %v3632 = vrot.slane %v3631, 1
      %v3633 = vadd.f32 %v3631, %v3632
      %v3634 = vadd.f32 %v3526, %v3528
      %v3635 = vrot.slane %v3634, 4
      %v3636 = vadd.f32 %v3634, %v3635
      %v3637 = vrot.slane %v3636, 2
      %v3638 = vadd.f32 %v3636, %v3637
      %v3639 = vrot.slane %v3638, 1
      %v3640 = vadd.f32 %v3638, %v3639
      %v3641 = vadd.f32 %v3295, %v3535
      %v3642 = vadd.f32 %v3302, %v3542
      %v3643 = vadd.f32 %v3309, %v3549
      %v3644 = vadd.f32 %v3316, %v3556
      %v3645 = vadd.f32 %v3323, %v3563
      %v3646 = vadd.f32 %v3330, %v3570
      %v3647 = vadd.f32 %v3337, %v3577
      %v3648 = vadd.f32 %v3344, %v3584
      %v3649 = vadd.f32 %v3351, %v3591
      %v3650 = vadd.f32 %v3358, %v3598
      %v3651 = vadd.f32 %v3365, %v3605
      %v3652 = vadd.f32 %v3372, %v3612
      %v3653 = vadd.f32 %v3379, %v3619
      %v3654 = vadd.f32 %v3386, %v3626
      %v3655 = vadd.f32 %v3393, %v3633
      %v3656 = vadd.f32 %v3400, %v3640
      %3657 = vrot.lane.b32.xlu0 %v3225, 126
      %v3658 = vpop.permute.xlu0 %3657
      %3659 = vrot.lane.b32.xlu0 %v3227, 126
      %v3660 = vpop.permute.xlu0 %3659
      %3661 = vrot.lane.b32.xlu0 %v3229, 126
      %v3662 = vpop.permute.xlu0 %3661
      %3663 = vrot.lane.b32.xlu0 %v3231, 126
      %v3664 = vpop.permute.xlu0 %3663
      %3665 = vrot.lane.b32.xlu0 %v3233, 126
      %v3666 = vpop.permute.xlu0 %3665
      %3667 = vrot.lane.b32.xlu0 %v3235, 126
      %v3668 = vpop.permute.xlu0 %3667
      %3669 = vrot.lane.b32.xlu0 %v3237, 126
      %v3670 = vpop.permute.xlu0 %3669
      %3671 = vrot.lane.b32.xlu0 %v3239, 126
      %v3672 = vpop.permute.xlu0 %3671
      %3673 = vrot.lane.b32.xlu0 %v3241, 126
      %v3674 = vpop.permute.xlu0 %3673
      %3675 = vrot.lane.b32.xlu0 %v3243, 126
      %v3676 = vpop.permute.xlu0 %3675
      %3677 = vrot.lane.b32.xlu0 %v3245, 126
      %v3678 = vpop.permute.xlu0 %3677
      %3679 = vrot.lane.b32.xlu0 %v3247, 126
      %v3680 = vpop.permute.xlu0 %3679
      %3681 = vrot.lane.b32.xlu0 %v3249, 126
      %v3682 = vpop.permute.xlu0 %3681
      %3683 = vrot.lane.b32.xlu0 %v3251, 126
      %v3684 = vpop.permute.xlu0 %3683
      %3685 = vrot.lane.b32.xlu0 %v3253, 126
      %v3686 = vpop.permute.xlu0 %3685
      %3687 = vrot.lane.b32.xlu0 %v3255, 126
      %v3688 = vpop.permute.xlu0 %3687
      %3689 = vrot.lane.b32.xlu0 %v3226, 126
      %v3690 = vpop.permute.xlu0 %3689
      %3691 = vrot.lane.b32.xlu0 %v3228, 126
      %v3692 = vpop.permute.xlu0 %3691
      %3693 = vrot.lane.b32.xlu0 %v3230, 126
      %v3694 = vpop.permute.xlu0 %3693
      %3695 = vrot.lane.b32.xlu0 %v3232, 126
      %v3696 = vpop.permute.xlu0 %3695
      %3697 = vrot.lane.b32.xlu0 %v3234, 126
      %v3698 = vpop.permute.xlu0 %3697
      %3699 = vrot.lane.b32.xlu0 %v3236, 126
      %v3700 = vpop.permute.xlu0 %3699
      %3701 = vrot.lane.b32.xlu0 %v3238, 126
      %v3702 = vpop.permute.xlu0 %3701
      %3703 = vrot.lane.b32.xlu0 %v3240, 126
      %v3704 = vpop.permute.xlu0 %3703
      %3705 = vrot.lane.b32.xlu0 %v3242, 126
      %v3706 = vpop.permute.xlu0 %3705
      %3707 = vrot.lane.b32.xlu0 %v3244, 126
      %v3708 = vpop.permute.xlu0 %3707
      %3709 = vrot.lane.b32.xlu0 %v3246, 126
      %v3710 = vpop.permute.xlu0 %3709
      %3711 = vrot.lane.b32.xlu0 %v3248, 126
      %v3712 = vpop.permute.xlu0 %3711
      %3713 = vrot.lane.b32.xlu0 %v3250, 126
      %v3714 = vpop.permute.xlu0 %3713
      %3715 = vrot.lane.b32.xlu0 %v3252, 126
      %v3716 = vpop.permute.xlu0 %3715
      %3717 = vrot.lane.b32.xlu0 %v3254, 126
      %v3718 = vpop.permute.xlu0 %3717
      %3719 = vrot.lane.b32.xlu0 %v3256, 126
      %v3720 = vpop.permute.xlu0 %3719
      %v3721 = vsel %vm1011, %v3658, %v3690
      %v3722 = vsel %vm1011, %v3660, %v3692
      %v3723 = vsel %vm1011, %v3662, %v3694
      %v3724 = vsel %vm1011, %v3664, %v3696
      %v3725 = vsel %vm1011, %v3666, %v3698
      %v3726 = vsel %vm1011, %v3668, %v3700
      %v3727 = vsel %vm1011, %v3670, %v3702
      %v3728 = vsel %vm1011, %v3672, %v3704
      %v3729 = vsel %vm1011, %v3674, %v3706
      %v3730 = vsel %vm1011, %v3676, %v3708
      %v3731 = vsel %vm1011, %v3678, %v3710
      %v3732 = vsel %vm1011, %v3680, %v3712
      %v3733 = vsel %vm1011, %v3682, %v3714
      %v3734 = vsel %vm1011, %v3684, %v3716
      %v3735 = vsel %vm1011, %v3686, %v3718
      %v3736 = vsel %vm1011, %v3688, %v3720
      %v3737 = vsel %vm1011, %v3690, %v3658
      %v3738 = vsel %vm1011, %v3692, %v3660
      %v3739 = vsel %vm1011, %v3694, %v3662
      %v3740 = vsel %vm1011, %v3696, %v3664
      %v3741 = vsel %vm1011, %v3698, %v3666
      %v3742 = vsel %vm1011, %v3700, %v3668
      %v3743 = vsel %vm1011, %v3702, %v3670
      %v3744 = vsel %vm1011, %v3704, %v3672
      %v3745 = vsel %vm1011, %v3706, %v3674
      %v3746 = vsel %vm1011, %v3708, %v3676
      %v3747 = vsel %vm1011, %v3710, %v3678
      %v3748 = vsel %vm1011, %v3712, %v3680
      %v3749 = vsel %vm1011, %v3714, %v3682
      %v3750 = vsel %vm1011, %v3716, %v3684
      %v3751 = vsel %vm1011, %v3718, %v3686
      %v3752 = vsel %vm1011, %v3720, %v3688
      %v3753 = vmul.f32 %v2240, %v3721
      %v3754 = vmul.f32 %v2240, %v3737
      %v3755 = vmul.f32 %v2245, %v3722
      %v3756 = vmul.f32 %v2245, %v3738
      %v3757 = vmul.f32 %v2250, %v3723
      %v3758 = vmul.f32 %v2250, %v3739
      %v3759 = vmul.f32 %v2255, %v3724
      %v3760 = vmul.f32 %v2255, %v3740
      %v3761 = vmul.f32 %v2260, %v3725
      %v3762 = vmul.f32 %v2260, %v3741
      %v3763 = vmul.f32 %v2265, %v3726
      %v3764 = vmul.f32 %v2265, %v3742
      %v3765 = vmul.f32 %v2270, %v3727
      %v3766 = vmul.f32 %v2270, %v3743
      %v3767 = vmul.f32 %v2275, %v3728
      %v3768 = vmul.f32 %v2275, %v3744
      %v3769 = vmul.f32 %v2280, %v3729
      %v3770 = vmul.f32 %v2280, %v3745
      %v3771 = vmul.f32 %v2285, %v3730
      %v3772 = vmul.f32 %v2285, %v3746
      %v3773 = vmul.f32 %v2290, %v3731
      %v3774 = vmul.f32 %v2290, %v3747
      %v3775 = vmul.f32 %v2295, %v3732
      %v3776 = vmul.f32 %v2295, %v3748
      %v3777 = vmul.f32 %v2300, %v3733
      %v3778 = vmul.f32 %v2300, %v3749
      %v3779 = vmul.f32 %v2305, %v3734
      %v3780 = vmul.f32 %v2305, %v3750
      %v3781 = vmul.f32 %v2310, %v3735
      %v3782 = vmul.f32 %v2310, %v3751
      %v3783 = vmul.f32 %v2315, %v3736
      %v3784 = vmul.f32 %v2315, %v3752
      %v3785 = vadd.f32 %v3753, %v3755
      %v3786 = vrot.slane %v3785, 4
      %v3787 = vadd.f32 %v3785, %v3786
      %v3788 = vrot.slane %v3787, 2
      %v3789 = vadd.f32 %v3787, %v3788
      %v3790 = vrot.slane %v3789, 1
      %v3791 = vadd.f32 %v3789, %v3790
      %v3792 = vadd.f32 %v3754, %v3756
      %v3793 = vrot.slane %v3792, 4
      %v3794 = vadd.f32 %v3792, %v3793
      %v3795 = vrot.slane %v3794, 2
      %v3796 = vadd.f32 %v3794, %v3795
      %v3797 = vrot.slane %v3796, 1
      %v3798 = vadd.f32 %v3796, %v3797
      %v3799 = vadd.f32 %v3757, %v3759
      %v3800 = vrot.slane %v3799, 4
      %v3801 = vadd.f32 %v3799, %v3800
      %v3802 = vrot.slane %v3801, 2
      %v3803 = vadd.f32 %v3801, %v3802
      %v3804 = vrot.slane %v3803, 1
      %v3805 = vadd.f32 %v3803, %v3804
      %v3806 = vadd.f32 %v3758, %v3760
      %v3807 = vrot.slane %v3806, 4
      %v3808 = vadd.f32 %v3806, %v3807
      %v3809 = vrot.slane %v3808, 2
      %v3810 = vadd.f32 %v3808, %v3809
      %v3811 = vrot.slane %v3810, 1
      %v3812 = vadd.f32 %v3810, %v3811
      %v3813 = vadd.f32 %v3761, %v3763
      %v3814 = vrot.slane %v3813, 4
      %v3815 = vadd.f32 %v3813, %v3814
      %v3816 = vrot.slane %v3815, 2
      %v3817 = vadd.f32 %v3815, %v3816
      %v3818 = vrot.slane %v3817, 1
      %v3819 = vadd.f32 %v3817, %v3818
      %v3820 = vadd.f32 %v3762, %v3764
      %v3821 = vrot.slane %v3820, 4
      %v3822 = vadd.f32 %v3820, %v3821
      %v3823 = vrot.slane %v3822, 2
      %v3824 = vadd.f32 %v3822, %v3823
      %v3825 = vrot.slane %v3824, 1
      %v3826 = vadd.f32 %v3824, %v3825
      %v3827 = vadd.f32 %v3765, %v3767
      %v3828 = vrot.slane %v3827, 4
      %v3829 = vadd.f32 %v3827, %v3828
      %v3830 = vrot.slane %v3829, 2
      %v3831 = vadd.f32 %v3829, %v3830
      %v3832 = vrot.slane %v3831, 1
      %v3833 = vadd.f32 %v3831, %v3832
      %v3834 = vadd.f32 %v3766, %v3768
      %v3835 = vrot.slane %v3834, 4
      %v3836 = vadd.f32 %v3834, %v3835
      %v3837 = vrot.slane %v3836, 2
      %v3838 = vadd.f32 %v3836, %v3837
      %v3839 = vrot.slane %v3838, 1
      %v3840 = vadd.f32 %v3838, %v3839
      %v3841 = vadd.f32 %v3769, %v3771
      %v3842 = vrot.slane %v3841, 4
      %v3843 = vadd.f32 %v3841, %v3842
      %v3844 = vrot.slane %v3843, 2
      %v3845 = vadd.f32 %v3843, %v3844
      %v3846 = vrot.slane %v3845, 1
      %v3847 = vadd.f32 %v3845, %v3846
      %v3848 = vadd.f32 %v3770, %v3772
      %v3849 = vrot.slane %v3848, 4
      %v3850 = vadd.f32 %v3848, %v3849
      %v3851 = vrot.slane %v3850, 2
      %v3852 = vadd.f32 %v3850, %v3851
      %v3853 = vrot.slane %v3852, 1
      %v3854 = vadd.f32 %v3852, %v3853
      %v3855 = vadd.f32 %v3773, %v3775
      %v3856 = vrot.slane %v3855, 4
      %v3857 = vadd.f32 %v3855, %v3856
      %v3858 = vrot.slane %v3857, 2
      %v3859 = vadd.f32 %v3857, %v3858
      %v3860 = vrot.slane %v3859, 1
      %v3861 = vadd.f32 %v3859, %v3860
      %v3862 = vadd.f32 %v3774, %v3776
      %v3863 = vrot.slane %v3862, 4
      %v3864 = vadd.f32 %v3862, %v3863
      %v3865 = vrot.slane %v3864, 2
      %v3866 = vadd.f32 %v3864, %v3865
      %v3867 = vrot.slane %v3866, 1
      %v3868 = vadd.f32 %v3866, %v3867
      %v3869 = vadd.f32 %v3777, %v3779
      %v3870 = vrot.slane %v3869, 4
      %v3871 = vadd.f32 %v3869, %v3870
      %v3872 = vrot.slane %v3871, 2
      %v3873 = vadd.f32 %v3871, %v3872
      %v3874 = vrot.slane %v3873, 1
      %v3875 = vadd.f32 %v3873, %v3874
      %v3876 = vadd.f32 %v3778, %v3780
      %v3877 = vrot.slane %v3876, 4
      %v3878 = vadd.f32 %v3876, %v3877
      %v3879 = vrot.slane %v3878, 2
      %v3880 = vadd.f32 %v3878, %v3879
      %v3881 = vrot.slane %v3880, 1
      %v3882 = vadd.f32 %v3880, %v3881
      %v3883 = vadd.f32 %v3781, %v3783
      %v3884 = vrot.slane %v3883, 4
      %v3885 = vadd.f32 %v3883, %v3884
      %v3886 = vrot.slane %v3885, 2
      %v3887 = vadd.f32 %v3885, %v3886
      %v3888 = vrot.slane %v3887, 1
      %v3889 = vadd.f32 %v3887, %v3888
      %v3890 = vadd.f32 %v3782, %v3784
      %v3891 = vrot.slane %v3890, 4
      %v3892 = vadd.f32 %v3890, %v3891
      %v3893 = vrot.slane %v3892, 2
      %v3894 = vadd.f32 %v3892, %v3893
      %v3895 = vrot.slane %v3894, 1
      %v3896 = vadd.f32 %v3894, %v3895
      %v3897 = vadd.f32 %v3641, %v3791
      %v3898 = vadd.f32 %v3642, %v3798
      %v3899 = vadd.f32 %v3643, %v3805
      %v3900 = vadd.f32 %v3644, %v3812
      %v3901 = vadd.f32 %v3645, %v3819
      %v3902 = vadd.f32 %v3646, %v3826
      %v3903 = vadd.f32 %v3647, %v3833
      %v3904 = vadd.f32 %v3648, %v3840
      %v3905 = vadd.f32 %v3649, %v3847
      %v3906 = vadd.f32 %v3650, %v3854
      %v3907 = vadd.f32 %v3651, %v3861
      %v3908 = vadd.f32 %v3652, %v3868
      %v3909 = vadd.f32 %v3653, %v3875
      %v3910 = vadd.f32 %v3654, %v3882
      %v3911 = vadd.f32 %v3655, %v3889
      %v3912 = vadd.f32 %v3656, %v3896
      %v3913 = vadd.f32 %v3897, %v2481
      %v3914 = vadd.f32 %v3898, %v2481
      %v3915 = vadd.f32 %v3899, %v2482
      %v3916 = vadd.f32 %v3900, %v2482
      %v3917 = vadd.f32 %v3901, %v2483
      %v3918 = vadd.f32 %v3902, %v2483
      %v3919 = vadd.f32 %v3903, %v2484
      %v3920 = vadd.f32 %v3904, %v2484
      %v3921 = vadd.f32 %v3905, %v2485
      %v3922 = vadd.f32 %v3906, %v2485
      %v3923 = vadd.f32 %v3907, %v2486
      %v3924 = vadd.f32 %v3908, %v2486
      %v3925 = vadd.f32 %v3909, %v2487
      %v3926 = vadd.f32 %v3910, %v2487
      %v3927 = vadd.f32 %v3911, %v2488
      %v3928 = vadd.f32 %v3912, %v2488
      %vm3929 = vcmp.gt.f32.partialorder %v3913, 0.0
      %vm3930 = vcmp.gt.f32.partialorder %v3914, 0.0
      %vm3931 = vcmp.gt.f32.partialorder %v3915, 0.0
      %vm3932 = vcmp.gt.f32.partialorder %v3916, 0.0
      %vm3933 = vcmp.gt.f32.partialorder %v3917, 0.0
      %vm3934 = vcmp.gt.f32.partialorder %v3918, 0.0
      %vm3935 = vcmp.gt.f32.partialorder %v3919, 0.0
      %vm3936 = vcmp.gt.f32.partialorder %v3920, 0.0
      %vm3937 = vcmp.gt.f32.partialorder %v3921, 0.0
      %vm3938 = vcmp.gt.f32.partialorder %v3922, 0.0
      %vm3939 = vcmp.gt.f32.partialorder %v3923, 0.0
      %vm3940 = vcmp.gt.f32.partialorder %v3924, 0.0
      %vm3941 = vcmp.gt.f32.partialorder %v3925, 0.0
      %vm3942 = vcmp.gt.f32.partialorder %v3926, 0.0
      %vm3943 = vcmp.gt.f32.partialorder %v3927, 0.0
      %vm3944 = vcmp.gt.f32.partialorder %v3928, 0.0
      %v3945 = vmul.f32 %v3913, 0.01
      %v3946 = vmul.f32 %v3914, 0.01
      %v3947 = vmul.f32 %v3915, 0.01
      %v3948 = vmul.f32 %v3916, 0.01
      %v3949 = vmul.f32 %v3917, 0.01
      %v3950 = vmul.f32 %v3918, 0.01
      %v3951 = vmul.f32 %v3919, 0.01
      %v3952 = vmul.f32 %v3920, 0.01
      %v3953 = vmul.f32 %v3921, 0.01
      %v3954 = vmul.f32 %v3922, 0.01
      %v3955 = vmul.f32 %v3923, 0.01
      %v3956 = vmul.f32 %v3924, 0.01
      %v3957 = vmul.f32 %v3925, 0.01
      %v3958 = vmul.f32 %v3926, 0.01
      %v3959 = vmul.f32 %v3927, 0.01
      %v3960 = vmul.f32 %v3928, 0.01
      %v3961 = vsel %vm3929, %v3913, %v3945
      %v3962 = vsel %vm3930, %v3914, %v3946
      %v3963 = vsel %vm3931, %v3915, %v3947
      %v3964 = vsel %vm3932, %v3916, %v3948
      %v3965 = vsel %vm3933, %v3917, %v3949
      %v3966 = vsel %vm3934, %v3918, %v3950
      %v3967 = vsel %vm3935, %v3919, %v3951
      %v3968 = vsel %vm3936, %v3920, %v3952
      %v3969 = vsel %vm3937, %v3921, %v3953
      %v3970 = vsel %vm3938, %v3922, %v3954
      %v3971 = vsel %vm3939, %v3923, %v3955
      %v3972 = vsel %vm3940, %v3924, %v3956
      %v3973 = vsel %vm3941, %v3925, %v3957
      %v3974 = vsel %vm3942, %v3926, %v3958
      %v3975 = vsel %vm3943, %v3927, %v3959
      %v3976 = vsel %vm3944, %v3928, %v3960
      %v3993 = vrot.slane %v2547, 7
      %vm3994 = vcmask 1041409
      %v3995 = vsel %vm3994, %v3993, %v2545
      %v3996 = vrot.slane %v2549, 6
      %vm3997 = vcmask 1042434
      %v3998 = vsel %vm3997, %v3996, %v3995
      %v3999 = vrot.slane %v2551, 5
      %vm4000 = vcmask 1043459
      %v4001 = vsel %vm4000, %v3999, %v3998
      %v4002 = vrot.slane %v2553, 4
      %vm4003 = vcmask 1044484
      %v4004 = vsel %vm4003, %v4002, %v4001
      %v4005 = vrot.slane %v2555, 3
      %vm4006 = vcmask 1045509
      %v4007 = vsel %vm4006, %v4005, %v4004
      %v4008 = vrot.slane %v2557, 2
      %vm4009 = vcmask 1046534
      %v4010 = vsel %vm4009, %v4008, %v4007
      %v4011 = vrot.slane %v2559, 1
      %vm4012 = vcmask 1047559
      %v4013 = vsel %vm4012, %v4011, %v4010
      %v4014 = vrot.slane %v2548, 7
      %v4015 = vsel %vm3994, %v4014, %v2546
      %v4016 = vrot.slane %v2550, 6
      %v4017 = vsel %vm3997, %v4016, %v4015
      %v4018 = vrot.slane %v2552, 5
      %v4019 = vsel %vm4000, %v4018, %v4017
      %v4020 = vrot.slane %v2554, 4
      %v4021 = vsel %vm4003, %v4020, %v4019
      %v4022 = vrot.slane %v2556, 3
      %v4023 = vsel %vm4006, %v4022, %v4021
      %v4024 = vrot.slane %v2558, 2
      %v4025 = vsel %vm4009, %v4024, %v4023
      %v4026 = vrot.slane %v2560, 1
      %v4027 = vsel %vm4012, %v4026, %v4025
      %v4046 = vrot.slane %v3963, 7
      %v4047 = vsel %vm3994, %v4046, %v3961
      %v4048 = vrot.slane %v3965, 6
      %v4049 = vsel %vm3997, %v4048, %v4047
      %v4050 = vrot.slane %v3967, 5
      %v4051 = vsel %vm4000, %v4050, %v4049
      %v4052 = vrot.slane %v3969, 4
      %v4053 = vsel %vm4003, %v4052, %v4051
      %v4054 = vrot.slane %v3971, 3
      %v4055 = vsel %vm4006, %v4054, %v4053
      %v4056 = vrot.slane %v3973, 2
      %v4057 = vsel %vm4009, %v4056, %v4055
      %v4058 = vrot.slane %v3975, 1
      %v4059 = vsel %vm4012, %v4058, %v4057
      %v4060 = vrot.slane %v3964, 7
      %v4061 = vsel %vm3994, %v4060, %v3962
      %v4062 = vrot.slane %v3966, 6
      %v4063 = vsel %vm3997, %v4062, %v4061
      %v4064 = vrot.slane %v3968, 5
      %v4065 = vsel %vm4000, %v4064, %v4063
      %v4066 = vrot.slane %v3970, 4
      %v4067 = vsel %vm4003, %v4066, %v4065
      %v4068 = vrot.slane %v3972, 3
      %v4069 = vsel %vm4006, %v4068, %v4067
      %v4070 = vrot.slane %v3974, 2
      %v4071 = vsel %vm4009, %v4070, %v4069
      %v4072 = vrot.slane %v3976, 1
      %v4073 = vsel %vm4012, %v4072, %v4071
      %v4076 = vpack.c.bf16 %v4059, %v4013
      %v4077 = vpack.c.bf16 %v4073, %v4027
      %v4078 = vld [vmem:[%s6] sm:$0xff]
      %v4079 = vld [vmem:[%s6 + $0x8] sm:$0xff]
      %v4080 = vld [vmem:[%s6 + $0x10] sm:$0xff]
      %v4081 = vld [vmem:[%s6 + $0x18] sm:$0xff]
      %v4082 = vld [vmem:[%s6 + $0x20] sm:$0xff]
      %v4083 = vld [vmem:[%s6 + $0x28] sm:$0xff]
      %v4084 = vld [vmem:[%s6 + $0x30] sm:$0xff]
      %v4085 = vld [vmem:[%s6 + $0x38] sm:$0xff]
      %v4086 = vld [vmem:[%s6 + $0x40] sm:$0xff]
      %v4087 = vld [vmem:[%s6 + $0x48] sm:$0xff]
      %v4088 = vld [vmem:[%s6 + $0x50] sm:$0xff]
      %v4089 = vld [vmem:[%s6 + $0x58] sm:$0xff]
      %v4090 = vld [vmem:[%s6 + $0x60] sm:$0xff]
      %v4091 = vld [vmem:[%s6 + $0x68] sm:$0xff]
      %v4092 = vld [vmem:[%s6 + $0x70] sm:$0xff]
      %v4093 = vld [vmem:[%s6 + $0x78] sm:$0xff]
      %v4094 = vld [vmem:[%s6 + $0x80] sm:$0xff]
      %v4095 = vld [vmem:[%s6 + $0x88] sm:$0xff]
      %v4096 = vld [vmem:[%s6 + $0x90] sm:$0xff]
      %v4097 = vld [vmem:[%s6 + $0x98] sm:$0xff]
      %v4098 = vld [vmem:[%s6 + $0xa0] sm:$0xff]
      %v4099 = vld [vmem:[%s6 + $0xa8] sm:$0xff]
      %v4100 = vld [vmem:[%s6 + $0xb0] sm:$0xff]
      %v4101 = vld [vmem:[%s6 + $0xb8] sm:$0xff]
      %v4102 = vld [vmem:[%s6 + $0xc0] sm:$0xff]
      %v4103 = vld [vmem:[%s6 + $0xc8] sm:$0xff]
      %v4104 = vld [vmem:[%s6 + $0xd0] sm:$0xff]
      %v4105 = vld [vmem:[%s6 + $0xd8] sm:$0xff]
      %v4106 = vld [vmem:[%s6 + $0xe0] sm:$0xff]
      %v4107 = vld [vmem:[%s6 + $0xe8] sm:$0xff]
      %v4108 = vld [vmem:[%s6 + $0xf0] sm:$0xff]
      %v4109 = vld [vmem:[%s6 + $0xf8] sm:$0xff]
      %v4142 = vunpack.c.l.b16 %v4078
      %v4143 = vunpack.c.h.b16 %v4078
      %v4144 = vunpack.c.l.b16 %v4079
      %v4145 = vunpack.c.h.b16 %v4079
      %v4146 = vunpack.c.l.b16 %v4080
      %v4147 = vunpack.c.h.b16 %v4080
      %v4148 = vunpack.c.l.b16 %v4081
      %v4149 = vunpack.c.h.b16 %v4081
      %v4150 = vunpack.c.l.b16 %v4082
      %v4151 = vunpack.c.h.b16 %v4082
      %v4152 = vunpack.c.l.b16 %v4083
      %v4153 = vunpack.c.h.b16 %v4083
      %v4154 = vunpack.c.l.b16 %v4084
      %v4155 = vunpack.c.h.b16 %v4084
      %v4156 = vunpack.c.l.b16 %v4085
      %v4157 = vunpack.c.h.b16 %v4085
      %v4158 = vunpack.c.l.b16 %v4086
      %v4159 = vunpack.c.h.b16 %v4086
      %v4160 = vunpack.c.l.b16 %v4087
      %v4161 = vunpack.c.h.b16 %v4087
      %v4162 = vunpack.c.l.b16 %v4088
      %v4163 = vunpack.c.h.b16 %v4088
      %v4164 = vunpack.c.l.b16 %v4089
      %v4165 = vunpack.c.h.b16 %v4089
      %v4166 = vunpack.c.l.b16 %v4090
      %v4167 = vunpack.c.h.b16 %v4090
      %v4168 = vunpack.c.l.b16 %v4091
      %v4169 = vunpack.c.h.b16 %v4091
      %v4170 = vunpack.c.l.b16 %v4092
      %v4171 = vunpack.c.h.b16 %v4092
      %v4172 = vunpack.c.l.b16 %v4093
      %v4173 = vunpack.c.h.b16 %v4093
      %v4174 = vunpack.c.l.b16 %v4094
      %v4175 = vunpack.c.h.b16 %v4094
      %v4176 = vunpack.c.l.b16 %v4095
      %v4177 = vunpack.c.h.b16 %v4095
      %v4178 = vunpack.c.l.b16 %v4096
      %v4179 = vunpack.c.h.b16 %v4096
      %v4180 = vunpack.c.l.b16 %v4097
      %v4181 = vunpack.c.h.b16 %v4097
      %v4182 = vunpack.c.l.b16 %v4098
      %v4183 = vunpack.c.h.b16 %v4098
      %v4184 = vunpack.c.l.b16 %v4099
      %v4185 = vunpack.c.h.b16 %v4099
      %v4186 = vunpack.c.l.b16 %v4100
      %v4187 = vunpack.c.h.b16 %v4100
      %v4188 = vunpack.c.l.b16 %v4101
      %v4189 = vunpack.c.h.b16 %v4101
      %v4190 = vunpack.c.l.b16 %v4102
      %v4191 = vunpack.c.h.b16 %v4102
      %v4192 = vunpack.c.l.b16 %v4103
      %v4193 = vunpack.c.h.b16 %v4103
      %v4194 = vunpack.c.l.b16 %v4104
      %v4195 = vunpack.c.h.b16 %v4104
      %v4196 = vunpack.c.l.b16 %v4105
      %v4197 = vunpack.c.h.b16 %v4105
      %v4198 = vunpack.c.l.b16 %v4106
      %v4199 = vunpack.c.h.b16 %v4106
      %v4200 = vunpack.c.l.b16 %v4107
      %v4201 = vunpack.c.h.b16 %v4107
      %v4202 = vunpack.c.l.b16 %v4108
      %v4203 = vunpack.c.h.b16 %v4108
      %v4204 = vunpack.c.l.b16 %v4109
      %v4205 = vunpack.c.h.b16 %v4109
      %v4206 = vpack.c.b16 %v4144, %v4142
      %v4207 = vpack.c.b16 %v4145, %v4143
      %v4208 = vpack.c.b16 %v4148, %v4146
      %v4209 = vpack.c.b16 %v4149, %v4147
      %v4210 = vpack.c.b16 %v4152, %v4150
      %v4211 = vpack.c.b16 %v4153, %v4151
      %v4212 = vpack.c.b16 %v4156, %v4154
      %v4213 = vpack.c.b16 %v4157, %v4155
      %v4214 = vpack.c.b16 %v4160, %v4158
      %v4215 = vpack.c.b16 %v4161, %v4159
      %v4216 = vpack.c.b16 %v4164, %v4162
      %v4217 = vpack.c.b16 %v4165, %v4163
      %v4218 = vpack.c.b16 %v4168, %v4166
      %v4219 = vpack.c.b16 %v4169, %v4167
      %v4220 = vpack.c.b16 %v4172, %v4170
      %v4221 = vpack.c.b16 %v4173, %v4171
      %v4222 = vpack.c.b16 %v4176, %v4174
      %v4223 = vpack.c.b16 %v4177, %v4175
      %v4224 = vpack.c.b16 %v4180, %v4178
      %v4225 = vpack.c.b16 %v4181, %v4179
      %v4226 = vpack.c.b16 %v4184, %v4182
      %v4227 = vpack.c.b16 %v4185, %v4183
      %v4228 = vpack.c.b16 %v4188, %v4186
      %v4229 = vpack.c.b16 %v4189, %v4187
      %v4230 = vpack.c.b16 %v4192, %v4190
      %v4231 = vpack.c.b16 %v4193, %v4191
      %v4232 = vpack.c.b16 %v4196, %v4194
      %v4233 = vpack.c.b16 %v4197, %v4195
      %v4234 = vpack.c.b16 %v4200, %v4198
      %v4235 = vpack.c.b16 %v4201, %v4199
      %v4236 = vpack.c.b16 %v4204, %v4202
      %v4237 = vpack.c.b16 %v4205, %v4203
      %4270 = vmatprep.subr.bf16.mxu0 %v4207
      %4271 = vmatpush1.bf16.msra.mxu0 %v4206
      %4272 = vmatprep.subr.bf16.mxu0 %v4209
      %4273 = vmatpush1.bf16.msra.mxu0 %v4208
      %4274 = vmatprep.subr.bf16.mxu0 %v4211
      %4275 = vmatpush1.bf16.msra.mxu0 %v4210
      %4276 = vmatprep.subr.bf16.mxu0 %v4213
      %4277 = vmatpush1.bf16.msra.mxu0 %v4212
      %4278 = vmatprep.subr.bf16.mxu0 %v4215
      %4279 = vmatpush1.bf16.msra.mxu0 %v4214
      %4280 = vmatprep.subr.bf16.mxu0 %v4217
      %4281 = vmatpush1.bf16.msra.mxu0 %v4216
      %4282 = vmatprep.subr.bf16.mxu0 %v4219
      %4283 = vmatpush1.bf16.msra.mxu0 %v4218
      %4284 = vmatprep.subr.bf16.mxu0 %v4221
      %4285 = vmatpush1.bf16.msra.mxu0 %v4220
      %4286 = vmatprep.subr.bf16.mxu0 %v4223
      %4287 = vmatpush1.bf16.msra.mxu0 %v4222
      %4288 = vmatprep.subr.bf16.mxu0 %v4225
      %4289 = vmatpush1.bf16.msra.mxu0 %v4224
      %4290 = vmatprep.subr.bf16.mxu0 %v4227
      %4291 = vmatpush1.bf16.msra.mxu0 %v4226
      %4292 = vmatprep.subr.bf16.mxu0 %v4229
      %4293 = vmatpush1.bf16.msra.mxu0 %v4228
      %4294 = vmatprep.subr.bf16.mxu0 %v4231
      %4295 = vmatpush1.bf16.msra.mxu0 %v4230
      %4296 = vmatprep.subr.bf16.mxu0 %v4233
      %4297 = vmatpush1.bf16.msra.mxu0 %v4232
      %4298 = vmatprep.subr.bf16.mxu0 %v4235
      %4299 = vmatpush1.bf16.msra.mxu0 %v4234
      %4300 = vmatprep.subr.bf16.mxu0 %v4237
      %4301 = vmatpush1.bf16.msra.mxu0 %v4236
      %4302 = vmatprep.mubr.bf16.mxu0 %v4077
      %4303 = vmatmul.mubr.bf16.gmra.mrb[0].mxu0 %v4076
      %v4304 = vpop.f32.mrb[0].mxu0
      %v4305 = vadd.f32 0.0, %v4304
      %v4306 = vpop.f32.mrb[0].mxu0
      %v4307 = vadd.f32 0.0, %v4306
      %v4308 = vpop.f32.mrb[0].mxu0
      %v4309 = vadd.f32 0.0, %v4308
      %v4310 = vpop.f32.mrb[0].mxu0
      %v4311 = vadd.f32 0.0, %v4310
      %4312 = vdwg.mxu0
      %v4313 = vpack.c.bf16 %v443, %v441
      %v4314 = vpack.c.bf16 %v444, %v442
      %v4315 = vld [vmem:[%s8] sm:$0xff]
      %v4316 = vld [vmem:[%s8 + $0x8] sm:$0xff]
      %v4317 = vld [vmem:[%s8 + $0x10] sm:$0xff]
      %v4318 = vld [vmem:[%s8 + $0x18] sm:$0xff]
      %v4319 = vld [vmem:[%s8 + $0x20] sm:$0xff]
      %v4320 = vld [vmem:[%s8 + $0x28] sm:$0xff]
      %v4321 = vld [vmem:[%s8 + $0x30] sm:$0xff]
      %v4322 = vld [vmem:[%s8 + $0x38] sm:$0xff]
      %v4323 = vld [vmem:[%s8 + $0x40] sm:$0xff]
      %v4324 = vld [vmem:[%s8 + $0x48] sm:$0xff]
      %v4325 = vld [vmem:[%s8 + $0x50] sm:$0xff]
      %v4326 = vld [vmem:[%s8 + $0x58] sm:$0xff]
      %v4327 = vld [vmem:[%s8 + $0x60] sm:$0xff]
      %v4328 = vld [vmem:[%s8 + $0x68] sm:$0xff]
      %v4329 = vld [vmem:[%s8 + $0x70] sm:$0xff]
      %v4330 = vld [vmem:[%s8 + $0x78] sm:$0xff]
      %v4331 = vld [vmem:[%s8 + $0x80] sm:$0xff]
      %v4332 = vld [vmem:[%s8 + $0x88] sm:$0xff]
      %v4333 = vld [vmem:[%s8 + $0x90] sm:$0xff]
      %v4334 = vld [vmem:[%s8 + $0x98] sm:$0xff]
      %v4335 = vld [vmem:[%s8 + $0xa0] sm:$0xff]
      %v4336 = vld [vmem:[%s8 + $0xa8] sm:$0xff]
      %v4337 = vld [vmem:[%s8 + $0xb0] sm:$0xff]
      %v4338 = vld [vmem:[%s8 + $0xb8] sm:$0xff]
      %v4339 = vld [vmem:[%s8 + $0xc0] sm:$0xff]
      %v4340 = vld [vmem:[%s8 + $0xc8] sm:$0xff]
      %v4341 = vld [vmem:[%s8 + $0xd0] sm:$0xff]
      %v4342 = vld [vmem:[%s8 + $0xd8] sm:$0xff]
      %v4343 = vld [vmem:[%s8 + $0xe0] sm:$0xff]
      %v4344 = vld [vmem:[%s8 + $0xe8] sm:$0xff]
      %v4345 = vld [vmem:[%s8 + $0xf0] sm:$0xff]
      %v4346 = vld [vmem:[%s8 + $0xf8] sm:$0xff]
      %v4379 = vunpack.c.l.b16 %v4315
      %v4380 = vunpack.c.h.b16 %v4315
      %v4381 = vunpack.c.l.b16 %v4316
      %v4382 = vunpack.c.h.b16 %v4316
      %v4383 = vunpack.c.l.b16 %v4317
      %v4384 = vunpack.c.h.b16 %v4317
      %v4385 = vunpack.c.l.b16 %v4318
      %v4386 = vunpack.c.h.b16 %v4318
      %v4387 = vunpack.c.l.b16 %v4319
      %v4388 = vunpack.c.h.b16 %v4319
      %v4389 = vunpack.c.l.b16 %v4320
      %v4390 = vunpack.c.h.b16 %v4320
      %v4391 = vunpack.c.l.b16 %v4321
      %v4392 = vunpack.c.h.b16 %v4321
      %v4393 = vunpack.c.l.b16 %v4322
      %v4394 = vunpack.c.h.b16 %v4322
      %v4395 = vunpack.c.l.b16 %v4323
      %v4396 = vunpack.c.h.b16 %v4323
      %v4397 = vunpack.c.l.b16 %v4324
      %v4398 = vunpack.c.h.b16 %v4324
      %v4399 = vunpack.c.l.b16 %v4325
      %v4400 = vunpack.c.h.b16 %v4325
      %v4401 = vunpack.c.l.b16 %v4326
      %v4402 = vunpack.c.h.b16 %v4326
      %v4403 = vunpack.c.l.b16 %v4327
      %v4404 = vunpack.c.h.b16 %v4327
      %v4405 = vunpack.c.l.b16 %v4328
      %v4406 = vunpack.c.h.b16 %v4328
      %v4407 = vunpack.c.l.b16 %v4329
      %v4408 = vunpack.c.h.b16 %v4329
      %v4409 = vunpack.c.l.b16 %v4330
      %v4410 = vunpack.c.h.b16 %v4330
      %v4411 = vunpack.c.l.b16 %v4331
      %v4412 = vunpack.c.h.b16 %v4331
      %v4413 = vunpack.c.l.b16 %v4332
      %v4414 = vunpack.c.h.b16 %v4332
      %v4415 = vunpack.c.l.b16 %v4333
      %v4416 = vunpack.c.h.b16 %v4333
      %v4417 = vunpack.c.l.b16 %v4334
      %v4418 = vunpack.c.h.b16 %v4334
      %v4419 = vunpack.c.l.b16 %v4335
      %v4420 = vunpack.c.h.b16 %v4335
      %v4421 = vunpack.c.l.b16 %v4336
      %v4422 = vunpack.c.h.b16 %v4336
      %v4423 = vunpack.c.l.b16 %v4337
      %v4424 = vunpack.c.h.b16 %v4337
      %v4425 = vunpack.c.l.b16 %v4338
      %v4426 = vunpack.c.h.b16 %v4338
      %v4427 = vunpack.c.l.b16 %v4339
      %v4428 = vunpack.c.h.b16 %v4339
      %v4429 = vunpack.c.l.b16 %v4340
      %v4430 = vunpack.c.h.b16 %v4340
      %v4431 = vunpack.c.l.b16 %v4341
      %v4432 = vunpack.c.h.b16 %v4341
      %v4433 = vunpack.c.l.b16 %v4342
      %v4434 = vunpack.c.h.b16 %v4342
      %v4435 = vunpack.c.l.b16 %v4343
      %v4436 = vunpack.c.h.b16 %v4343
      %v4437 = vunpack.c.l.b16 %v4344
      %v4438 = vunpack.c.h.b16 %v4344
      %v4439 = vunpack.c.l.b16 %v4345
      %v4440 = vunpack.c.h.b16 %v4345
      %v4441 = vunpack.c.l.b16 %v4346
      %v4442 = vunpack.c.h.b16 %v4346
      %v4443 = vpack.c.b16 %v4381, %v4379
      %v4444 = vpack.c.b16 %v4382, %v4380
      %v4445 = vpack.c.b16 %v4385, %v4383
      %v4446 = vpack.c.b16 %v4386, %v4384
      %v4447 = vpack.c.b16 %v4389, %v4387
      %v4448 = vpack.c.b16 %v4390, %v4388
      %v4449 = vpack.c.b16 %v4393, %v4391
      %v4450 = vpack.c.b16 %v4394, %v4392
      %v4451 = vpack.c.b16 %v4397, %v4395
      %v4452 = vpack.c.b16 %v4398, %v4396
      %v4453 = vpack.c.b16 %v4401, %v4399
      %v4454 = vpack.c.b16 %v4402, %v4400
      %v4455 = vpack.c.b16 %v4405, %v4403
      %v4456 = vpack.c.b16 %v4406, %v4404
      %v4457 = vpack.c.b16 %v4409, %v4407
      %v4458 = vpack.c.b16 %v4410, %v4408
      %v4459 = vpack.c.b16 %v4413, %v4411
      %v4460 = vpack.c.b16 %v4414, %v4412
      %v4461 = vpack.c.b16 %v4417, %v4415
      %v4462 = vpack.c.b16 %v4418, %v4416
      %v4463 = vpack.c.b16 %v4421, %v4419
      %v4464 = vpack.c.b16 %v4422, %v4420
      %v4465 = vpack.c.b16 %v4425, %v4423
      %v4466 = vpack.c.b16 %v4426, %v4424
      %v4467 = vpack.c.b16 %v4429, %v4427
      %v4468 = vpack.c.b16 %v4430, %v4428
      %v4469 = vpack.c.b16 %v4433, %v4431
      %v4470 = vpack.c.b16 %v4434, %v4432
      %v4471 = vpack.c.b16 %v4437, %v4435
      %v4472 = vpack.c.b16 %v4438, %v4436
      %v4473 = vpack.c.b16 %v4441, %v4439
      %v4474 = vpack.c.b16 %v4442, %v4440
      %4507 = vmatprep.subr.bf16.mxu0 %v4444
      %4508 = vmatpush1.bf16.msra.mxu0 %v4443
      %4509 = vmatprep.subr.bf16.mxu0 %v4446
      %4510 = vmatpush1.bf16.msra.mxu0 %v4445
      %4511 = vmatprep.subr.bf16.mxu0 %v4448
      %4512 = vmatpush1.bf16.msra.mxu0 %v4447
      %4513 = vmatprep.subr.bf16.mxu0 %v4450
      %4514 = vmatpush1.bf16.msra.mxu0 %v4449
      %4515 = vmatprep.subr.bf16.mxu0 %v4452
      %4516 = vmatpush1.bf16.msra.mxu0 %v4451
      %4517 = vmatprep.subr.bf16.mxu0 %v4454
      %4518 = vmatpush1.bf16.msra.mxu0 %v4453
      %4519 = vmatprep.subr.bf16.mxu0 %v4456
      %4520 = vmatpush1.bf16.msra.mxu0 %v4455
      %4521 = vmatprep.subr.bf16.mxu0 %v4458
      %4522 = vmatpush1.bf16.msra.mxu0 %v4457
      %4523 = vmatprep.subr.bf16.mxu0 %v4460
      %4524 = vmatpush1.bf16.msra.mxu0 %v4459
      %4525 = vmatprep.subr.bf16.mxu0 %v4462
      %4526 = vmatpush1.bf16.msra.mxu0 %v4461
      %4527 = vmatprep.subr.bf16.mxu0 %v4464
      %4528 = vmatpush1.bf16.msra.mxu0 %v4463
      %4529 = vmatprep.subr.bf16.mxu0 %v4466
      %4530 = vmatpush1.bf16.msra.mxu0 %v4465
      %4531 = vmatprep.subr.bf16.mxu0 %v4468
      %4532 = vmatpush1.bf16.msra.mxu0 %v4467
      %4533 = vmatprep.subr.bf16.mxu0 %v4470
      %4534 = vmatpush1.bf16.msra.mxu0 %v4469
      %4535 = vmatprep.subr.bf16.mxu0 %v4472
      %4536 = vmatpush1.bf16.msra.mxu0 %v4471
      %4537 = vmatprep.subr.bf16.mxu0 %v4474
      %4538 = vmatpush1.bf16.msra.mxu0 %v4473
      %4539 = vmatprep.mubr.bf16.mxu0 %v4314
      %4540 = vmatmul.mubr.bf16.gmra.mrb[0].mxu0 %v4313
      %v4541 = vpop.f32.mrb[0].mxu0
      %v4542 = vadd.f32 0.0, %v4541
      %v4543 = vpop.f32.mrb[0].mxu0
      %v4544 = vadd.f32 0.0, %v4543
      %v4545 = vpop.f32.mrb[0].mxu0
      %v4546 = vadd.f32 0.0, %v4545
      %v4547 = vpop.f32.mrb[0].mxu0
      %v4548 = vadd.f32 0.0, %v4547
      %4549 = vdwg.mxu0
      %v4554 = vcombine.low %v4305, %v4307
      %v4555 = vcombine.high %v4305, %v4307
      %v4556 = vcombine.low %v4309, %v4311
      %v4557 = vcombine.high %v4309, %v4311
      %v4562 = vcombine.low %v4542, %v4544
      %v4563 = vcombine.high %v4542, %v4544
      %v4564 = vcombine.low %v4546, %v4548
      %v4565 = vcombine.high %v4546, %v4548
      %v4570 = vld [vmem:[%s5] sm:$0xf]
      %4572 = vset.pattern.permute.xlu0 0
      %4573 = vperm.xlu0 %4572, %v4570
      %v4574 = vpop.permute.xlu0 %4573
      %v4576 = vlaneseq
      %v4577 = vshrl.u32 %v4576, 7
      %v4578 = vsub.s32 0, %v4577
      %v4579 = vrot.slane %v4554, %v4578
      %v4580 = vlaneseq
      %v4581 = vshrl.u32 %v4580, 7
      %v4582 = vsub.s32 4, %v4581
      %v4583 = vrot.slane %v4554, %v4582
      %v4584 = vlaneseq
      %v4585 = vshrl.u32 %v4584, 7
      %v4586 = vsub.s32 0, %v4585
      %v4587 = vrot.slane %v4555, %v4586
      %v4588 = vlaneseq
      %v4589 = vshrl.u32 %v4588, 7
      %v4590 = vsub.s32 4, %v4589
      %v4591 = vrot.slane %v4555, %v4590
      %v4592 = vlaneseq
      %v4593 = vshrl.u32 %v4592, 7
      %v4594 = vsub.s32 0, %v4593
      %v4595 = vrot.slane %v4556, %v4594
      %v4596 = vlaneseq
      %v4597 = vshrl.u32 %v4596, 7
      %v4598 = vsub.s32 4, %v4597
      %v4599 = vrot.slane %v4556, %v4598
      %v4600 = vlaneseq
      %v4601 = vshrl.u32 %v4600, 7
      %v4602 = vsub.s32 0, %v4601
      %v4603 = vrot.slane %v4557, %v4602
      %v4604 = vlaneseq
      %v4605 = vshrl.u32 %v4604, 7
      %v4606 = vsub.s32 4, %v4605
      %v4607 = vrot.slane %v4557, %v4606
      %v4616 = vlaneseq
      %v4617 = vshrl.u32 %v4616, 7
      %v4618 = vsub.s32 0, %v4617
      %v4619 = vrot.slane %v4579, %v4618
      %v4620 = vlaneseq
      %v4621 = vshrl.u32 %v4620, 7
      %v4622 = vsub.s32 0, %v4621
      %v4623 = vrot.slane %v4583, %v4622
      %v4624 = vlaneseq
      %v4625 = vshrl.u32 %v4624, 7
      %v4626 = vsub.s32 0, %v4625
      %v4627 = vrot.slane %v4587, %v4626
      %v4628 = vlaneseq
      %v4629 = vshrl.u32 %v4628, 7
      %v4630 = vsub.s32 0, %v4629
      %v4631 = vrot.slane %v4591, %v4630
      %v4632 = vlaneseq
      %v4633 = vshrl.u32 %v4632, 7
      %v4634 = vsub.s32 0, %v4633
      %v4635 = vrot.slane %v4595, %v4634
      %v4636 = vlaneseq
      %v4637 = vshrl.u32 %v4636, 7
      %v4638 = vsub.s32 0, %v4637
      %v4639 = vrot.slane %v4599, %v4638
      %v4640 = vlaneseq
      %v4641 = vshrl.u32 %v4640, 7
      %v4642 = vsub.s32 0, %v4641
      %v4643 = vrot.slane %v4603, %v4642
      %v4644 = vlaneseq
      %v4645 = vshrl.u32 %v4644, 7
      %v4646 = vsub.s32 0, %v4645
      %v4647 = vrot.slane %v4607, %v4646
      %v4648 = vmul.f32 %v4574, %v4619
      %v4649 = vmul.f32 %v4574, %v4623
      %v4650 = vmul.f32 %v4574, %v4627
      %v4651 = vmul.f32 %v4574, %v4631
      %v4652 = vmul.f32 %v4574, %v4635
      %v4653 = vmul.f32 %v4574, %v4639
      %v4654 = vmul.f32 %v4574, %v4643
      %v4655 = vmul.f32 %v4574, %v4647
      %s4656 = scalar_lea.vmem %s5, 4
      %v4657 = vld [vmem:[%s4656] sm:$0xf]
      %4659 = vset.pattern.permute.xlu0 0
      %4660 = vperm.xlu0 %4659, %v4657
      %v4661 = vpop.permute.xlu0 %4660
      %v4663 = vlaneseq
      %v4664 = vshrl.u32 %v4663, 7
      %v4665 = vsub.s32 1, %v4664
      %v4666 = vrot.slane %v4554, %v4665
      %v4667 = vlaneseq
      %v4668 = vshrl.u32 %v4667, 7
      %v4669 = vsub.s32 5, %v4668
      %v4670 = vrot.slane %v4554, %v4669
      %v4671 = vlaneseq
      %v4672 = vshrl.u32 %v4671, 7
      %v4673 = vsub.s32 1, %v4672
      %v4674 = vrot.slane %v4555, %v4673
      %v4675 = vlaneseq
      %v4676 = vshrl.u32 %v4675, 7
      %v4677 = vsub.s32 5, %v4676
      %v4678 = vrot.slane %v4555, %v4677
      %v4679 = vlaneseq
      %v4680 = vshrl.u32 %v4679, 7
      %v4681 = vsub.s32 1, %v4680
      %v4682 = vrot.slane %v4556, %v4681
      %v4683 = vlaneseq
      %v4684 = vshrl.u32 %v4683, 7
      %v4685 = vsub.s32 5, %v4684
      %v4686 = vrot.slane %v4556, %v4685
      %v4687 = vlaneseq
      %v4688 = vshrl.u32 %v4687, 7
      %v4689 = vsub.s32 1, %v4688
      %v4690 = vrot.slane %v4557, %v4689
      %v4691 = vlaneseq
      %v4692 = vshrl.u32 %v4691, 7
      %v4693 = vsub.s32 5, %v4692
      %v4694 = vrot.slane %v4557, %v4693
      %v4703 = vlaneseq
      %v4704 = vshrl.u32 %v4703, 7
      %v4705 = vsub.s32 1, %v4704
      %v4706 = vrot.slane %v4666, %v4705
      %v4707 = vlaneseq
      %v4708 = vshrl.u32 %v4707, 7
      %v4709 = vsub.s32 1, %v4708
      %v4710 = vrot.slane %v4670, %v4709
      %v4711 = vlaneseq
      %v4712 = vshrl.u32 %v4711, 7
      %v4713 = vsub.s32 1, %v4712
      %v4714 = vrot.slane %v4674, %v4713
      %v4715 = vlaneseq
      %v4716 = vshrl.u32 %v4715, 7
      %v4717 = vsub.s32 1, %v4716
      %v4718 = vrot.slane %v4678, %v4717
      %v4719 = vlaneseq
      %v4720 = vshrl.u32 %v4719, 7
      %v4721 = vsub.s32 1, %v4720
      %v4722 = vrot.slane %v4682, %v4721
      %v4723 = vlaneseq
      %v4724 = vshrl.u32 %v4723, 7
      %v4725 = vsub.s32 1, %v4724
      %v4726 = vrot.slane %v4686, %v4725
      %v4727 = vlaneseq
      %v4728 = vshrl.u32 %v4727, 7
      %v4729 = vsub.s32 1, %v4728
      %v4730 = vrot.slane %v4690, %v4729
      %v4731 = vlaneseq
      %v4732 = vshrl.u32 %v4731, 7
      %v4733 = vsub.s32 1, %v4732
      %v4734 = vrot.slane %v4694, %v4733
      %v4735 = vmul.f32 %v4661, %v4706
      %v4736 = vmul.f32 %v4661, %v4710
      %v4737 = vmul.f32 %v4661, %v4714
      %v4738 = vmul.f32 %v4661, %v4718
      %v4739 = vmul.f32 %v4661, %v4722
      %v4740 = vmul.f32 %v4661, %v4726
      %v4741 = vmul.f32 %v4661, %v4730
      %v4742 = vmul.f32 %v4661, %v4734
      %v4743 = vadd.f32 %v4648, %v4735
      %v4744 = vadd.f32 %v4649, %v4736
      %v4745 = vadd.f32 %v4650, %v4737
      %v4746 = vadd.f32 %v4651, %v4738
      %v4747 = vadd.f32 %v4652, %v4739
      %v4748 = vadd.f32 %v4653, %v4740
      %v4749 = vadd.f32 %v4654, %v4741
      %v4750 = vadd.f32 %v4655, %v4742
      %s4751 = scalar_lea.vmem %s5, 8
      %v4752 = vld [vmem:[%s4751] sm:$0xf]
      %4754 = vset.pattern.permute.xlu0 0
      %4755 = vperm.xlu0 %4754, %v4752
      %v4756 = vpop.permute.xlu0 %4755
      %v4758 = vlaneseq
      %v4759 = vshrl.u32 %v4758, 7
      %v4760 = vsub.s32 2, %v4759
      %v4761 = vrot.slane %v4554, %v4760
      %v4762 = vlaneseq
      %v4763 = vshrl.u32 %v4762, 7
      %v4764 = vsub.s32 6, %v4763
      %v4765 = vrot.slane %v4554, %v4764
      %v4766 = vlaneseq
      %v4767 = vshrl.u32 %v4766, 7
      %v4768 = vsub.s32 2, %v4767
      %v4769 = vrot.slane %v4555, %v4768
      %v4770 = vlaneseq
      %v4771 = vshrl.u32 %v4770, 7
      %v4772 = vsub.s32 6, %v4771
      %v4773 = vrot.slane %v4555, %v4772
      %v4774 = vlaneseq
      %v4775 = vshrl.u32 %v4774, 7
      %v4776 = vsub.s32 2, %v4775
      %v4777 = vrot.slane %v4556, %v4776
      %v4778 = vlaneseq
      %v4779 = vshrl.u32 %v4778, 7
      %v4780 = vsub.s32 6, %v4779
      %v4781 = vrot.slane %v4556, %v4780
      %v4782 = vlaneseq
      %v4783 = vshrl.u32 %v4782, 7
      %v4784 = vsub.s32 2, %v4783
      %v4785 = vrot.slane %v4557, %v4784
      %v4786 = vlaneseq
      %v4787 = vshrl.u32 %v4786, 7
      %v4788 = vsub.s32 6, %v4787
      %v4789 = vrot.slane %v4557, %v4788
      %v4798 = vlaneseq
      %v4799 = vshrl.u32 %v4798, 7
      %v4800 = vsub.s32 2, %v4799
      %v4801 = vrot.slane %v4761, %v4800
      %v4802 = vlaneseq
      %v4803 = vshrl.u32 %v4802, 7
      %v4804 = vsub.s32 2, %v4803
      %v4805 = vrot.slane %v4765, %v4804
      %v4806 = vlaneseq
      %v4807 = vshrl.u32 %v4806, 7
      %v4808 = vsub.s32 2, %v4807
      %v4809 = vrot.slane %v4769, %v4808
      %v4810 = vlaneseq
      %v4811 = vshrl.u32 %v4810, 7
      %v4812 = vsub.s32 2, %v4811
      %v4813 = vrot.slane %v4773, %v4812
      %v4814 = vlaneseq
      %v4815 = vshrl.u32 %v4814, 7
      %v4816 = vsub.s32 2, %v4815
      %v4817 = vrot.slane %v4777, %v4816
      %v4818 = vlaneseq
      %v4819 = vshrl.u32 %v4818, 7
      %v4820 = vsub.s32 2, %v4819
      %v4821 = vrot.slane %v4781, %v4820
      %v4822 = vlaneseq
      %v4823 = vshrl.u32 %v4822, 7
      %v4824 = vsub.s32 2, %v4823
      %v4825 = vrot.slane %v4785, %v4824
      %v4826 = vlaneseq
      %v4827 = vshrl.u32 %v4826, 7
      %v4828 = vsub.s32 2, %v4827
      %v4829 = vrot.slane %v4789, %v4828
      %v4830 = vmul.f32 %v4756, %v4801
      %v4831 = vmul.f32 %v4756, %v4805
      %v4832 = vmul.f32 %v4756, %v4809
      %v4833 = vmul.f32 %v4756, %v4813
      %v4834 = vmul.f32 %v4756, %v4817
      %v4835 = vmul.f32 %v4756, %v4821
      %v4836 = vmul.f32 %v4756, %v4825
      %v4837 = vmul.f32 %v4756, %v4829
      %v4838 = vadd.f32 %v4743, %v4830
      %v4839 = vadd.f32 %v4744, %v4831
      %v4840 = vadd.f32 %v4745, %v4832
      %v4841 = vadd.f32 %v4746, %v4833
      %v4842 = vadd.f32 %v4747, %v4834
      %v4843 = vadd.f32 %v4748, %v4835
      %v4844 = vadd.f32 %v4749, %v4836
      %v4845 = vadd.f32 %v4750, %v4837
      %s4846 = scalar_lea.vmem %s5, 12
      %v4847 = vld [vmem:[%s4846] sm:$0xf]
      %4849 = vset.pattern.permute.xlu0 0
      %4850 = vperm.xlu0 %4849, %v4847
      %v4851 = vpop.permute.xlu0 %4850
      %v4853 = vlaneseq
      %v4854 = vshrl.u32 %v4853, 7
      %v4855 = vsub.s32 3, %v4854
      %v4856 = vrot.slane %v4554, %v4855
      %v4857 = vlaneseq
      %v4858 = vshrl.u32 %v4857, 7
      %v4859 = vsub.s32 7, %v4858
      %v4860 = vrot.slane %v4554, %v4859
      %v4861 = vlaneseq
      %v4862 = vshrl.u32 %v4861, 7
      %v4863 = vsub.s32 3, %v4862
      %v4864 = vrot.slane %v4555, %v4863
      %v4865 = vlaneseq
      %v4866 = vshrl.u32 %v4865, 7
      %v4867 = vsub.s32 7, %v4866
      %v4868 = vrot.slane %v4555, %v4867
      %v4869 = vlaneseq
      %v4870 = vshrl.u32 %v4869, 7
      %v4871 = vsub.s32 3, %v4870
      %v4872 = vrot.slane %v4556, %v4871
      %v4873 = vlaneseq
      %v4874 = vshrl.u32 %v4873, 7
      %v4875 = vsub.s32 7, %v4874
      %v4876 = vrot.slane %v4556, %v4875
      %v4877 = vlaneseq
      %v4878 = vshrl.u32 %v4877, 7
      %v4879 = vsub.s32 3, %v4878
      %v4880 = vrot.slane %v4557, %v4879
      %v4881 = vlaneseq
      %v4882 = vshrl.u32 %v4881, 7
      %v4883 = vsub.s32 7, %v4882
      %v4884 = vrot.slane %v4557, %v4883
      %v4893 = vlaneseq
      %v4894 = vshrl.u32 %v4893, 7
      %v4895 = vsub.s32 3, %v4894
      %v4896 = vrot.slane %v4856, %v4895
      %v4897 = vlaneseq
      %v4898 = vshrl.u32 %v4897, 7
      %v4899 = vsub.s32 3, %v4898
      %v4900 = vrot.slane %v4860, %v4899
      %v4901 = vlaneseq
      %v4902 = vshrl.u32 %v4901, 7
      %v4903 = vsub.s32 3, %v4902
      %v4904 = vrot.slane %v4864, %v4903
      %v4905 = vlaneseq
      %v4906 = vshrl.u32 %v4905, 7
      %v4907 = vsub.s32 3, %v4906
      %v4908 = vrot.slane %v4868, %v4907
      %v4909 = vlaneseq
      %v4910 = vshrl.u32 %v4909, 7
      %v4911 = vsub.s32 3, %v4910
      %v4912 = vrot.slane %v4872, %v4911
      %v4913 = vlaneseq
      %v4914 = vshrl.u32 %v4913, 7
      %v4915 = vsub.s32 3, %v4914
      %v4916 = vrot.slane %v4876, %v4915
      %v4917 = vlaneseq
      %v4918 = vshrl.u32 %v4917, 7
      %v4919 = vsub.s32 3, %v4918
      %v4920 = vrot.slane %v4880, %v4919
      %v4921 = vlaneseq
      %v4922 = vshrl.u32 %v4921, 7
      %v4923 = vsub.s32 3, %v4922
      %v4924 = vrot.slane %v4884, %v4923
      %v4925 = vmul.f32 %v4851, %v4896
      %v4926 = vmul.f32 %v4851, %v4900
      %v4927 = vmul.f32 %v4851, %v4904
      %v4928 = vmul.f32 %v4851, %v4908
      %v4929 = vmul.f32 %v4851, %v4912
      %v4930 = vmul.f32 %v4851, %v4916
      %v4931 = vmul.f32 %v4851, %v4920
      %v4932 = vmul.f32 %v4851, %v4924
      %v4933 = vadd.f32 %v4838, %v4925
      %v4934 = vadd.f32 %v4839, %v4926
      %v4935 = vadd.f32 %v4840, %v4927
      %v4936 = vadd.f32 %v4841, %v4928
      %v4937 = vadd.f32 %v4842, %v4929
      %v4938 = vadd.f32 %v4843, %v4930
      %v4939 = vadd.f32 %v4844, %v4931
      %v4940 = vadd.f32 %v4845, %v4932
      %v4941 = vld [vmem:[%s7] sm:$0x3]
      %v4943 = vlaneseq
      %v4944 = vshrl.u32 %v4943, 7
      %v4945 = vsub.s32 0, %v4944
      %v4946 = vrot.slane %v4941, %v4945
      %v4947 = vlaneseq
      %v4948 = vshrl.u32 %v4947, 7
      %v4949 = vsub.s32 1, %v4948
      %v4950 = vrot.slane %v4941, %v4949
      %v4953 = vadd.f32 %v4933, %v4946
      %v4954 = vadd.f32 %v4934, %v4950
      %v4955 = vadd.f32 %v4935, %v4946
      %v4956 = vadd.f32 %v4936, %v4950
      %v4957 = vadd.f32 %v4937, %v4946
      %v4958 = vadd.f32 %v4938, %v4950
      %v4959 = vadd.f32 %v4939, %v4946
      %v4960 = vadd.f32 %v4940, %v4950
      %vm4961 = vcmask 1043456
      %v4962 = vsel %vm4961, %v4953, 0.0
      %v4963 = vsel %vm4961, %v4955, 0.0
      %v4964 = vadd.f32 %v4962, %v4963
      %v4965 = vsel %vm4961, %v4954, 0.0
      %v4966 = vsel %vm4961, %v4956, 0.0
      %v4967 = vadd.f32 %v4965, %v4966
      %v4968 = vsel %vm4961, %v4957, 0.0
      %v4969 = vsel %vm4961, %v4959, 0.0
      %v4970 = vadd.f32 %v4968, %v4969
      %v4971 = vsel %vm4961, %v4958, 0.0
      %v4972 = vsel %vm4961, %v4960, 0.0
      %v4973 = vadd.f32 %v4971, %v4972
      %v4974 = vrcp.pop 2.0
      %v4975 = vmul.f32 %v4964, %v4974
      %v4976 = vmul.f32 %v4967, %v4974
      %v4977 = vmul.f32 %v4970, %v4974
      %v4978 = vmul.f32 %v4973, %v4974
      %v4979 = vld [vmem:[%s12] sm:$0x3]
      %v4981 = vlaneseq
      %v4982 = vshrl.u32 %v4981, 7
      %v4983 = vsub.s32 0, %v4982
      %v4984 = vrot.slane %v4979, %v4983
      %v4985 = vlaneseq
      %v4986 = vshrl.u32 %v4985, 7
      %v4987 = vsub.s32 1, %v4986
      %v4988 = vrot.slane %v4979, %v4987
      %v4991 = vmul.f32 %v4975, %v4984
      %v4992 = vmul.f32 %v4976, %v4988
      %v4993 = vmul.f32 %v4977, %v4984
      %v4994 = vmul.f32 %v4978, %v4988
      %v4995 = vsub.f32 %v4953, %v4991
      %v4996 = vsub.f32 %v4954, %v4992
      %v4997 = vsub.f32 %v4955, %v4991
      %v4998 = vsub.f32 %v4956, %v4992
      %v4999 = vsub.f32 %v4957, %v4993
      %v5000 = vsub.f32 %v4958, %v4994
      %v5001 = vsub.f32 %v4959, %v4993
      %v5002 = vsub.f32 %v4960, %v4994
      %v5003 = vmul.f32 %v4995, %v4995
      %v5004 = vmul.f32 %v4996, %v4996
      %v5005 = vmul.f32 %v4997, %v4997
      %v5006 = vmul.f32 %v4998, %v4998
      %v5007 = vmul.f32 %v4999, %v4999
      %v5008 = vmul.f32 %v5000, %v5000
      %v5009 = vmul.f32 %v5001, %v5001
      %v5010 = vmul.f32 %v5002, %v5002
      %v5011 = vsel %vm4961, %v5003, 0.0
      %v5012 = vsel %vm4961, %v5005, 0.0
      %v5013 = vadd.f32 %v5011, %v5012
      %v5014 = vsel %vm4961, %v5004, 0.0
      %v5015 = vsel %vm4961, %v5006, 0.0
      %v5016 = vadd.f32 %v5014, %v5015
      %v5017 = vsel %vm4961, %v5007, 0.0
      %v5018 = vsel %vm4961, %v5009, 0.0
      %v5019 = vadd.f32 %v5017, %v5018
      %v5020 = vsel %vm4961, %v5008, 0.0
      %v5021 = vsel %vm4961, %v5010, 0.0
      %v5022 = vadd.f32 %v5020, %v5021
      %v5023 = vmul.f32 %v5013, %v4974
      %v5024 = vmul.f32 %v5016, %v4974
      %v5025 = vmul.f32 %v5019, %v4974
      %v5026 = vmul.f32 %v5022, %v4974
      %v5027 = vld [vmem:[%s10] sm:$0x3]
      %v5029 = vlaneseq
      %v5030 = vshrl.u32 %v5029, 7
      %v5031 = vsub.s32 0, %v5030
      %v5032 = vrot.slane %v5027, %v5031
      %v5033 = vlaneseq
      %v5034 = vshrl.u32 %v5033, 7
      %v5035 = vsub.s32 1, %v5034
      %v5036 = vrot.slane %v5027, %v5035
      %v5039 = vmul.f32 %v5032, %v4995
      %v5040 = vmul.f32 %v5036, %v4996
      %v5041 = vmul.f32 %v5032, %v4997
      %v5042 = vmul.f32 %v5036, %v4998
      %v5043 = vmul.f32 %v5032, %v4999
      %v5044 = vmul.f32 %v5036, %v5000
      %v5045 = vmul.f32 %v5032, %v5001
      %v5046 = vmul.f32 %v5036, %v5002
      %v5047 = vadd.f32 %v5023, 1e-05
      %v5048 = vadd.f32 %v5024, 1e-05
      %v5049 = vadd.f32 %v5025, 1e-05
      %v5050 = vadd.f32 %v5026, 1e-05
      %v5051 = vrsqrt.pop %v5047
      %v5052 = vrsqrt.pop %v5048
      %v5053 = vrsqrt.pop %v5049
      %v5054 = vrsqrt.pop %v5050
      %v5055 = vmul.f32 %v5039, %v5051
      %v5056 = vmul.f32 %v5040, %v5052
      %v5057 = vmul.f32 %v5041, %v5051
      %v5058 = vmul.f32 %v5042, %v5052
      %v5059 = vmul.f32 %v5043, %v5053
      %v5060 = vmul.f32 %v5044, %v5054
      %v5061 = vmul.f32 %v5045, %v5053
      %v5062 = vmul.f32 %v5046, %v5054
      %v5063 = vld [vmem:[%s11] sm:$0x3]
      %v5065 = vlaneseq
      %v5066 = vshrl.u32 %v5065, 7
      %v5067 = vsub.s32 0, %v5066
      %v5068 = vrot.slane %v5063, %v5067
      %v5069 = vlaneseq
      %v5070 = vshrl.u32 %v5069, 7
      %v5071 = vsub.s32 1, %v5070
      %v5072 = vrot.slane %v5063, %v5071
      %v5075 = vadd.f32 %v5055, %v5068
      %v5076 = vadd.f32 %v5056, %v5072
      %v5077 = vadd.f32 %v5057, %v5068
      %v5078 = vadd.f32 %v5058, %v5072
      %v5079 = vadd.f32 %v5059, %v5068
      %v5080 = vadd.f32 %v5060, %v5072
      %v5081 = vadd.f32 %v5061, %v5068
      %v5082 = vadd.f32 %v5062, %v5072
      %v5083 = vcombine.high %v4562, %v4562
      %v5084 = vcombine.high %v4563, %v4563
      %v5085 = vcombine.high %v4564, %v4564
      %v5086 = vcombine.high %v4565, %v4565
      %v5091 = vadd.f32 %v5075, %v4562
      %v5092 = vadd.f32 %v5076, %v5083
      %v5093 = vadd.f32 %v5077, %v4563
      %v5094 = vadd.f32 %v5078, %v5084
      %v5095 = vadd.f32 %v5079, %v4564
      %v5096 = vadd.f32 %v5080, %v5085
      %v5097 = vadd.f32 %v5081, %v4565
      %v5098 = vadd.f32 %v5082, %v5086
      %v5099 = vld [vmem:[%s9] sm:$0x3]
      %v5101 = vlaneseq
      %v5102 = vshrl.u32 %v5101, 7
      %v5103 = vsub.s32 0, %v5102
      %v5104 = vrot.slane %v5099, %v5103
      %v5105 = vlaneseq
      %v5106 = vshrl.u32 %v5105, 7
      %v5107 = vsub.s32 1, %v5106
      %v5108 = vrot.slane %v5099, %v5107
      %v5111 = vadd.f32 %v5091, %v5104
      %v5112 = vadd.f32 %v5092, %v5108
      %v5113 = vadd.f32 %v5093, %v5104
      %v5114 = vadd.f32 %v5094, %v5108
      %v5115 = vadd.f32 %v5095, %v5104
      %v5116 = vadd.f32 %v5096, %v5108
      %v5117 = vadd.f32 %v5097, %v5104
      %v5118 = vadd.f32 %v5098, %v5108
      %vm5119 = vcmp.gt.f32.partialorder %v5111, 0.0
      %vm5120 = vcmp.gt.f32.partialorder %v5112, 0.0
      %vm5121 = vcmp.gt.f32.partialorder %v5113, 0.0
      %vm5122 = vcmp.gt.f32.partialorder %v5114, 0.0
      %vm5123 = vcmp.gt.f32.partialorder %v5115, 0.0
      %vm5124 = vcmp.gt.f32.partialorder %v5116, 0.0
      %vm5125 = vcmp.gt.f32.partialorder %v5117, 0.0
      %vm5126 = vcmp.gt.f32.partialorder %v5118, 0.0
      %v5127 = vmin.f32 %v5111, 0.0
      %v5128 = vmin.f32 %v5112, 0.0
      %v5129 = vmin.f32 %v5113, 0.0
      %v5130 = vmin.f32 %v5114, 0.0
      %v5131 = vmin.f32 %v5115, 0.0
      %v5132 = vmin.f32 %v5116, 0.0
      %v5133 = vmin.f32 %v5117, 0.0
      %v5134 = vmin.f32 %v5118, 0.0
      %v5135 = vmul.f32 %v5127, 1.442695
      %v5136 = vpow.pop %v5135
      %v5137 = vmul.f32 %v5128, 1.442695
      %v5138 = vpow.pop %v5137
      %v5139 = vmul.f32 %v5129, 1.442695
      %v5140 = vpow.pop %v5139
      %v5141 = vmul.f32 %v5130, 1.442695
      %v5142 = vpow.pop %v5141
      %v5143 = vmul.f32 %v5131, 1.442695
      %v5144 = vpow.pop %v5143
      %v5145 = vmul.f32 %v5132, 1.442695
      %v5146 = vpow.pop %v5145
      %v5147 = vmul.f32 %v5133, 1.442695
      %v5148 = vpow.pop %v5147
      %v5149 = vmul.f32 %v5134, 1.442695
      %v5150 = vpow.pop %v5149
      %v5151 = vsub.f32 %v5136, 1.0
      %v5152 = vsub.f32 %v5138, 1.0
      %v5153 = vsub.f32 %v5140, 1.0
      %v5154 = vsub.f32 %v5142, 1.0
      %v5155 = vsub.f32 %v5144, 1.0
      %v5156 = vsub.f32 %v5146, 1.0
      %v5157 = vsub.f32 %v5148, 1.0
      %v5158 = vsub.f32 %v5150, 1.0
      %v5159 = vsel %vm5119, %v5111, %v5151
      %v5160 = vsel %vm5120, %v5112, %v5152
      %v5161 = vsel %vm5121, %v5113, %v5153
      %v5162 = vsel %vm5122, %v5114, %v5154
      %v5163 = vsel %vm5123, %v5115, %v5155
      %v5164 = vsel %vm5124, %v5116, %v5156
      %v5165 = vsel %vm5125, %v5117, %v5157
      %v5166 = vsel %vm5126, %v5118, %v5158
      %v5167 = vsel %vm4961, %v5159, 0.0
      %v5168 = vrot.slane %v5167, 4
      %v5169 = vadd.f32 %v5167, %v5168
      %v5170 = vrot.slane %v5169, 2
      %v5171 = vadd.f32 %v5169, %v5170
      %v5172 = vrot.slane %v5171, 1
      %v5173 = vadd.f32 %v5171, %v5172
      %v5174 = vsel %vm4961, %v5160, 0.0
      %v5175 = vrot.slane %v5174, 4
      %v5176 = vadd.f32 %v5174, %v5175
      %v5177 = vrot.slane %v5176, 2
      %v5178 = vadd.f32 %v5176, %v5177
      %v5179 = vrot.slane %v5178, 1
      %v5180 = vadd.f32 %v5178, %v5179
      %v5181 = vsel %vm4961, %v5161, 0.0
      %v5182 = vrot.slane %v5181, 4
      %v5183 = vadd.f32 %v5181, %v5182
      %v5184 = vrot.slane %v5183, 2
      %v5185 = vadd.f32 %v5183, %v5184
      %v5186 = vrot.slane %v5185, 1
      %v5187 = vadd.f32 %v5185, %v5186
      %v5188 = vsel %vm4961, %v5162, 0.0
      %v5189 = vrot.slane %v5188, 4
      %v5190 = vadd.f32 %v5188, %v5189
      %v5191 = vrot.slane %v5190, 2
      %v5192 = vadd.f32 %v5190, %v5191
      %v5193 = vrot.slane %v5192, 1
      %v5194 = vadd.f32 %v5192, %v5193
      %v5195 = vsel %vm4961, %v5163, 0.0
      %v5196 = vrot.slane %v5195, 4
      %v5197 = vadd.f32 %v5195, %v5196
      %v5198 = vrot.slane %v5197, 2
      %v5199 = vadd.f32 %v5197, %v5198
      %v5200 = vrot.slane %v5199, 1
      %v5201 = vadd.f32 %v5199, %v5200
      %v5202 = vsel %vm4961, %v5164, 0.0
      %v5203 = vrot.slane %v5202, 4
      %v5204 = vadd.f32 %v5202, %v5203
      %v5205 = vrot.slane %v5204, 2
      %v5206 = vadd.f32 %v5204, %v5205
      %v5207 = vrot.slane %v5206, 1
      %v5208 = vadd.f32 %v5206, %v5207
      %v5209 = vsel %vm4961, %v5165, 0.0
      %v5210 = vrot.slane %v5209, 4
      %v5211 = vadd.f32 %v5209, %v5210
      %v5212 = vrot.slane %v5211, 2
      %v5213 = vadd.f32 %v5211, %v5212
      %v5214 = vrot.slane %v5213, 1
      %v5215 = vadd.f32 %v5213, %v5214
      %v5216 = vsel %vm4961, %v5166, 0.0
      %v5217 = vrot.slane %v5216, 4
      %v5218 = vadd.f32 %v5216, %v5217
      %v5219 = vrot.slane %v5218, 2
      %v5220 = vadd.f32 %v5218, %v5219
      %v5221 = vrot.slane %v5220, 1
      %v5222 = vadd.f32 %v5220, %v5221
      %v5223 = vrcp.pop 4.0
      %v5224 = vmul.f32 %v5173, %v5223
      %v5225 = vmul.f32 %v5180, %v5223
      %v5226 = vmul.f32 %v5187, %v5223
      %v5227 = vmul.f32 %v5194, %v5223
      %v5228 = vmul.f32 %v5201, %v5223
      %v5229 = vmul.f32 %v5208, %v5223
      %v5230 = vmul.f32 %v5215, %v5223
      %v5231 = vmul.f32 %v5222, %v5223
      %v5240 = vcombine.low %v5224, %v5225
      %v5241 = vcombine.low %v5226, %v5227
      %v5242 = vcombine.low %v5228, %v5229
      %v5243 = vcombine.low %v5230, %v5231
      %v5244 = vrot.slane %v5241, 7
      %v5245 = vsel %vm3994, %v5244, %v5240
      %v5246 = vsel %vm4006, %v5244, %v5245
      %v5247 = vrot.slane %v5242, 6
      %v5248 = vsel %vm3997, %v5247, %v5246
      %v5249 = vsel %vm4009, %v5247, %v5248
      %v5250 = vrot.slane %v5243, 5
      %v5251 = vsel %vm4000, %v5250, %v5249
      %v5252 = vsel %vm4012, %v5250, %v5251
      %5254 = vst [vmem:[%s440] sm:$0xff] %v5252
      %p5255 = scmp.lt.s32.totalorder %s24, 1
      %s5256 = scalar_select %p5255, %s24, 1
      %s5257 = smul.addr %s5256, 2
      %s5258 = smul.addr %s5257, 4
      %s5259 = scalar_lea.vmem %s13, %s5258
      // Predicated region
      $region73: #{body_gnn_forward.1} parent=71 // pred_check
        %p5260 = pneg %p320
      $region74: #{body_gnn_forward.1} parent=71 // pred_check_branch
        %5262 = sbr.rel (%p5260) target = $region76
      $region75: #{body_gnn_forward.1} parent=71 // pred_region
        _
      $region76: #{body_gnn_forward.1} parent=71 // pred_fallthru
        _
    $region72: #{body_gnn_forward.1} parent=5 // pred_fallthru
      _
    %p5263 = scmp.le.s32.totalorder 2, %s19
    // Predicated region
    $region77: #{body_gnn_forward.1} parent=5 // pred_check
      %p5264 = pneg %p5263
    $region78: #{body_gnn_forward.1} parent=5 // pred_check_branch
      %5266 = sbr.rel (%p5264) target = $region80
    $region79: #{body_gnn_forward.1} parent=5 // pred_region
      %s5267 = ssub.s32 %s19, 2
      // Predicated region
      $region81: #{body_gnn_forward.1} parent=79 // pred_check
        %p5268 = pneg %p326
      $region82: #{body_gnn_forward.1} parent=79 // pred_check_branch
        %5270 = sbr.rel (%p5268) target = $region84
      $region83: #{body_gnn_forward.1} parent=79 // pred_region
        %p5271 = scmp.lt.s32.totalorder %s25, 1
        %s5272 = scalar_select %p5271, %s25, 1
        %s5273 = smul.addr %s5272, 2
        %s5274 = smul.addr %s5273, 4
        %s5275 = scalar_lea.vmem %s13, %s5274
      $region84: #{body_gnn_forward.1} parent=79 // pred_fallthru
        _
    $region80: #{body_gnn_forward.1} parent=5 // pred_fallthru
      _
  $region6: #{body_gnn_forward.1} parent=0 // loop_footer
    %s23 = sadd.s32 1, %s19
  $region7: #{body_gnn_forward.1} parent=0 // loop_footer_branch
    %18 = sbr.rel target = $region3
  $region8: #{body_gnn_forward.1} parent=0 // loop_exit
    _

</llo_original>
